<compile_context>
chip_gen: v7x
topology: tpu7x:2x2x1
jax: 0.10.0
libtpu: 0.0.40
codegen_flags: <defaults>
</compile_context>

<pallas_src>
import functools

import jax
import jax.numpy as jnp
from jax.experimental import pallas as pl
from jax.experimental.pallas import tpu as pltpu


def _round_up(x, m):
    return ((x + m - 1) // m) * m


def encoder_kernel(x_ref, w1_ref, b1_ref, w2_ref, b2_ref, gamma_ref, beta_ref,
                   o_ref, *, num_layers):
    """All `num_layers` EncoderLayers applied to one (tm, D) row-tile in VMEM."""
    x = x_ref[...].astype(jnp.float32)                          # (tm, D) f32

    # Static (unrolled) layer loop: activation never leaves VMEM between layers.
    for l in range(num_layers):
        w1 = w1_ref[l]                                          # (D, H) bf16
        w2 = w2_ref[l]                                          # (H, D) bf16
        b1 = b1_ref[l]                                          # (1, H) f32
        b2 = b2_ref[l]                                          # (1, D) f32
        gamma = gamma_ref[l]                                    # (1, D) f32
        beta = beta_ref[l]                                      # (1, D) f32

        # Position-wise FFN: bf16 MXU operands, f32 accumulation.
        h = jnp.dot(x.astype(jnp.bfloat16), w1,
                    preferred_element_type=jnp.float32)         # (tm, H)
        h = jnp.maximum(h + b1, 0.0)
        y = jnp.dot(h.astype(jnp.bfloat16), w2,
                    preferred_element_type=jnp.float32)         # (tm, D)
        y = y + b2

        # Residual + LayerNorm over the feature dim (f32 on the VPU; rsqrt on
        # the EUP, which has its own bundle slot -> hidden under MXU work).
        z = x + y
        mean = jnp.mean(z, axis=-1, keepdims=True)
        cen = z - mean
        var = jnp.mean(cen * cen, axis=-1, keepdims=True)
        x = cen * jax.lax.rsqrt(var + 1e-5) * gamma + beta

    o_ref[...] = x.astype(o_ref.dtype)


def encoder_forward(x, params, *, tm=512):
    """Encoder.forward: (B, T, N_nodes, D) -> (B, T, N_nodes, D)."""
    B, T, Nn, D = x.shape
    w1s, b1s, w2s, b2s, gammas, betas = params
    L, _, H = w1s.shape

    M = B * T * Nn
    x2d = x.reshape(M, D)

    # Effective row tile: multiple of 8, clamped to (padded) M.
    tm_eff = min(tm, _round_up(M, 8))
    Mp = _round_up(M, tm_eff)
    if Mp != M:
        x2d = jnp.pad(x2d, ((0, Mp - M), (0, 0)))

    grid_m = Mp // tm_eff

    # Advisory cost estimate (FFN matmuls dominate; rsqrt per row per layer).
    itemsize = jnp.dtype(x.dtype).itemsize
    weight_bytes = int(w1s.size + w2s.size) * 2 + int(
        b1s.size + b2s.size + gammas.size + betas.size) * 4
    cost = pl.CostEstimate(
        flops=4 * Mp * D * H * L,
        transcendentals=Mp * L,
        bytes_accessed=2 * Mp * D * itemsize + weight_bytes,
    )

    full3 = lambda i: (0, 0, 0)
    out2d = pl.pallas_call(
        functools.partial(encoder_kernel, num_layers=L),
        out_shape=jax.ShapeDtypeStruct((Mp, D), x.dtype),
        grid_spec=pl.GridSpec(
            grid=(grid_m,),
            in_specs=[
                pl.BlockSpec((tm_eff, D), lambda i: (i, 0)),    # activation tile
                pl.BlockSpec((L, D, H), full3),                 # W1 stack (bf16)
                pl.BlockSpec((L, 1, H), full3),                 # b1 stack
                pl.BlockSpec((L, H, D), full3),                 # W2 stack (bf16)
                pl.BlockSpec((L, 1, D), full3),                 # b2 stack
                pl.BlockSpec((L, 1, D), full3),                 # gamma stack
                pl.BlockSpec((L, 1, D), full3),                 # beta stack
            ],
            out_specs=pl.BlockSpec((tm_eff, D), lambda i: (i, 0)),
        ),
        compiler_params=pltpu.CompilerParams(
            dimension_semantics=("parallel",)),
        cost_estimate=cost,
    )(x2d, w1s, b1s, w2s, b2s, gammas, betas)

    if Mp != M:
        out2d = out2d[:M]
    return out2d.reshape(B, T, Nn, D)


def init_encoder_params(key, num_layers, d_model, d_hidden):
    """One EncoderLayer's params, stacked L times (mirrors clones() deep-copy).

    The kernel supports distinct per-layer params via the leading L axis
    (faithful to the trained case); at init all clones are identical.
    """
    k1, k2, k3, k4 = jax.random.split(key, 4)
    w1 = jax.random.normal(k1, (d_model, d_hidden)) / jnp.sqrt(d_model)
    w2 = jax.random.normal(k2, (d_hidden, d_model)) / jnp.sqrt(d_hidden)
    b1 = 0.01 * jax.random.normal(k3, (1, d_hidden))
    b2 = 0.01 * jax.random.normal(k4, (1, d_model))
    gamma = jnp.ones((1, d_model), jnp.float32)
    beta = jnp.zeros((1, d_model), jnp.float32)

    stack = lambda a: jnp.stack([a] * num_layers)
    return (stack(w1).astype(jnp.bfloat16),
            stack(b1).astype(jnp.float32),
            stack(w2).astype(jnp.bfloat16),
            stack(b2).astype(jnp.float32),
            stack(gamma),
            stack(beta))


def encoder_reference(x, params):
    """Pure-JAX reference mirroring the kernel's bf16 matmul operands."""
    w1s, b1s, w2s, b2s, gammas, betas = params
    B, T, Nn, D = x.shape
    z = x.reshape(-1, D).astype(jnp.float32)
    hi = jax.lax.Precision.HIGHEST
    for l in range(w1s.shape[0]):
        xb = z.astype(jnp.bfloat16).astype(jnp.float32)
        h = jnp.maximum(
            jnp.dot(xb, w1s[l].astype(jnp.float32), precision=hi) + b1s[l], 0.0)
        hb = h.astype(jnp.bfloat16).astype(jnp.float32)
        y = jnp.dot(hb, w2s[l].astype(jnp.float32), precision=hi) + b2s[l]
        r = z + y
        mean = r.mean(-1, keepdims=True)
        var = ((r - mean) ** 2).mean(-1, keepdims=True)
        z = (r - mean) * jax.lax.rsqrt(var + 1e-5) * gammas[l] + betas[l]
    return z.reshape(B, T, Nn, D).astype(x.dtype)


if __name__ == "__main__":
    # Small shapes consistent with the forward contract (B, T, N_nodes, D=256).
    B, T, Nn, D = 2, 8, 16, 256   # M = B*T*Nn = 256 rows, D on lanes
    H = 256                       # hidden width of the per-layer FFN
    NUM_LAYERS = 2                # Encoder(layer, N=2)

    key = jax.random.PRNGKey(0)
    kx, kp = jax.random.split(key)
    x = jax.random.normal(kx, (B, T, Nn, D), dtype=jnp.float32)
    params = init_encoder_params(kp, NUM_LAYERS, D, H)

    fwd = jax.jit(encoder_forward)
    out = fwd(x, params)
    jax.block_until_ready(out)

    assert out.shape == (B, T, Nn, D), out.shape
    assert out.dtype == x.dtype
    assert bool(jnp.isfinite(out).all())

    ref = encoder_reference(x, params)
    max_err = float(jnp.max(jnp.abs(out.astype(jnp.float32)
                                    - ref.astype(jnp.float32))))
    assert max_err < 5e-2, f"max abs error {max_err}"
    print("KERNEL_OK")
</pallas_src>

<mosaic_0001>
module attributes {stable_mosaic.version = 11 : i64} {
  func.func @encoder_kernel(%arg0: i32, %arg1: memref<256x256xf32, #tpu.memory_space<vmem>>, %arg2: memref<2x256x256xbf16, #tpu.memory_space<vmem>>, %arg3: memref<2x1x256xf32, #tpu.memory_space<vmem>>, %arg4: memref<2x256x256xbf16, #tpu.memory_space<vmem>>, %arg5: memref<2x1x256xf32, #tpu.memory_space<vmem>>, %arg6: memref<2x1x256xf32, #tpu.memory_space<vmem>>, %arg7: memref<2x1x256xf32, #tpu.memory_space<vmem>>, %arg8: memref<256x256xf32, #tpu.memory_space<vmem>>) attributes {dimension_semantics = [#tpu.dimension_semantics<parallel>], iteration_bounds = array<i64: 1>, scalar_prefetch = 0 : i64, scratch_operands = 0 : i64, tpu.core_type = #tpu.core_type<tc>, window_params = [{transform_indices = @transform_0, window_bounds = array<i64: 256, 256>}, {pipeline_mode = #tpu.pipeline_mode<synchronous>, transform_indices = @transform_1, window_bounds = array<i64: 2, 256, 256>}, {pipeline_mode = #tpu.pipeline_mode<synchronous>, transform_indices = @transform_2, window_bounds = array<i64: 2, 1, 256>}, {pipeline_mode = #tpu.pipeline_mode<synchronous>, transform_indices = @transform_3, window_bounds = array<i64: 2, 256, 256>}, {pipeline_mode = #tpu.pipeline_mode<synchronous>, transform_indices = @transform_4, window_bounds = array<i64: 2, 1, 256>}, {pipeline_mode = #tpu.pipeline_mode<synchronous>, transform_indices = @transform_5, window_bounds = array<i64: 2, 1, 256>}, {pipeline_mode = #tpu.pipeline_mode<synchronous>, transform_indices = @transform_6, window_bounds = array<i64: 2, 1, 256>}, {transform_indices = @transform_7, window_bounds = array<i64: 256, 256>}]} {
    %c0 = arith.constant 0 : index
    %c0_0 = arith.constant 0 : index
    %0 = vector.load %arg1[%c0, %c0_0] : memref<256x256xf32, #tpu.memory_space<vmem>>, vector<256x256xf32>
    %c0_1 = arith.constant 0 : index
    %c0_2 = arith.constant 0 : index
    %c0_3 = arith.constant 0 : index
    %1 = vector.load %arg2[%c0_1, %c0_2, %c0_3] : memref<2x256x256xbf16, #tpu.memory_space<vmem>>, vector<1x256x256xbf16>
    %2 = vector.shape_cast %1 : vector<1x256x256xbf16> to vector<256x256xbf16>
    %c0_4 = arith.constant 0 : index
    %c0_5 = arith.constant 0 : index
    %c0_6 = arith.constant 0 : index
    %3 = vector.load %arg4[%c0_4, %c0_5, %c0_6] : memref<2x256x256xbf16, #tpu.memory_space<vmem>>, vector<1x256x256xbf16>
    %4 = vector.shape_cast %3 : vector<1x256x256xbf16> to vector<256x256xbf16>
    %c0_7 = arith.constant 0 : index
    %c0_8 = arith.constant 0 : index
    %c0_9 = arith.constant 0 : index
    %5 = vector.load %arg3[%c0_7, %c0_8, %c0_9] : memref<2x1x256xf32, #tpu.memory_space<vmem>>, vector<1x1x256xf32>
    %6 = vector.shape_cast %5 : vector<1x1x256xf32> to vector<1x256xf32>
    %c0_10 = arith.constant 0 : index
    %c0_11 = arith.constant 0 : index
    %c0_12 = arith.constant 0 : index
    %7 = vector.load %arg5[%c0_10, %c0_11, %c0_12] : memref<2x1x256xf32, #tpu.memory_space<vmem>>, vector<1x1x256xf32>
    %8 = vector.shape_cast %7 : vector<1x1x256xf32> to vector<1x256xf32>
    %c0_13 = arith.constant 0 : index
    %c0_14 = arith.constant 0 : index
    %c0_15 = arith.constant 0 : index
    %9 = vector.load %arg6[%c0_13, %c0_14, %c0_15] : memref<2x1x256xf32, #tpu.memory_space<vmem>>, vector<1x1x256xf32>
    %10 = vector.shape_cast %9 : vector<1x1x256xf32> to vector<1x256xf32>
    %c0_16 = arith.constant 0 : index
    %c0_17 = arith.constant 0 : index
    %c0_18 = arith.constant 0 : index
    %11 = vector.load %arg7[%c0_16, %c0_17, %c0_18] : memref<2x1x256xf32, #tpu.memory_space<vmem>>, vector<1x1x256xf32>
    %12 = vector.shape_cast %11 : vector<1x1x256xf32> to vector<1x256xf32>
    %13 = arith.truncf %0 : vector<256x256xf32> to vector<256x256xbf16>
    %cst = arith.constant dense<0.000000e+00> : vector<256x256xf32>
    %14 = tpu.matmul %13, %2, %cst {dimension_numbers = #tpu.dot_dimension_numbers<[1], [0], [0], [1], [0, 0, 1, 1], [], []>} : vector<256x256xbf16>, vector<256x256xbf16>, vector<256x256xf32> -> vector<256x256xf32>
    %15 = vector.broadcast %6 : vector<1x256xf32> to vector<256x256xf32>
    %16 = arith.addf %14, %15 : vector<256x256xf32>
    %cst_19 = arith.constant 0.000000e+00 : f32
    %17 = vector.broadcast %cst_19 : f32 to vector<256x256xf32>
    %18 = arith.maximumf %16, %17 : vector<256x256xf32>
    %19 = arith.truncf %18 : vector<256x256xf32> to vector<256x256xbf16>
    %cst_20 = arith.constant dense<0.000000e+00> : vector<256x256xf32>
    %20 = tpu.matmul %19, %4, %cst_20 {dimension_numbers = #tpu.dot_dimension_numbers<[1], [0], [0], [1], [0, 0, 1, 1], [], []>} : vector<256x256xbf16>, vector<256x256xbf16>, vector<256x256xf32> -> vector<256x256xf32>
    %21 = vector.broadcast %8 : vector<1x256xf32> to vector<256x256xf32>
    %22 = arith.addf %20, %21 : vector<256x256xf32>
    %23 = arith.addf %0, %22 : vector<256x256xf32>
    %cst_21 = arith.constant dense<0.000000e+00> : vector<256xf32>
    %24 = vector.multi_reduction <add>, %23, %cst_21 [1] : vector<256x256xf32> to vector<256xf32>
    %25 = vector.shape_cast %24 : vector<256xf32> to vector<256x1xf32>
    %cst_22 = arith.constant 2.560000e+02 : f32
    %26 = vector.broadcast %cst_22 : f32 to vector<256x1xf32>
    %27 = arith.divf %25, %26 : vector<256x1xf32>
    %28 = vector.broadcast %27 : vector<256x1xf32> to vector<256x256xf32>
    %29 = arith.subf %23, %28 : vector<256x256xf32>
    %30 = arith.mulf %29, %29 : vector<256x256xf32>
    %cst_23 = arith.constant dense<0.000000e+00> : vector<256xf32>
    %31 = vector.multi_reduction <add>, %30, %cst_23 [1] : vector<256x256xf32> to vector<256xf32>
    %32 = vector.shape_cast %31 : vector<256xf32> to vector<256x1xf32>
    %cst_24 = arith.constant 2.560000e+02 : f32
    %33 = vector.broadcast %cst_24 : f32 to vector<256x1xf32>
    %34 = arith.divf %32, %33 : vector<256x1xf32>
    %cst_25 = arith.constant 9.99999974E-6 : f32
    %35 = vector.broadcast %cst_25 : f32 to vector<256x1xf32>
    %36 = arith.addf %34, %35 : vector<256x1xf32>
    %37 = math.rsqrt %36 : vector<256x1xf32>
    %38 = vector.broadcast %37 : vector<256x1xf32> to vector<256x256xf32>
    %39 = arith.mulf %29, %38 : vector<256x256xf32>
    %40 = vector.broadcast %10 : vector<1x256xf32> to vector<256x256xf32>
    %41 = arith.mulf %39, %40 : vector<256x256xf32>
    %42 = vector.broadcast %12 : vector<1x256xf32> to vector<256x256xf32>
    %43 = arith.addf %41, %42 : vector<256x256xf32>
    %c1 = arith.constant 1 : index
    %c0_26 = arith.constant 0 : index
    %c0_27 = arith.constant 0 : index
    %44 = vector.load %arg2[%c1, %c0_26, %c0_27] : memref<2x256x256xbf16, #tpu.memory_space<vmem>>, vector<1x256x256xbf16>
    %45 = vector.shape_cast %44 : vector<1x256x256xbf16> to vector<256x256xbf16>
    %c1_28 = arith.constant 1 : index
    %c0_29 = arith.constant 0 : index
    %c0_30 = arith.constant 0 : index
    %46 = vector.load %arg4[%c1_28, %c0_29, %c0_30] : memref<2x256x256xbf16, #tpu.memory_space<vmem>>, vector<1x256x256xbf16>
    %47 = vector.shape_cast %46 : vector<1x256x256xbf16> to vector<256x256xbf16>
    %c1_31 = arith.constant 1 : index
    %c0_32 = arith.constant 0 : index
    %c0_33 = arith.constant 0 : index
    %48 = vector.load %arg3[%c1_31, %c0_32, %c0_33] : memref<2x1x256xf32, #tpu.memory_space<vmem>>, vector<1x1x256xf32>
    %49 = vector.shape_cast %48 : vector<1x1x256xf32> to vector<1x256xf32>
    %c1_34 = arith.constant 1 : index
    %c0_35 = arith.constant 0 : index
    %c0_36 = arith.constant 0 : index
    %50 = vector.load %arg5[%c1_34, %c0_35, %c0_36] : memref<2x1x256xf32, #tpu.memory_space<vmem>>, vector<1x1x256xf32>
    %51 = vector.shape_cast %50 : vector<1x1x256xf32> to vector<1x256xf32>
    %c1_37 = arith.constant 1 : index
    %c0_38 = arith.constant 0 : index
    %c0_39 = arith.constant 0 : index
    %52 = vector.load %arg6[%c1_37, %c0_38, %c0_39] : memref<2x1x256xf32, #tpu.memory_space<vmem>>, vector<1x1x256xf32>
    %53 = vector.shape_cast %52 : vector<1x1x256xf32> to vector<1x256xf32>
    %c1_40 = arith.constant 1 : index
    %c0_41 = arith.constant 0 : index
    %c0_42 = arith.constant 0 : index
    %54 = vector.load %arg7[%c1_40, %c0_41, %c0_42] : memref<2x1x256xf32, #tpu.memory_space<vmem>>, vector<1x1x256xf32>
    %55 = vector.shape_cast %54 : vector<1x1x256xf32> to vector<1x256xf32>
    %56 = arith.truncf %43 : vector<256x256xf32> to vector<256x256xbf16>
    %cst_43 = arith.constant dense<0.000000e+00> : vector<256x256xf32>
    %57 = tpu.matmul %56, %45, %cst_43 {dimension_numbers = #tpu.dot_dimension_numbers<[1], [0], [0], [1], [0, 0, 1, 1], [], []>} : vector<256x256xbf16>, vector<256x256xbf16>, vector<256x256xf32> -> vector<256x256xf32>
    %58 = vector.broadcast %49 : vector<1x256xf32> to vector<256x256xf32>
    %59 = arith.addf %57, %58 : vector<256x256xf32>
    %cst_44 = arith.constant 0.000000e+00 : f32
    %60 = vector.broadcast %cst_44 : f32 to vector<256x256xf32>
    %61 = arith.maximumf %59, %60 : vector<256x256xf32>
    %62 = arith.truncf %61 : vector<256x256xf32> to vector<256x256xbf16>
    %cst_45 = arith.constant dense<0.000000e+00> : vector<256x256xf32>
    %63 = tpu.matmul %62, %47, %cst_45 {dimension_numbers = #tpu.dot_dimension_numbers<[1], [0], [0], [1], [0, 0, 1, 1], [], []>} : vector<256x256xbf16>, vector<256x256xbf16>, vector<256x256xf32> -> vector<256x256xf32>
    %64 = vector.broadcast %51 : vector<1x256xf32> to vector<256x256xf32>
    %65 = arith.addf %63, %64 : vector<256x256xf32>
    %66 = arith.addf %43, %65 : vector<256x256xf32>
    %cst_46 = arith.constant dense<0.000000e+00> : vector<256xf32>
    %67 = vector.multi_reduction <add>, %66, %cst_46 [1] : vector<256x256xf32> to vector<256xf32>
    %68 = vector.shape_cast %67 : vector<256xf32> to vector<256x1xf32>
    %cst_47 = arith.constant 2.560000e+02 : f32
    %69 = vector.broadcast %cst_47 : f32 to vector<256x1xf32>
    %70 = arith.divf %68, %69 : vector<256x1xf32>
    %71 = vector.broadcast %70 : vector<256x1xf32> to vector<256x256xf32>
    %72 = arith.subf %66, %71 : vector<256x256xf32>
    %73 = arith.mulf %72, %72 : vector<256x256xf32>
    %cst_48 = arith.constant dense<0.000000e+00> : vector<256xf32>
    %74 = vector.multi_reduction <add>, %73, %cst_48 [1] : vector<256x256xf32> to vector<256xf32>
    %75 = vector.shape_cast %74 : vector<256xf32> to vector<256x1xf32>
    %cst_49 = arith.constant 2.560000e+02 : f32
    %76 = vector.broadcast %cst_49 : f32 to vector<256x1xf32>
    %77 = arith.divf %75, %76 : vector<256x1xf32>
    %cst_50 = arith.constant 9.99999974E-6 : f32
    %78 = vector.broadcast %cst_50 : f32 to vector<256x1xf32>
    %79 = arith.addf %77, %78 : vector<256x1xf32>
    %80 = math.rsqrt %79 : vector<256x1xf32>
    %81 = vector.broadcast %80 : vector<256x1xf32> to vector<256x256xf32>
    %82 = arith.mulf %72, %81 : vector<256x256xf32>
    %83 = vector.broadcast %53 : vector<1x256xf32> to vector<256x256xf32>
    %84 = arith.mulf %82, %83 : vector<256x256xf32>
    %85 = vector.broadcast %55 : vector<1x256xf32> to vector<256x256xf32>
    %86 = arith.addf %84, %85 : vector<256x256xf32>
    %c0_51 = arith.constant 0 : index
    %c0_52 = arith.constant 0 : index
    %87 = vector.load %arg8[%c0_51, %c0_52] : memref<256x256xf32, #tpu.memory_space<vmem>>, vector<256x256xf32>
    tpu.vector_store %arg8[%c0_51, %c0_52], %86 {strides = array<i32>} : memref<256x256xf32, #tpu.memory_space<vmem>>, vector<256x256xf32>,
    return
  }
  func.func @transform_0(%arg0: i32) -> (i32, i32) {
    %c0_i32 = arith.constant 0 : i32
    %c0_i32_0 = arith.constant 0 : i32
    return %arg0, %c0_i32 : i32, i32
  }
  func.func @transform_1(%arg0: i32) -> (i32, i32, i32) {
    %c0_i32 = arith.constant 0 : i32
    %c0_i32_0 = arith.constant 0 : i32
    %c0_i32_1 = arith.constant 0 : i32
    %c0_i32_2 = arith.constant 0 : i32
    return %c0_i32, %c0_i32_0, %c0_i32_1 : i32, i32, i32
  }
  func.func @transform_2(%arg0: i32) -> (i32, i32, i32) {
    %c0_i32 = arith.constant 0 : i32
    %c0_i32_0 = arith.constant 0 : i32
    %c0_i32_1 = arith.constant 0 : i32
    %c0_i32_2 = arith.constant 0 : i32
    return %c0_i32, %c0_i32_0, %c0_i32_1 : i32, i32, i32
  }
  func.func @transform_3(%arg0: i32) -> (i32, i32, i32) {
    %c0_i32 = arith.constant 0 : i32
    %c0_i32_0 = arith.constant 0 : i32
    %c0_i32_1 = arith.constant 0 : i32
    %c0_i32_2 = arith.constant 0 : i32
    return %c0_i32, %c0_i32_0, %c0_i32_1 : i32, i32, i32
  }
  func.func @transform_4(%arg0: i32) -> (i32, i32, i32) {
    %c0_i32 = arith.constant 0 : i32
    %c0_i32_0 = arith.constant 0 : i32
    %c0_i32_1 = arith.constant 0 : i32
    %c0_i32_2 = arith.constant 0 : i32
    return %c0_i32, %c0_i32_0, %c0_i32_1 : i32, i32, i32
  }
  func.func @transform_5(%arg0: i32) -> (i32, i32, i32) {
    %c0_i32 = arith.constant 0 : i32
    %c0_i32_0 = arith.constant 0 : i32
    %c0_i32_1 = arith.constant 0 : i32
    %c0_i32_2 = arith.constant 0 : i32
    return %c0_i32, %c0_i32_0, %c0_i32_1 : i32, i32, i32
  }
  func.func @transform_6(%arg0: i32) -> (i32, i32, i32) {
    %c0_i32 = arith.constant 0 : i32
    %c0_i32_0 = arith.constant 0 : i32
    %c0_i32_1 = arith.constant 0 : i32
    %c0_i32_2 = arith.constant 0 : i32
    return %c0_i32, %c0_i32_0, %c0_i32_1 : i32, i32, i32
  }
  func.func @transform_7(%arg0: i32) -> (i32, i32) {
    %c0_i32 = arith.constant 0 : i32
    %c0_i32_0 = arith.constant 0 : i32
    return %arg0, %c0_i32 : i32, i32
  }
}

</mosaic_0001>

<llo_original>
// kernel: encoder_forward.1
$region0: #{encoder_forward.1}
  #allocation0 [shape = 'u32[]', space=smem, size = 0x4, offset = 0x4, fixed_abs, tag = 'smem constant byte address 0x4 - core index']
  #allocation1 [shape = 'u32[144,128]{1,0:T(1,128)}', space=vmem, size = 0x12000, scoped, tag = 'internal scratch']
  %s0 = inlined_call_operand.hbm [shape: f32[256,256], index: 0, kind: input, shape index: {}]
  %s1 = inlined_call_operand.hbm [shape: bf16[2,256,256], index: 1, kind: input, shape index: {}]
  %s2 = inlined_call_operand.vmem [shape: f32[2,1,256], index: 2, kind: input, shape index: {}]
  %s3 = inlined_call_operand.hbm [shape: bf16[2,256,256], index: 3, kind: input, shape index: {}]
  %s4 = inlined_call_operand.vmem [shape: f32[2,1,256], index: 4, kind: input, shape index: {}]
  %s5 = inlined_call_operand.vmem [shape: f32[2,1,256], index: 5, kind: input, shape index: {}]
  %s6 = inlined_call_operand.vmem [shape: f32[2,1,256], index: 6, kind: input, shape index: {}]
  %s7 = inlined_call_operand.hbm [shape: f32[256,256], index: 7, kind: output, shape index: {}]
  %s8 = sld [smem:[#allocation0]]
  $region50: #{encoder_forward.1} parent=0
    _
  %s10 = ssub.s32 1, %s8
  %s11 = scalar_select 0, %s10, %s8
  $region1: #{encoder_forward.1} parent=0
    #allocation2 [shape = 'u8[262144]{0}', space=vmem, size = 0x40000, scoped, tag = 'input window, operand 0, single buffered']
    #allocation3 [shape = 's32[1]{0}', space=sflag, size = 0x4, scoped, tag = 'scoped memory for encoder_forward.1']
    #allocation4 [shape = 's32[1]{0}', space=sflag, size = 0x4, scoped, tag = 'scoped memory for encoder_forward.1']
    #allocation5 [shape = 'u8[262144]{0}', space=vmem, size = 0x40000, scoped, tag = 'input window, operand 1, single buffered']
    #allocation6 [shape = 's32[1]{0}', space=sflag, size = 0x4, scoped, tag = 'scoped memory for encoder_forward.1']
    #allocation7 [shape = 'u8[262144]{0}', space=vmem, size = 0x40000, scoped, tag = 'input window, operand 3, single buffered']
    #allocation8 [shape = 'u8[262144]{0}', space=vmem, size = 0x40000, scoped, tag = 'output window, operand 0, single buffered']
    %12 = vsyncpa [#allocation3], 0
    %13 = vsyncpa [#allocation6], 0
    %14 = vsyncpa [#allocation4], 0
    // Predicated region
    $region2: #{encoder_forward.1} parent=1 // pred_check
      _
    $region3: #{encoder_forward.1} parent=1 // pred_check_branch
      %16 = sbr.rel (0) target = $region5
    $region4: #{encoder_forward.1} parent=1 // pred_region
      %s18 = ssub.s32 8192, 8192
      %19 = vsyncadd [#allocation3], %s18
      %s20 = sshll.u32 [#allocation2], 4
      %s21 = int_to_ptr.vmem [resolvable:$true] %s20
      %26 = dma.hbm_to_vmem [thread:$0]  %s0, 8192, %s21, [#allocation3], 256, 256, 16
    $region5: #{encoder_forward.1} parent=1 // pred_fallthru
      _
    // Predicated region
    $region6: #{encoder_forward.1} parent=1 // pred_check
      _
    $region7: #{encoder_forward.1} parent=1 // pred_check_branch
      %28 = sbr.rel (0) target = $region9
    $region8: #{encoder_forward.1} parent=1 // pred_region
      %s30 = ssub.s32 8192, 8192
      %31 = vsyncadd [#allocation6], %s30
      %s32 = sshll.u32 [#allocation5], 4
      %s33 = int_to_ptr.vmem [resolvable:$true] %s32
      %38 = dma.hbm_to_vmem [thread:$0]  %s1, 8192, %s33, [#allocation6], 128, 128, 8
    $region9: #{encoder_forward.1} parent=1 // pred_fallthru
      _
    // Predicated region
    $region10: #{encoder_forward.1} parent=1 // pred_check
      _
    $region11: #{encoder_forward.1} parent=1 // pred_check_branch
      %40 = sbr.rel (0) target = $region13
    $region12: #{encoder_forward.1} parent=1 // pred_region
      _
    $region13: #{encoder_forward.1} parent=1 // pred_fallthru
      _
    // Predicated region
    $region14: #{encoder_forward.1} parent=1 // pred_check
      _
    $region15: #{encoder_forward.1} parent=1 // pred_check_branch
      %42 = sbr.rel (0) target = $region17
    $region16: #{encoder_forward.1} parent=1 // pred_region
      %s44 = ssub.s32 8192, 8192
      %45 = vsyncadd [#allocation6], %s44
      %s46 = sshll.u32 [#allocation7], 4
      %s47 = int_to_ptr.vmem [resolvable:$true] %s46
      %52 = dma.hbm_to_vmem [thread:$0]  %s3, 8192, %s47, [#allocation6], 128, 128, 8
    $region17: #{encoder_forward.1} parent=1 // pred_fallthru
      _
    // Predicated region
    $region18: #{encoder_forward.1} parent=1 // pred_check
      _
    $region19: #{encoder_forward.1} parent=1 // pred_check_branch
      %54 = sbr.rel (0) target = $region21
    $region20: #{encoder_forward.1} parent=1 // pred_region
      _
    $region21: #{encoder_forward.1} parent=1 // pred_fallthru
      _
    // Predicated region
    $region22: #{encoder_forward.1} parent=1 // pred_check
      _
    $region23: #{encoder_forward.1} parent=1 // pred_check_branch
      %56 = sbr.rel (0) target = $region25
    $region24: #{encoder_forward.1} parent=1 // pred_region
      _
    $region25: #{encoder_forward.1} parent=1 // pred_fallthru
      _
    // Predicated region
    $region26: #{encoder_forward.1} parent=1 // pred_check
      _
    $region27: #{encoder_forward.1} parent=1 // pred_check_branch
      %58 = sbr.rel (0) target = $region29
    $region28: #{encoder_forward.1} parent=1 // pred_region
      _
    $region29: #{encoder_forward.1} parent=1 // pred_fallthru
      _
    // Predicated region
    $region30: #{encoder_forward.1} parent=1 // pred_check
      _
    $region31: #{encoder_forward.1} parent=1 // pred_check_branch
      %60 = sbr.rel (0) target = $region33
    $region32: #{encoder_forward.1} parent=1 // pred_region
      %61 = dma.done [#allocation3], 8192
    $region33: #{encoder_forward.1} parent=1 // pred_fallthru
      _
    // Predicated region
    $region34: #{encoder_forward.1} parent=1 // pred_check
      _
    $region35: #{encoder_forward.1} parent=1 // pred_check_branch
      %63 = sbr.rel (0) target = $region37
    $region36: #{encoder_forward.1} parent=1 // pred_region
      %64 = dma.done [#allocation6], 8192
    $region37: #{encoder_forward.1} parent=1 // pred_fallthru
      _
    // Predicated region
    $region38: #{encoder_forward.1} parent=1 // pred_check
      _
    $region39: #{encoder_forward.1} parent=1 // pred_check_branch
      %66 = sbr.rel (0) target = $region41
    $region40: #{encoder_forward.1} parent=1 // pred_region
      %67 = dma.done [#allocation6], 8192
    $region41: #{encoder_forward.1} parent=1 // pred_fallthru
      _
    %v68 = vld [vmem:[#allocation2] sm:$0xff]
    %v69 = vld [vmem:[#allocation2 + $0x8] sm:$0xff]
    %v70 = vld [vmem:[#allocation2 + $0x10] sm:$0xff]
    %v71 = vld [vmem:[#allocation2 + $0x18] sm:$0xff]
    %v72 = vld [vmem:[#allocation2 + $0x20] sm:$0xff]
    %v73 = vld [vmem:[#allocation2 + $0x28] sm:$0xff]
    %v74 = vld [vmem:[#allocation2 + $0x30] sm:$0xff]
    %v75 = vld [vmem:[#allocation2 + $0x38] sm:$0xff]
    %v76 = vld [vmem:[#allocation2 + $0x40] sm:$0xff]
    %v77 = vld [vmem:[#allocation2 + $0x48] sm:$0xff]
    %v78 = vld [vmem:[#allocation2 + $0x50] sm:$0xff]
    %v79 = vld [vmem:[#allocation2 + $0x58] sm:$0xff]
    %v80 = vld [vmem:[#allocation2 + $0x60] sm:$0xff]
    %v81 = vld [vmem:[#allocation2 + $0x68] sm:$0xff]
    %v82 = vld [vmem:[#allocation2 + $0x70] sm:$0xff]
    %v83 = vld [vmem:[#allocation2 + $0x78] sm:$0xff]
    %v84 = vld [vmem:[#allocation2 + $0x80] sm:$0xff]
    %v85 = vld [vmem:[#allocation2 + $0x88] sm:$0xff]
    %v86 = vld [vmem:[#allocation2 + $0x90] sm:$0xff]
    %v87 = vld [vmem:[#allocation2 + $0x98] sm:$0xff]
    %v88 = vld [vmem:[#allocation2 + $0xa0] sm:$0xff]
    %v89 = vld [vmem:[#allocation2 + $0xa8] sm:$0xff]
    %v90 = vld [vmem:[#allocation2 + $0xb0] sm:$0xff]
    %v91 = vld [vmem:[#allocation2 + $0xb8] sm:$0xff]
    %v92 = vld [vmem:[#allocation2 + $0xc0] sm:$0xff]
    %v93 = vld [vmem:[#allocation2 + $0xc8] sm:$0xff]
    %v94 = vld [vmem:[#allocation2 + $0xd0] sm:$0xff]
    %v95 = vld [vmem:[#allocation2 + $0xd8] sm:$0xff]
    %v96 = vld [vmem:[#allocation2 + $0xe0] sm:$0xff]
    %v97 = vld [vmem:[#allocation2 + $0xe8] sm:$0xff]
    %v98 = vld [vmem:[#allocation2 + $0xf0] sm:$0xff]
    %v99 = vld [vmem:[#allocation2 + $0xf8] sm:$0xff]
    %v100 = vld [vmem:[#allocation2 + $0x100] sm:$0xff]
    %v101 = vld [vmem:[#allocation2 + $0x108] sm:$0xff]
    %v102 = vld [vmem:[#allocation2 + $0x110] sm:$0xff]
    %v103 = vld [vmem:[#allocation2 + $0x118] sm:$0xff]
    %v104 = vld [vmem:[#allocation2 + $0x120] sm:$0xff]
    %v105 = vld [vmem:[#allocation2 + $0x128] sm:$0xff]
    %v106 = vld [vmem:[#allocation2 + $0x130] sm:$0xff]
    %v107 = vld [vmem:[#allocation2 + $0x138] sm:$0xff]
    %v108 = vld [vmem:[#allocation2 + $0x140] sm:$0xff]
    %v109 = vld [vmem:[#allocation2 + $0x148] sm:$0xff]
    %v110 = vld [vmem:[#allocation2 + $0x150] sm:$0xff]
    %v111 = vld [vmem:[#allocation2 + $0x158] sm:$0xff]
    %v112 = vld [vmem:[#allocation2 + $0x160] sm:$0xff]
    %v113 = vld [vmem:[#allocation2 + $0x168] sm:$0xff]
    %v114 = vld [vmem:[#allocation2 + $0x170] sm:$0xff]
    %v115 = vld [vmem:[#allocation2 + $0x178] sm:$0xff]
    %v116 = vld [vmem:[#allocation2 + $0x180] sm:$0xff]
    %v117 = vld [vmem:[#allocation2 + $0x188] sm:$0xff]
    %v118 = vld [vmem:[#allocation2 + $0x190] sm:$0xff]
    %v119 = vld [vmem:[#allocation2 + $0x198] sm:$0xff]
    %v120 = vld [vmem:[#allocation2 + $0x1a0] sm:$0xff]
    %v121 = vld [vmem:[#allocation2 + $0x1a8] sm:$0xff]
    %v122 = vld [vmem:[#allocation2 + $0x1b0] sm:$0xff]
    %v123 = vld [vmem:[#allocation2 + $0x1b8] sm:$0xff]
    %v124 = vld [vmem:[#allocation2 + $0x1c0] sm:$0xff]
    %v125 = vld [vmem:[#allocation2 + $0x1c8] sm:$0xff]
    %v126 = vld [vmem:[#allocation2 + $0x1d0] sm:$0xff]
    %v127 = vld [vmem:[#allocation2 + $0x1d8] sm:$0xff]
    %v128 = vld [vmem:[#allocation2 + $0x1e0] sm:$0xff]
    %v129 = vld [vmem:[#allocation2 + $0x1e8] sm:$0xff]
    %v130 = vld [vmem:[#allocation2 + $0x1f0] sm:$0xff]
    %v131 = vld [vmem:[#allocation2 + $0x1f8] sm:$0xff]
    %v132 = vld [vmem:[#allocation5] sm:$0xff]
    %v133 = vld [vmem:[#allocation5 + $0x8] sm:$0xff]
    %v134 = vld [vmem:[#allocation5 + $0x10] sm:$0xff]
    %v135 = vld [vmem:[#allocation5 + $0x18] sm:$0xff]
    %v136 = vld [vmem:[#allocation5 + $0x20] sm:$0xff]
    %v137 = vld [vmem:[#allocation5 + $0x28] sm:$0xff]
    %v138 = vld [vmem:[#allocation5 + $0x30] sm:$0xff]
    %v139 = vld [vmem:[#allocation5 + $0x38] sm:$0xff]
    %v140 = vld [vmem:[#allocation5 + $0x40] sm:$0xff]
    %v141 = vld [vmem:[#allocation5 + $0x48] sm:$0xff]
    %v142 = vld [vmem:[#allocation5 + $0x50] sm:$0xff]
    %v143 = vld [vmem:[#allocation5 + $0x58] sm:$0xff]
    %v144 = vld [vmem:[#allocation5 + $0x60] sm:$0xff]
    %v145 = vld [vmem:[#allocation5 + $0x68] sm:$0xff]
    %v146 = vld [vmem:[#allocation5 + $0x70] sm:$0xff]
    %v147 = vld [vmem:[#allocation5 + $0x78] sm:$0xff]
    %v148 = vld [vmem:[#allocation5 + $0x80] sm:$0xff]
    %v149 = vld [vmem:[#allocation5 + $0x88] sm:$0xff]
    %v150 = vld [vmem:[#allocation5 + $0x90] sm:$0xff]
    %v151 = vld [vmem:[#allocation5 + $0x98] sm:$0xff]
    %v152 = vld [vmem:[#allocation5 + $0xa0] sm:$0xff]
    %v153 = vld [vmem:[#allocation5 + $0xa8] sm:$0xff]
    %v154 = vld [vmem:[#allocation5 + $0xb0] sm:$0xff]
    %v155 = vld [vmem:[#allocation5 + $0xb8] sm:$0xff]
    %v156 = vld [vmem:[#allocation5 + $0xc0] sm:$0xff]
    %v157 = vld [vmem:[#allocation5 + $0xc8] sm:$0xff]
    %v158 = vld [vmem:[#allocation5 + $0xd0] sm:$0xff]
    %v159 = vld [vmem:[#allocation5 + $0xd8] sm:$0xff]
    %v160 = vld [vmem:[#allocation5 + $0xe0] sm:$0xff]
    %v161 = vld [vmem:[#allocation5 + $0xe8] sm:$0xff]
    %v162 = vld [vmem:[#allocation5 + $0xf0] sm:$0xff]
    %v163 = vld [vmem:[#allocation5 + $0xf8] sm:$0xff]
    %v164 = vld [vmem:[#allocation7] sm:$0xff]
    %v165 = vld [vmem:[#allocation7 + $0x8] sm:$0xff]
    %v166 = vld [vmem:[#allocation7 + $0x10] sm:$0xff]
    %v167 = vld [vmem:[#allocation7 + $0x18] sm:$0xff]
    %v168 = vld [vmem:[#allocation7 + $0x20] sm:$0xff]
    %v169 = vld [vmem:[#allocation7 + $0x28] sm:$0xff]
    %v170 = vld [vmem:[#allocation7 + $0x30] sm:$0xff]
    %v171 = vld [vmem:[#allocation7 + $0x38] sm:$0xff]
    %v172 = vld [vmem:[#allocation7 + $0x40] sm:$0xff]
    %v173 = vld [vmem:[#allocation7 + $0x48] sm:$0xff]
    %v174 = vld [vmem:[#allocation7 + $0x50] sm:$0xff]
    %v175 = vld [vmem:[#allocation7 + $0x58] sm:$0xff]
    %v176 = vld [vmem:[#allocation7 + $0x60] sm:$0xff]
    %v177 = vld [vmem:[#allocation7 + $0x68] sm:$0xff]
    %v178 = vld [vmem:[#allocation7 + $0x70] sm:$0xff]
    %v179 = vld [vmem:[#allocation7 + $0x78] sm:$0xff]
    %v180 = vld [vmem:[#allocation7 + $0x80] sm:$0xff]
    %v181 = vld [vmem:[#allocation7 + $0x88] sm:$0xff]
    %v182 = vld [vmem:[#allocation7 + $0x90] sm:$0xff]
    %v183 = vld [vmem:[#allocation7 + $0x98] sm:$0xff]
    %v184 = vld [vmem:[#allocation7 + $0xa0] sm:$0xff]
    %v185 = vld [vmem:[#allocation7 + $0xa8] sm:$0xff]
    %v186 = vld [vmem:[#allocation7 + $0xb0] sm:$0xff]
    %v187 = vld [vmem:[#allocation7 + $0xb8] sm:$0xff]
    %v188 = vld [vmem:[#allocation7 + $0xc0] sm:$0xff]
    %v189 = vld [vmem:[#allocation7 + $0xc8] sm:$0xff]
    %v190 = vld [vmem:[#allocation7 + $0xd0] sm:$0xff]
    %v191 = vld [vmem:[#allocation7 + $0xd8] sm:$0xff]
    %v192 = vld [vmem:[#allocation7 + $0xe0] sm:$0xff]
    %v193 = vld [vmem:[#allocation7 + $0xe8] sm:$0xff]
    %v194 = vld [vmem:[#allocation7 + $0xf0] sm:$0xff]
    %v195 = vld [vmem:[#allocation7 + $0xf8] sm:$0xff]
    %v196 = vld [vmem:[%s2] sm:$0x3]
    %v197 = vld [vmem:[%s4] sm:$0x3]
    %v198 = vld [vmem:[%s5] sm:$0x3]
    %v199 = vld [vmem:[%s6] sm:$0x3]
    %v200 = vpack.c.bf16 %v70, %v68
    %v201 = vpack.c.bf16 %v71, %v69
    %v202 = vpack.c.bf16 %v74, %v72
    %v203 = vpack.c.bf16 %v75, %v73
    %v204 = vpack.c.bf16 %v78, %v76
    %v205 = vpack.c.bf16 %v79, %v77
    %v206 = vpack.c.bf16 %v82, %v80
    %v207 = vpack.c.bf16 %v83, %v81
    %v208 = vpack.c.bf16 %v86, %v84
    %v209 = vpack.c.bf16 %v87, %v85
    %v210 = vpack.c.bf16 %v90, %v88
    %v211 = vpack.c.bf16 %v91, %v89
    %v212 = vpack.c.bf16 %v94, %v92
    %v213 = vpack.c.bf16 %v95, %v93
    %v214 = vpack.c.bf16 %v98, %v96
    %v215 = vpack.c.bf16 %v99, %v97
    %v216 = vpack.c.bf16 %v102, %v100
    %v217 = vpack.c.bf16 %v103, %v101
    %v218 = vpack.c.bf16 %v106, %v104
    %v219 = vpack.c.bf16 %v107, %v105
    %v220 = vpack.c.bf16 %v110, %v108
    %v221 = vpack.c.bf16 %v111, %v109
    %v222 = vpack.c.bf16 %v114, %v112
    %v223 = vpack.c.bf16 %v115, %v113
    %v224 = vpack.c.bf16 %v118, %v116
    %v225 = vpack.c.bf16 %v119, %v117
    %v226 = vpack.c.bf16 %v122, %v120
    %v227 = vpack.c.bf16 %v123, %v121
    %v228 = vpack.c.bf16 %v126, %v124
    %v229 = vpack.c.bf16 %v127, %v125
    %v230 = vpack.c.bf16 %v130, %v128
    %v231 = vpack.c.bf16 %v131, %v129
    %v233 = vlaneseq
    %v234 = vshrl.u32 %v233, 7
    %v235 = vsub.s32 0, %v234
    %v236 = vrot.slane %v196, %v235
    %v237 = vlaneseq
    %v238 = vshrl.u32 %v237, 7
    %v239 = vsub.s32 1, %v238
    %v240 = vrot.slane %v196, %v239
    %v275 = vunpack.c.l.b16 %v132
    %v276 = vunpack.c.h.b16 %v132
    %v277 = vunpack.c.l.b16 %v133
    %v278 = vunpack.c.h.b16 %v133
    %v279 = vunpack.c.l.b16 %v134
    %v280 = vunpack.c.h.b16 %v134
    %v281 = vunpack.c.l.b16 %v135
    %v282 = vunpack.c.h.b16 %v135
    %v283 = vunpack.c.l.b16 %v136
    %v284 = vunpack.c.h.b16 %v136
    %v285 = vunpack.c.l.b16 %v137
    %v286 = vunpack.c.h.b16 %v137
    %v287 = vunpack.c.l.b16 %v138
    %v288 = vunpack.c.h.b16 %v138
    %v289 = vunpack.c.l.b16 %v139
    %v290 = vunpack.c.h.b16 %v139
    %v291 = vunpack.c.l.b16 %v140
    %v292 = vunpack.c.h.b16 %v140
    %v293 = vunpack.c.l.b16 %v141
    %v294 = vunpack.c.h.b16 %v141
    %v295 = vunpack.c.l.b16 %v142
    %v296 = vunpack.c.h.b16 %v142
    %v297 = vunpack.c.l.b16 %v143
    %v298 = vunpack.c.h.b16 %v143
    %v299 = vunpack.c.l.b16 %v144
    %v300 = vunpack.c.h.b16 %v144
    %v301 = vunpack.c.l.b16 %v145
    %v302 = vunpack.c.h.b16 %v145
    %v303 = vunpack.c.l.b16 %v146
    %v304 = vunpack.c.h.b16 %v146
    %v305 = vunpack.c.l.b16 %v147
    %v306 = vunpack.c.h.b16 %v147
    %v307 = vunpack.c.l.b16 %v148
    %v308 = vunpack.c.h.b16 %v148
    %v309 = vunpack.c.l.b16 %v149
    %v310 = vunpack.c.h.b16 %v149
    %v311 = vunpack.c.l.b16 %v150
    %v312 = vunpack.c.h.b16 %v150
    %v313 = vunpack.c.l.b16 %v151
    %v314 = vunpack.c.h.b16 %v151
    %v315 = vunpack.c.l.b16 %v152
    %v316 = vunpack.c.h.b16 %v152
    %v317 = vunpack.c.l.b16 %v153
    %v318 = vunpack.c.h.b16 %v153
    %v319 = vunpack.c.l.b16 %v154
    %v320 = vunpack.c.h.b16 %v154
    %v321 = vunpack.c.l.b16 %v155
    %v322 = vunpack.c.h.b16 %v155
    %v323 = vunpack.c.l.b16 %v156
    %v324 = vunpack.c.h.b16 %v156
    %v325 = vunpack.c.l.b16 %v157
    %v326 = vunpack.c.h.b16 %v157
    %v327 = vunpack.c.l.b16 %v158
    %v328 = vunpack.c.h.b16 %v158
    %v329 = vunpack.c.l.b16 %v159
    %v330 = vunpack.c.h.b16 %v159
    %v331 = vunpack.c.l.b16 %v160
    %v332 = vunpack.c.h.b16 %v160
    %v333 = vunpack.c.l.b16 %v161
    %v334 = vunpack.c.h.b16 %v161
    %v335 = vunpack.c.l.b16 %v162
    %v336 = vunpack.c.h.b16 %v162
    %v337 = vunpack.c.l.b16 %v163
    %v338 = vunpack.c.h.b16 %v163
    %v339 = vpack.c.b16 %v277, %v275
    %v340 = vpack.c.b16 %v278, %v276
    %v341 = vpack.c.b16 %v281, %v279
    %v342 = vpack.c.b16 %v282, %v280
    %v343 = vpack.c.b16 %v285, %v283
    %v344 = vpack.c.b16 %v286, %v284
    %v345 = vpack.c.b16 %v289, %v287
    %v346 = vpack.c.b16 %v290, %v288
    %v347 = vpack.c.b16 %v293, %v291
    %v348 = vpack.c.b16 %v294, %v292
    %v349 = vpack.c.b16 %v297, %v295
    %v350 = vpack.c.b16 %v298, %v296
    %v351 = vpack.c.b16 %v301, %v299
    %v352 = vpack.c.b16 %v302, %v300
    %v353 = vpack.c.b16 %v305, %v303
    %v354 = vpack.c.b16 %v306, %v304
    %v355 = vpack.c.b16 %v309, %v307
    %v356 = vpack.c.b16 %v310, %v308
    %v357 = vpack.c.b16 %v313, %v311
    %v358 = vpack.c.b16 %v314, %v312
    %v359 = vpack.c.b16 %v317, %v315
    %v360 = vpack.c.b16 %v318, %v316
    %v361 = vpack.c.b16 %v321, %v319
    %v362 = vpack.c.b16 %v322, %v320
    %v363 = vpack.c.b16 %v325, %v323
    %v364 = vpack.c.b16 %v326, %v324
    %v365 = vpack.c.b16 %v329, %v327
    %v366 = vpack.c.b16 %v330, %v328
    %v367 = vpack.c.b16 %v333, %v331
    %v368 = vpack.c.b16 %v334, %v332
    %v369 = vpack.c.b16 %v337, %v335
    %v370 = vpack.c.b16 %v338, %v336
    %403 = vmatprep.subr.bf16.mxu0 %v340
    %404 = vmatpush1.bf16.msra.mxu0 %v339
    %405 = vmatprep.subr.bf16.mxu0 %v342
    %406 = vmatpush1.bf16.msra.mxu0 %v341
    %407 = vmatprep.subr.bf16.mxu0 %v344
    %408 = vmatpush1.bf16.msra.mxu0 %v343
    %409 = vmatprep.subr.bf16.mxu0 %v346
    %410 = vmatpush1.bf16.msra.mxu0 %v345
    %411 = vmatprep.subr.bf16.mxu0 %v348
    %412 = vmatpush1.bf16.msra.mxu0 %v347
    %413 = vmatprep.subr.bf16.mxu0 %v350
    %414 = vmatpush1.bf16.msra.mxu0 %v349
    %415 = vmatprep.subr.bf16.mxu0 %v352
    %416 = vmatpush1.bf16.msra.mxu0 %v351
    %417 = vmatprep.subr.bf16.mxu0 %v354
    %418 = vmatpush1.bf16.msra.mxu0 %v353
    %419 = vmatprep.subr.bf16.mxu0 %v356
    %420 = vmatpush1.bf16.msra.mxu0 %v355
    %421 = vmatprep.subr.bf16.mxu0 %v358
    %422 = vmatpush1.bf16.msra.mxu0 %v357
    %423 = vmatprep.subr.bf16.mxu0 %v360
    %424 = vmatpush1.bf16.msra.mxu0 %v359
    %425 = vmatprep.subr.bf16.mxu0 %v362
    %426 = vmatpush1.bf16.msra.mxu0 %v361
    %427 = vmatprep.subr.bf16.mxu0 %v364
    %428 = vmatpush1.bf16.msra.mxu0 %v363
    %429 = vmatprep.subr.bf16.mxu0 %v366
    %430 = vmatpush1.bf16.msra.mxu0 %v365
    %431 = vmatprep.subr.bf16.mxu0 %v368
    %432 = vmatpush1.bf16.msra.mxu0 %v367
    %433 = vmatprep.subr.bf16.mxu0 %v370
    %434 = vmatpush1.bf16.msra.mxu0 %v369
    %435 = vmatprep.mubr.bf16.mxu0 %v201
    %436 = vmatmul.mubr.bf16.gmra.mrb[0].mxu0 %v200
    %v437 = vpop.f32.mrb[0].mxu0
    %v438 = vadd.f32 %v236, %v437
    %v439 = vpop.f32.mrb[0].mxu0
    %v440 = vadd.f32 %v240, %v439
    %v441 = vpop.f32.mrb[0].mxu0
    %v442 = vadd.f32 %v236, %v441
    %v443 = vpop.f32.mrb[0].mxu0
    %v444 = vadd.f32 %v240, %v443
    %445 = vmatprep.mubr.bf16.mxu0 %v203
    %446 = vmatmul.mubr.bf16.gmra.mrb[0].mxu0 %v202
    %v447 = vpop.f32.mrb[0].mxu0
    %v448 = vadd.f32 %v236, %v447
    %v449 = vpop.f32.mrb[0].mxu0
    %v450 = vadd.f32 %v240, %v449
    %v451 = vpop.f32.mrb[0].mxu0
    %v452 = vadd.f32 %v236, %v451
    %v453 = vpop.f32.mrb[0].mxu0
    %v454 = vadd.f32 %v240, %v453
    %455 = vmatprep.mubr.bf16.mxu0 %v205
    %456 = vmatmul.mubr.bf16.gmra.mrb[0].mxu0 %v204
    %v457 = vpop.f32.mrb[0].mxu0
    %v458 = vadd.f32 %v236, %v457
    %v459 = vpop.f32.mrb[0].mxu0
    %v460 = vadd.f32 %v240, %v459
    %v461 = vpop.f32.mrb[0].mxu0
    %v462 = vadd.f32 %v236, %v461
    %v463 = vpop.f32.mrb[0].mxu0
    %v464 = vadd.f32 %v240, %v463
    %465 = vmatprep.mubr.bf16.mxu0 %v207
    %466 = vmatmul.mubr.bf16.gmra.mrb[0].mxu0 %v206
    %v467 = vpop.f32.mrb[0].mxu0
    %v468 = vadd.f32 %v236, %v467
    %v469 = vpop.f32.mrb[0].mxu0
    %v470 = vadd.f32 %v240, %v469
    %v471 = vpop.f32.mrb[0].mxu0
    %v472 = vadd.f32 %v236, %v471
    %v473 = vpop.f32.mrb[0].mxu0
    %v474 = vadd.f32 %v240, %v473
    %475 = vmatprep.mubr.bf16.mxu0 %v209
    %476 = vmatmul.mubr.bf16.gmra.mrb[0].mxu0 %v208
    %v477 = vpop.f32.mrb[0].mxu0
    %v478 = vadd.f32 %v236, %v477
    %v479 = vpop.f32.mrb[0].mxu0
    %v480 = vadd.f32 %v240, %v479
    %v481 = vpop.f32.mrb[0].mxu0
    %v482 = vadd.f32 %v236, %v481
    %v483 = vpop.f32.mrb[0].mxu0
    %v484 = vadd.f32 %v240, %v483
    %485 = vmatprep.mubr.bf16.mxu0 %v211
    %486 = vmatmul.mubr.bf16.gmra.mrb[0].mxu0 %v210
    %v487 = vpop.f32.mrb[0].mxu0
    %v488 = vadd.f32 %v236, %v487
    %v489 = vpop.f32.mrb[0].mxu0
    %v490 = vadd.f32 %v240, %v489
    %v491 = vpop.f32.mrb[0].mxu0
    %v492 = vadd.f32 %v236, %v491
    %v493 = vpop.f32.mrb[0].mxu0
    %v494 = vadd.f32 %v240, %v493
    %495 = vmatprep.mubr.bf16.mxu0 %v213
    %496 = vmatmul.mubr.bf16.gmra.mrb[0].mxu0 %v212
    %v497 = vpop.f32.mrb[0].mxu0
    %v498 = vadd.f32 %v236, %v497
    %v499 = vpop.f32.mrb[0].mxu0
    %v500 = vadd.f32 %v240, %v499
    %v501 = vpop.f32.mrb[0].mxu0
    %v502 = vadd.f32 %v236, %v501
    %v503 = vpop.f32.mrb[0].mxu0
    %v504 = vadd.f32 %v240, %v503
    %505 = vmatprep.mubr.bf16.mxu0 %v215
    %506 = vmatmul.mubr.bf16.gmra.mrb[0].mxu0 %v214
    %v507 = vpop.f32.mrb[0].mxu0
    %v508 = vadd.f32 %v236, %v507
    %v509 = vpop.f32.mrb[0].mxu0
    %v510 = vadd.f32 %v240, %v509
    %v511 = vpop.f32.mrb[0].mxu0
    %v512 = vadd.f32 %v236, %v511
    %v513 = vpop.f32.mrb[0].mxu0
    %v514 = vadd.f32 %v240, %v513
    %515 = vmatprep.mubr.bf16.mxu0 %v217
    %516 = vmatmul.mubr.bf16.gmra.mrb[0].mxu0 %v216
    %v517 = vpop.f32.mrb[0].mxu0
    %v518 = vadd.f32 %v236, %v517
    %v519 = vpop.f32.mrb[0].mxu0
    %v520 = vadd.f32 %v240, %v519
    %v521 = vpop.f32.mrb[0].mxu0
    %v522 = vadd.f32 %v236, %v521
    %v523 = vpop.f32.mrb[0].mxu0
    %v524 = vadd.f32 %v240, %v523
    %525 = vmatprep.mubr.bf16.mxu0 %v219
    %526 = vmatmul.mubr.bf16.gmra.mrb[0].mxu0 %v218
    %v527 = vpop.f32.mrb[0].mxu0
    %v528 = vadd.f32 %v236, %v527
    %v529 = vpop.f32.mrb[0].mxu0
    %v530 = vadd.f32 %v240, %v529
    %v531 = vpop.f32.mrb[0].mxu0
    %v532 = vadd.f32 %v236, %v531
    %v533 = vpop.f32.mrb[0].mxu0
    %v534 = vadd.f32 %v240, %v533
    %535 = vmatprep.mubr.bf16.mxu0 %v221
    %536 = vmatmul.mubr.bf16.gmra.mrb[0].mxu0 %v220
    %v537 = vpop.f32.mrb[0].mxu0
    %v538 = vadd.f32 %v236, %v537
    %v539 = vpop.f32.mrb[0].mxu0
    %v540 = vadd.f32 %v240, %v539
    %v541 = vpop.f32.mrb[0].mxu0
    %v542 = vadd.f32 %v236, %v541
    %v543 = vpop.f32.mrb[0].mxu0
    %v544 = vadd.f32 %v240, %v543
    %545 = vmatprep.mubr.bf16.mxu0 %v223
    %546 = vmatmul.mubr.bf16.gmra.mrb[0].mxu0 %v222
    %v547 = vpop.f32.mrb[0].mxu0
    %v548 = vadd.f32 %v236, %v547
    %v549 = vpop.f32.mrb[0].mxu0
    %v550 = vadd.f32 %v240, %v549
    %v551 = vpop.f32.mrb[0].mxu0
    %v552 = vadd.f32 %v236, %v551
    %v553 = vpop.f32.mrb[0].mxu0
    %v554 = vadd.f32 %v240, %v553
    %555 = vmatprep.mubr.bf16.mxu0 %v225
    %556 = vmatmul.mubr.bf16.gmra.mrb[0].mxu0 %v224
    %v557 = vpop.f32.mrb[0].mxu0
    %v558 = vadd.f32 %v236, %v557
    %v559 = vpop.f32.mrb[0].mxu0
    %v560 = vadd.f32 %v240, %v559
    %v561 = vpop.f32.mrb[0].mxu0
    %v562 = vadd.f32 %v236, %v561
    %v563 = vpop.f32.mrb[0].mxu0
    %v564 = vadd.f32 %v240, %v563
    %565 = vmatprep.mubr.bf16.mxu0 %v227
    %566 = vmatmul.mubr.bf16.gmra.mrb[0].mxu0 %v226
    %v567 = vpop.f32.mrb[0].mxu0
    %v568 = vadd.f32 %v236, %v567
    %v569 = vpop.f32.mrb[0].mxu0
    %v570 = vadd.f32 %v240, %v569
    %v571 = vpop.f32.mrb[0].mxu0
    %v572 = vadd.f32 %v236, %v571
    %v573 = vpop.f32.mrb[0].mxu0
    %v574 = vadd.f32 %v240, %v573
    %575 = vmatprep.mubr.bf16.mxu0 %v229
    %576 = vmatmul.mubr.bf16.gmra.mrb[0].mxu0 %v228
    %v577 = vpop.f32.mrb[0].mxu0
    %v578 = vadd.f32 %v236, %v577
    %v579 = vpop.f32.mrb[0].mxu0
    %v580 = vadd.f32 %v240, %v579
    %v581 = vpop.f32.mrb[0].mxu0
    %v582 = vadd.f32 %v236, %v581
    %v583 = vpop.f32.mrb[0].mxu0
    %v584 = vadd.f32 %v240, %v583
    %585 = vmatprep.mubr.bf16.mxu0 %v231
    %586 = vmatmul.mubr.bf16.gmra.mrb[0].mxu0 %v230
    %v587 = vpop.f32.mrb[0].mxu0
    %v588 = vadd.f32 %v236, %v587
    %v589 = vpop.f32.mrb[0].mxu0
    %v590 = vadd.f32 %v240, %v589
    %v591 = vpop.f32.mrb[0].mxu0
    %v592 = vadd.f32 %v236, %v591
    %v593 = vpop.f32.mrb[0].mxu0
    %v594 = vadd.f32 %v240, %v593
    %595 = vdwg.mxu0
    %v596 = vmax.f32 %v438, 0.0
    %v597 = vmax.f32 %v440, 0.0
    %v598 = vmax.f32 %v442, 0.0
    %v599 = vmax.f32 %v444, 0.0
    %v600 = vmax.f32 %v448, 0.0
    %v601 = vmax.f32 %v450, 0.0
    %v602 = vmax.f32 %v452, 0.0
    %v603 = vmax.f32 %v454, 0.0
    %v604 = vmax.f32 %v458, 0.0
    %v605 = vmax.f32 %v460, 0.0
    %v606 = vmax.f32 %v462, 0.0
    %v607 = vmax.f32 %v464, 0.0
    %v608 = vmax.f32 %v468, 0.0
    %v609 = vmax.f32 %v470, 0.0
    %v610 = vmax.f32 %v472, 0.0
    %v611 = vmax.f32 %v474, 0.0
    %v612 = vmax.f32 %v478, 0.0
    %v613 = vmax.f32 %v480, 0.0
    %v614 = vmax.f32 %v482, 0.0
    %v615 = vmax.f32 %v484, 0.0
    %v616 = vmax.f32 %v488, 0.0
    %v617 = vmax.f32 %v490, 0.0
    %v618 = vmax.f32 %v492, 0.0
    %v619 = vmax.f32 %v494, 0.0
    %v620 = vmax.f32 %v498, 0.0
    %v621 = vmax.f32 %v500, 0.0
    %v622 = vmax.f32 %v502, 0.0
    %v623 = vmax.f32 %v504, 0.0
    %v624 = vmax.f32 %v508, 0.0
    %v625 = vmax.f32 %v510, 0.0
    %v626 = vmax.f32 %v512, 0.0
    %v627 = vmax.f32 %v514, 0.0
    %v628 = vmax.f32 %v518, 0.0
    %v629 = vmax.f32 %v520, 0.0
    %v630 = vmax.f32 %v522, 0.0
    %v631 = vmax.f32 %v524, 0.0
    %v632 = vmax.f32 %v528, 0.0
    %v633 = vmax.f32 %v530, 0.0
    %v634 = vmax.f32 %v532, 0.0
    %v635 = vmax.f32 %v534, 0.0
    %v636 = vmax.f32 %v538, 0.0
    %v637 = vmax.f32 %v540, 0.0
    %v638 = vmax.f32 %v542, 0.0
    %v639 = vmax.f32 %v544, 0.0
    %v640 = vmax.f32 %v548, 0.0
    %v641 = vmax.f32 %v550, 0.0
    %v642 = vmax.f32 %v552, 0.0
    %v643 = vmax.f32 %v554, 0.0
    %v644 = vmax.f32 %v558, 0.0
    %v645 = vmax.f32 %v560, 0.0
    %v646 = vmax.f32 %v562, 0.0
    %v647 = vmax.f32 %v564, 0.0
    %v648 = vmax.f32 %v568, 0.0
    %v649 = vmax.f32 %v570, 0.0
    %v650 = vmax.f32 %v572, 0.0
    %v651 = vmax.f32 %v574, 0.0
    %v652 = vmax.f32 %v578, 0.0
    %v653 = vmax.f32 %v580, 0.0
    %v654 = vmax.f32 %v582, 0.0
    %v655 = vmax.f32 %v584, 0.0
    %v656 = vmax.f32 %v588, 0.0
    %v657 = vmax.f32 %v590, 0.0
    %v658 = vmax.f32 %v592, 0.0
    %v659 = vmax.f32 %v594, 0.0
    %v660 = vpack.c.bf16 %v598, %v596
    %v661 = vpack.c.bf16 %v599, %v597
    %v662 = vpack.c.bf16 %v602, %v600
    %v663 = vpack.c.bf16 %v603, %v601
    %v664 = vpack.c.bf16 %v606, %v604
    %v665 = vpack.c.bf16 %v607, %v605
    %v666 = vpack.c.bf16 %v610, %v608
    %v667 = vpack.c.bf16 %v611, %v609
    %v668 = vpack.c.bf16 %v614, %v612
    %v669 = vpack.c.bf16 %v615, %v613
    %v670 = vpack.c.bf16 %v618, %v616
    %v671 = vpack.c.bf16 %v619, %v617
    %v672 = vpack.c.bf16 %v622, %v620
    %v673 = vpack.c.bf16 %v623, %v621
    %v674 = vpack.c.bf16 %v626, %v624
    %v675 = vpack.c.bf16 %v627, %v625
    %v676 = vpack.c.bf16 %v630, %v628
    %v677 = vpack.c.bf16 %v631, %v629
    %v678 = vpack.c.bf16 %v634, %v632
    %v679 = vpack.c.bf16 %v635, %v633
    %v680 = vpack.c.bf16 %v638, %v636
    %v681 = vpack.c.bf16 %v639, %v637
    %v682 = vpack.c.bf16 %v642, %v640
    %v683 = vpack.c.bf16 %v643, %v641
    %v684 = vpack.c.bf16 %v646, %v644
    %v685 = vpack.c.bf16 %v647, %v645
    %v686 = vpack.c.bf16 %v650, %v648
    %v687 = vpack.c.bf16 %v651, %v649
    %v688 = vpack.c.bf16 %v654, %v652
    %v689 = vpack.c.bf16 %v655, %v653
    %v690 = vpack.c.bf16 %v658, %v656
    %v691 = vpack.c.bf16 %v659, %v657
    %v693 = vlaneseq
    %v694 = vshrl.u32 %v693, 7
    %v695 = vsub.s32 0, %v694
    %v696 = vrot.slane %v197, %v695
    %v697 = vlaneseq
    %v698 = vshrl.u32 %v697, 7
    %v699 = vsub.s32 1, %v698
    %v700 = vrot.slane %v197, %v699
    %v735 = vunpack.c.l.b16 %v164
    %v736 = vunpack.c.h.b16 %v164
    %v737 = vunpack.c.l.b16 %v165
    %v738 = vunpack.c.h.b16 %v165
    %v739 = vunpack.c.l.b16 %v166
    %v740 = vunpack.c.h.b16 %v166
    %v741 = vunpack.c.l.b16 %v167
    %v742 = vunpack.c.h.b16 %v167
    %v743 = vunpack.c.l.b16 %v168
    %v744 = vunpack.c.h.b16 %v168
    %v745 = vunpack.c.l.b16 %v169
    %v746 = vunpack.c.h.b16 %v169
    %v747 = vunpack.c.l.b16 %v170
    %v748 = vunpack.c.h.b16 %v170
    %v749 = vunpack.c.l.b16 %v171
    %v750 = vunpack.c.h.b16 %v171
    %v751 = vunpack.c.l.b16 %v172
    %v752 = vunpack.c.h.b16 %v172
    %v753 = vunpack.c.l.b16 %v173
    %v754 = vunpack.c.h.b16 %v173
    %v755 = vunpack.c.l.b16 %v174
    %v756 = vunpack.c.h.b16 %v174
    %v757 = vunpack.c.l.b16 %v175
    %v758 = vunpack.c.h.b16 %v175
    %v759 = vunpack.c.l.b16 %v176
    %v760 = vunpack.c.h.b16 %v176
    %v761 = vunpack.c.l.b16 %v177
    %v762 = vunpack.c.h.b16 %v177
    %v763 = vunpack.c.l.b16 %v178
    %v764 = vunpack.c.h.b16 %v178
    %v765 = vunpack.c.l.b16 %v179
    %v766 = vunpack.c.h.b16 %v179
    %v767 = vunpack.c.l.b16 %v180
    %v768 = vunpack.c.h.b16 %v180
    %v769 = vunpack.c.l.b16 %v181
    %v770 = vunpack.c.h.b16 %v181
    %v771 = vunpack.c.l.b16 %v182
    %v772 = vunpack.c.h.b16 %v182
    %v773 = vunpack.c.l.b16 %v183
    %v774 = vunpack.c.h.b16 %v183
    %v775 = vunpack.c.l.b16 %v184
    %v776 = vunpack.c.h.b16 %v184
    %v777 = vunpack.c.l.b16 %v185
    %v778 = vunpack.c.h.b16 %v185
    %v779 = vunpack.c.l.b16 %v186
    %v780 = vunpack.c.h.b16 %v186
    %v781 = vunpack.c.l.b16 %v187
    %v782 = vunpack.c.h.b16 %v187
    %v783 = vunpack.c.l.b16 %v188
    %v784 = vunpack.c.h.b16 %v188
    %v785 = vunpack.c.l.b16 %v189
    %v786 = vunpack.c.h.b16 %v189
    %v787 = vunpack.c.l.b16 %v190
    %v788 = vunpack.c.h.b16 %v190
    %v789 = vunpack.c.l.b16 %v191
    %v790 = vunpack.c.h.b16 %v191
    %v791 = vunpack.c.l.b16 %v192
    %v792 = vunpack.c.h.b16 %v192
    %v793 = vunpack.c.l.b16 %v193
    %v794 = vunpack.c.h.b16 %v193
    %v795 = vunpack.c.l.b16 %v194
    %v796 = vunpack.c.h.b16 %v194
    %v797 = vunpack.c.l.b16 %v195
    %v798 = vunpack.c.h.b16 %v195
    %v799 = vpack.c.b16 %v737, %v735
    %v800 = vpack.c.b16 %v738, %v736
    %v801 = vpack.c.b16 %v741, %v739
    %v802 = vpack.c.b16 %v742, %v740
    %v803 = vpack.c.b16 %v745, %v743
    %v804 = vpack.c.b16 %v746, %v744
    %v805 = vpack.c.b16 %v749, %v747
    %v806 = vpack.c.b16 %v750, %v748
    %v807 = vpack.c.b16 %v753, %v751
    %v808 = vpack.c.b16 %v754, %v752
    %v809 = vpack.c.b16 %v757, %v755
    %v810 = vpack.c.b16 %v758, %v756
    %v811 = vpack.c.b16 %v761, %v759
    %v812 = vpack.c.b16 %v762, %v760
    %v813 = vpack.c.b16 %v765, %v763
    %v814 = vpack.c.b16 %v766, %v764
    %v815 = vpack.c.b16 %v769, %v767
    %v816 = vpack.c.b16 %v770, %v768
    %v817 = vpack.c.b16 %v773, %v771
    %v818 = vpack.c.b16 %v774, %v772
    %v819 = vpack.c.b16 %v777, %v775
    %v820 = vpack.c.b16 %v778, %v776
    %v821 = vpack.c.b16 %v781, %v779
    %v822 = vpack.c.b16 %v782, %v780
    %v823 = vpack.c.b16 %v785, %v783
    %v824 = vpack.c.b16 %v786, %v784
    %v825 = vpack.c.b16 %v789, %v787
    %v826 = vpack.c.b16 %v790, %v788
    %v827 = vpack.c.b16 %v793, %v791
    %v828 = vpack.c.b16 %v794, %v792
    %v829 = vpack.c.b16 %v797, %v795
    %v830 = vpack.c.b16 %v798, %v796
    %863 = vmatprep.subr.bf16.mxu0 %v800
    %864 = vmatpush1.bf16.msra.mxu0 %v799
    %865 = vmatprep.subr.bf16.mxu0 %v802
    %866 = vmatpush1.bf16.msra.mxu0 %v801
    %867 = vmatprep.subr.bf16.mxu0 %v804
    %868 = vmatpush1.bf16.msra.mxu0 %v803
    %869 = vmatprep.subr.bf16.mxu0 %v806
    %870 = vmatpush1.bf16.msra.mxu0 %v805
    %871 = vmatprep.subr.bf16.mxu0 %v808
    %872 = vmatpush1.bf16.msra.mxu0 %v807
    %873 = vmatprep.subr.bf16.mxu0 %v810
    %874 = vmatpush1.bf16.msra.mxu0 %v809
    %875 = vmatprep.subr.bf16.mxu0 %v812
    %876 = vmatpush1.bf16.msra.mxu0 %v811
    %877 = vmatprep.subr.bf16.mxu0 %v814
    %878 = vmatpush1.bf16.msra.mxu0 %v813
    %879 = vmatprep.subr.bf16.mxu0 %v816
    %880 = vmatpush1.bf16.msra.mxu0 %v815
    %881 = vmatprep.subr.bf16.mxu0 %v818
    %882 = vmatpush1.bf16.msra.mxu0 %v817
    %883 = vmatprep.subr.bf16.mxu0 %v820
    %884 = vmatpush1.bf16.msra.mxu0 %v819
    %885 = vmatprep.subr.bf16.mxu0 %v822
    %886 = vmatpush1.bf16.msra.mxu0 %v821
    %887 = vmatprep.subr.bf16.mxu0 %v824
    %888 = vmatpush1.bf16.msra.mxu0 %v823
    %889 = vmatprep.subr.bf16.mxu0 %v826
    %890 = vmatpush1.bf16.msra.mxu0 %v825
    %891 = vmatprep.subr.bf16.mxu0 %v828
    %892 = vmatpush1.bf16.msra.mxu0 %v827
    %893 = vmatprep.subr.bf16.mxu0 %v830
    %894 = vmatpush1.bf16.msra.mxu0 %v829
    %895 = vmatprep.mubr.bf16.mxu0 %v661
    %896 = vmatmul.mubr.bf16.gmra.mrb[0].mxu0 %v660
    %v897 = vpop.f32.mrb[0].mxu0
    %v898 = vadd.f32 %v696, %v897
    %v899 = vpop.f32.mrb[0].mxu0
    %v900 = vadd.f32 %v700, %v899
    %v901 = vpop.f32.mrb[0].mxu0
    %v902 = vadd.f32 %v696, %v901
    %v903 = vpop.f32.mrb[0].mxu0
    %v904 = vadd.f32 %v700, %v903
    %905 = vmatprep.mubr.bf16.mxu0 %v663
    %906 = vmatmul.mubr.bf16.gmra.mrb[0].mxu0 %v662
    %v907 = vpop.f32.mrb[0].mxu0
    %v908 = vadd.f32 %v696, %v907
    %v909 = vpop.f32.mrb[0].mxu0
    %v910 = vadd.f32 %v700, %v909
    %v911 = vpop.f32.mrb[0].mxu0
    %v912 = vadd.f32 %v696, %v911
    %v913 = vpop.f32.mrb[0].mxu0
    %v914 = vadd.f32 %v700, %v913
    %915 = vmatprep.mubr.bf16.mxu0 %v665
    %916 = vmatmul.mubr.bf16.gmra.mrb[0].mxu0 %v664
    %v917 = vpop.f32.mrb[0].mxu0
    %v918 = vadd.f32 %v696, %v917
    %v919 = vpop.f32.mrb[0].mxu0
    %v920 = vadd.f32 %v700, %v919
    %v921 = vpop.f32.mrb[0].mxu0
    %v922 = vadd.f32 %v696, %v921
    %v923 = vpop.f32.mrb[0].mxu0
    %v924 = vadd.f32 %v700, %v923
    %925 = vmatprep.mubr.bf16.mxu0 %v667
    %926 = vmatmul.mubr.bf16.gmra.mrb[0].mxu0 %v666
    %v927 = vpop.f32.mrb[0].mxu0
    %v928 = vadd.f32 %v696, %v927
    %v929 = vpop.f32.mrb[0].mxu0
    %v930 = vadd.f32 %v700, %v929
    %v931 = vpop.f32.mrb[0].mxu0
    %v932 = vadd.f32 %v696, %v931
    %v933 = vpop.f32.mrb[0].mxu0
    %v934 = vadd.f32 %v700, %v933
    %935 = vmatprep.mubr.bf16.mxu0 %v669
    %936 = vmatmul.mubr.bf16.gmra.mrb[0].mxu0 %v668
    %v937 = vpop.f32.mrb[0].mxu0
    %v938 = vadd.f32 %v696, %v937
    %v939 = vpop.f32.mrb[0].mxu0
    %v940 = vadd.f32 %v700, %v939
    %v941 = vpop.f32.mrb[0].mxu0
    %v942 = vadd.f32 %v696, %v941
    %v943 = vpop.f32.mrb[0].mxu0
    %v944 = vadd.f32 %v700, %v943
    %945 = vmatprep.mubr.bf16.mxu0 %v671
    %946 = vmatmul.mubr.bf16.gmra.mrb[0].mxu0 %v670
    %v947 = vpop.f32.mrb[0].mxu0
    %v948 = vadd.f32 %v696, %v947
    %v949 = vpop.f32.mrb[0].mxu0
    %v950 = vadd.f32 %v700, %v949
    %v951 = vpop.f32.mrb[0].mxu0
    %v952 = vadd.f32 %v696, %v951
    %v953 = vpop.f32.mrb[0].mxu0
    %v954 = vadd.f32 %v700, %v953
    %955 = vmatprep.mubr.bf16.mxu0 %v673
    %956 = vmatmul.mubr.bf16.gmra.mrb[0].mxu0 %v672
    %v957 = vpop.f32.mrb[0].mxu0
    %v958 = vadd.f32 %v696, %v957
    %v959 = vpop.f32.mrb[0].mxu0
    %v960 = vadd.f32 %v700, %v959
    %v961 = vpop.f32.mrb[0].mxu0
    %v962 = vadd.f32 %v696, %v961
    %v963 = vpop.f32.mrb[0].mxu0
    %v964 = vadd.f32 %v700, %v963
    %965 = vmatprep.mubr.bf16.mxu0 %v675
    %966 = vmatmul.mubr.bf16.gmra.mrb[0].mxu0 %v674
    %v967 = vpop.f32.mrb[0].mxu0
    %v968 = vadd.f32 %v696, %v967
    %v969 = vpop.f32.mrb[0].mxu0
    %v970 = vadd.f32 %v700, %v969
    %v971 = vpop.f32.mrb[0].mxu0
    %v972 = vadd.f32 %v696, %v971
    %v973 = vpop.f32.mrb[0].mxu0
    %v974 = vadd.f32 %v700, %v973
    %975 = vmatprep.mubr.bf16.mxu0 %v677
    %976 = vmatmul.mubr.bf16.gmra.mrb[0].mxu0 %v676
    %v977 = vpop.f32.mrb[0].mxu0
    %v978 = vadd.f32 %v696, %v977
    %v979 = vpop.f32.mrb[0].mxu0
    %v980 = vadd.f32 %v700, %v979
    %v981 = vpop.f32.mrb[0].mxu0
    %v982 = vadd.f32 %v696, %v981
    %v983 = vpop.f32.mrb[0].mxu0
    %v984 = vadd.f32 %v700, %v983
    %985 = vmatprep.mubr.bf16.mxu0 %v679
    %986 = vmatmul.mubr.bf16.gmra.mrb[0].mxu0 %v678
    %v987 = vpop.f32.mrb[0].mxu0
    %v988 = vadd.f32 %v696, %v987
    %v989 = vpop.f32.mrb[0].mxu0
    %v990 = vadd.f32 %v700, %v989
    %v991 = vpop.f32.mrb[0].mxu0
    %v992 = vadd.f32 %v696, %v991
    %v993 = vpop.f32.mrb[0].mxu0
    %v994 = vadd.f32 %v700, %v993
    %995 = vmatprep.mubr.bf16.mxu0 %v681
    %996 = vmatmul.mubr.bf16.gmra.mrb[0].mxu0 %v680
    %v997 = vpop.f32.mrb[0].mxu0
    %v998 = vadd.f32 %v696, %v997
    %v999 = vpop.f32.mrb[0].mxu0
    %v1000 = vadd.f32 %v700, %v999
    %v1001 = vpop.f32.mrb[0].mxu0
    %v1002 = vadd.f32 %v696, %v1001
    %v1003 = vpop.f32.mrb[0].mxu0
    %v1004 = vadd.f32 %v700, %v1003
    %1005 = vmatprep.mubr.bf16.mxu0 %v683
    %1006 = vmatmul.mubr.bf16.gmra.mrb[0].mxu0 %v682
    %v1007 = vpop.f32.mrb[0].mxu0
    %v1008 = vadd.f32 %v696, %v1007
    %v1009 = vpop.f32.mrb[0].mxu0
    %v1010 = vadd.f32 %v700, %v1009
    %v1011 = vpop.f32.mrb[0].mxu0
    %v1012 = vadd.f32 %v696, %v1011
    %v1013 = vpop.f32.mrb[0].mxu0
    %v1014 = vadd.f32 %v700, %v1013
    %1015 = vmatprep.mubr.bf16.mxu0 %v685
    %1016 = vmatmul.mubr.bf16.gmra.mrb[0].mxu0 %v684
    %v1017 = vpop.f32.mrb[0].mxu0
    %v1018 = vadd.f32 %v696, %v1017
    %v1019 = vpop.f32.mrb[0].mxu0
    %v1020 = vadd.f32 %v700, %v1019
    %v1021 = vpop.f32.mrb[0].mxu0
    %v1022 = vadd.f32 %v696, %v1021
    %v1023 = vpop.f32.mrb[0].mxu0
    %v1024 = vadd.f32 %v700, %v1023
    %1025 = vmatprep.mubr.bf16.mxu0 %v687
    %1026 = vmatmul.mubr.bf16.gmra.mrb[0].mxu0 %v686
    %v1027 = vpop.f32.mrb[0].mxu0
    %v1028 = vadd.f32 %v696, %v1027
    %v1029 = vpop.f32.mrb[0].mxu0
    %v1030 = vadd.f32 %v700, %v1029
    %v1031 = vpop.f32.mrb[0].mxu0
    %v1032 = vadd.f32 %v696, %v1031
    %v1033 = vpop.f32.mrb[0].mxu0
    %v1034 = vadd.f32 %v700, %v1033
    %1035 = vmatprep.mubr.bf16.mxu0 %v689
    %1036 = vmatmul.mubr.bf16.gmra.mrb[0].mxu0 %v688
    %v1037 = vpop.f32.mrb[0].mxu0
    %v1038 = vadd.f32 %v696, %v1037
    %v1039 = vpop.f32.mrb[0].mxu0
    %v1040 = vadd.f32 %v700, %v1039
    %v1041 = vpop.f32.mrb[0].mxu0
    %v1042 = vadd.f32 %v696, %v1041
    %v1043 = vpop.f32.mrb[0].mxu0
    %v1044 = vadd.f32 %v700, %v1043
    %1045 = vmatprep.mubr.bf16.mxu0 %v691
    %1046 = vmatmul.mubr.bf16.gmra.mrb[0].mxu0 %v690
    %v1047 = vpop.f32.mrb[0].mxu0
    %v1048 = vadd.f32 %v696, %v1047
    %v1049 = vpop.f32.mrb[0].mxu0
    %v1050 = vadd.f32 %v700, %v1049
    %v1051 = vpop.f32.mrb[0].mxu0
    %v1052 = vadd.f32 %v696, %v1051
    %v1053 = vpop.f32.mrb[0].mxu0
    %v1054 = vadd.f32 %v700, %v1053
    %1055 = vdwg.mxu0
    %v1056 = vadd.f32 %v68, %v898
    %v1057 = vadd.f32 %v69, %v900
    %v1058 = vadd.f32 %v70, %v902
    %v1059 = vadd.f32 %v71, %v904
    %v1060 = vadd.f32 %v72, %v908
    %v1061 = vadd.f32 %v73, %v910
    %v1062 = vadd.f32 %v74, %v912
    %v1063 = vadd.f32 %v75, %v914
    %v1064 = vadd.f32 %v76, %v918
    %v1065 = vadd.f32 %v77, %v920
    %v1066 = vadd.f32 %v78, %v922
    %v1067 = vadd.f32 %v79, %v924
    %v1068 = vadd.f32 %v80, %v928
    %v1069 = vadd.f32 %v81, %v930
    %v1070 = vadd.f32 %v82, %v932
    %v1071 = vadd.f32 %v83, %v934
    %v1072 = vadd.f32 %v84, %v938
    %v1073 = vadd.f32 %v85, %v940
    %v1074 = vadd.f32 %v86, %v942
    %v1075 = vadd.f32 %v87, %v944
    %v1076 = vadd.f32 %v88, %v948
    %v1077 = vadd.f32 %v89, %v950
    %v1078 = vadd.f32 %v90, %v952
    %v1079 = vadd.f32 %v91, %v954
    %v1080 = vadd.f32 %v92, %v958
    %v1081 = vadd.f32 %v93, %v960
    %v1082 = vadd.f32 %v94, %v962
    %v1083 = vadd.f32 %v95, %v964
    %v1084 = vadd.f32 %v96, %v968
    %v1085 = vadd.f32 %v97, %v970
    %v1086 = vadd.f32 %v98, %v972
    %v1087 = vadd.f32 %v99, %v974
    %v1088 = vadd.f32 %v100, %v978
    %v1089 = vadd.f32 %v101, %v980
    %v1090 = vadd.f32 %v102, %v982
    %v1091 = vadd.f32 %v103, %v984
    %v1092 = vadd.f32 %v104, %v988
    %v1093 = vadd.f32 %v105, %v990
    %v1094 = vadd.f32 %v106, %v992
    %v1095 = vadd.f32 %v107, %v994
    %v1096 = vadd.f32 %v108, %v998
    %v1097 = vadd.f32 %v109, %v1000
    %v1098 = vadd.f32 %v110, %v1002
    %v1099 = vadd.f32 %v111, %v1004
    %v1100 = vadd.f32 %v112, %v1008
    %v1101 = vadd.f32 %v113, %v1010
    %v1102 = vadd.f32 %v114, %v1012
    %v1103 = vadd.f32 %v115, %v1014
    %v1104 = vadd.f32 %v116, %v1018
    %v1105 = vadd.f32 %v117, %v1020
    %v1106 = vadd.f32 %v118, %v1022
    %v1107 = vadd.f32 %v119, %v1024
    %v1108 = vadd.f32 %v120, %v1028
    %v1109 = vadd.f32 %v121, %v1030
    %v1110 = vadd.f32 %v122, %v1032
    %v1111 = vadd.f32 %v123, %v1034
    %v1112 = vadd.f32 %v124, %v1038
    %v1113 = vadd.f32 %v125, %v1040
    %v1114 = vadd.f32 %v126, %v1042
    %v1115 = vadd.f32 %v127, %v1044
    %v1116 = vadd.f32 %v128, %v1048
    %v1117 = vadd.f32 %v129, %v1050
    %v1118 = vadd.f32 %v130, %v1052
    %v1119 = vadd.f32 %v131, %v1054
    %v1120 = vadd.f32 %v1056, %v1057
    %1121 = vadd.xlane.f32.xlu0 %v1120
    %v1122 = vpop.xlane.xlu0 %1121
    %v1123 = vadd.f32 %v1058, %v1059
    %1124 = vadd.xlane.f32.xlu0 %v1123
    %v1125 = vpop.xlane.xlu0 %1124
    %v1126 = vadd.f32 %v1060, %v1061
    %1127 = vadd.xlane.f32.xlu0 %v1126
    %v1128 = vpop.xlane.xlu0 %1127
    %v1129 = vadd.f32 %v1062, %v1063
    %1130 = vadd.xlane.f32.xlu0 %v1129
    %v1131 = vpop.xlane.xlu0 %1130
    %v1132 = vadd.f32 %v1064, %v1065
    %1133 = vadd.xlane.f32.xlu0 %v1132
    %v1134 = vpop.xlane.xlu0 %1133
    %v1135 = vadd.f32 %v1066, %v1067
    %1136 = vadd.xlane.f32.xlu0 %v1135
    %v1137 = vpop.xlane.xlu0 %1136
    %v1138 = vadd.f32 %v1068, %v1069
    %1139 = vadd.xlane.f32.xlu0 %v1138
    %v1140 = vpop.xlane.xlu0 %1139
    %v1141 = vadd.f32 %v1070, %v1071
    %1142 = vadd.xlane.f32.xlu0 %v1141
    %v1143 = vpop.xlane.xlu0 %1142
    %v1144 = vadd.f32 %v1072, %v1073
    %1145 = vadd.xlane.f32.xlu0 %v1144
    %v1146 = vpop.xlane.xlu0 %1145
    %v1147 = vadd.f32 %v1074, %v1075
    %1148 = vadd.xlane.f32.xlu0 %v1147
    %v1149 = vpop.xlane.xlu0 %1148
    %v1150 = vadd.f32 %v1076, %v1077
    %1151 = vadd.xlane.f32.xlu0 %v1150
    %v1152 = vpop.xlane.xlu0 %1151
    %v1153 = vadd.f32 %v1078, %v1079
    %1154 = vadd.xlane.f32.xlu0 %v1153
    %v1155 = vpop.xlane.xlu0 %1154
    %v1156 = vadd.f32 %v1080, %v1081
    %1157 = vadd.xlane.f32.xlu0 %v1156
    %v1158 = vpop.xlane.xlu0 %1157
    %v1159 = vadd.f32 %v1082, %v1083
    %1160 = vadd.xlane.f32.xlu0 %v1159
    %v1161 = vpop.xlane.xlu0 %1160
    %v1162 = vadd.f32 %v1084, %v1085
    %1163 = vadd.xlane.f32.xlu0 %v1162
    %v1164 = vpop.xlane.xlu0 %1163
    %v1165 = vadd.f32 %v1086, %v1087
    %1166 = vadd.xlane.f32.xlu0 %v1165
    %v1167 = vpop.xlane.xlu0 %1166
    %v1168 = vadd.f32 %v1088, %v1089
    %1169 = vadd.xlane.f32.xlu0 %v1168
    %v1170 = vpop.xlane.xlu0 %1169
    %v1171 = vadd.f32 %v1090, %v1091
    %1172 = vadd.xlane.f32.xlu0 %v1171
    %v1173 = vpop.xlane.xlu0 %1172
    %v1174 = vadd.f32 %v1092, %v1093
    %1175 = vadd.xlane.f32.xlu0 %v1174
    %v1176 = vpop.xlane.xlu0 %1175
    %v1177 = vadd.f32 %v1094, %v1095
    %1178 = vadd.xlane.f32.xlu0 %v1177
    %v1179 = vpop.xlane.xlu0 %1178
    %v1180 = vadd.f32 %v1096, %v1097
    %1181 = vadd.xlane.f32.xlu0 %v1180
    %v1182 = vpop.xlane.xlu0 %1181
    %v1183 = vadd.f32 %v1098, %v1099
    %1184 = vadd.xlane.f32.xlu0 %v1183
    %v1185 = vpop.xlane.xlu0 %1184
    %v1186 = vadd.f32 %v1100, %v1101
    %1187 = vadd.xlane.f32.xlu0 %v1186
    %v1188 = vpop.xlane.xlu0 %1187
    %v1189 = vadd.f32 %v1102, %v1103
    %1190 = vadd.xlane.f32.xlu0 %v1189
    %v1191 = vpop.xlane.xlu0 %1190
    %v1192 = vadd.f32 %v1104, %v1105
    %1193 = vadd.xlane.f32.xlu0 %v1192
    %v1194 = vpop.xlane.xlu0 %1193
    %v1195 = vadd.f32 %v1106, %v1107
    %1196 = vadd.xlane.f32.xlu0 %v1195
    %v1197 = vpop.xlane.xlu0 %1196
    %v1198 = vadd.f32 %v1108, %v1109
    %1199 = vadd.xlane.f32.xlu0 %v1198
    %v1200 = vpop.xlane.xlu0 %1199
    %v1201 = vadd.f32 %v1110, %v1111
    %1202 = vadd.xlane.f32.xlu0 %v1201
    %v1203 = vpop.xlane.xlu0 %1202
    %v1204 = vadd.f32 %v1112, %v1113
    %1205 = vadd.xlane.f32.xlu0 %v1204
    %v1206 = vpop.xlane.xlu0 %1205
    %v1207 = vadd.f32 %v1114, %v1115
    %1208 = vadd.xlane.f32.xlu0 %v1207
    %v1209 = vpop.xlane.xlu0 %1208
    %v1210 = vadd.f32 %v1116, %v1117
    %1211 = vadd.xlane.f32.xlu0 %v1210
    %v1212 = vpop.xlane.xlu0 %1211
    %v1213 = vadd.f32 %v1118, %v1119
    %1214 = vadd.xlane.f32.xlu0 %v1213
    %v1215 = vpop.xlane.xlu0 %1214
    %v1216 = vrcp.pop 256.0
    %v1217 = vmul.f32 %v1122, %v1216
    %v1218 = vmul.f32 %v1125, %v1216
    %v1219 = vmul.f32 %v1128, %v1216
    %v1220 = vmul.f32 %v1131, %v1216
    %v1221 = vmul.f32 %v1134, %v1216
    %v1222 = vmul.f32 %v1137, %v1216
    %v1223 = vmul.f32 %v1140, %v1216
    %v1224 = vmul.f32 %v1143, %v1216
    %v1225 = vmul.f32 %v1146, %v1216
    %v1226 = vmul.f32 %v1149, %v1216
    %v1227 = vmul.f32 %v1152, %v1216
    %v1228 = vmul.f32 %v1155, %v1216
    %v1229 = vmul.f32 %v1158, %v1216
    %v1230 = vmul.f32 %v1161, %v1216
    %v1231 = vmul.f32 %v1164, %v1216
    %v1232 = vmul.f32 %v1167, %v1216
    %v1233 = vmul.f32 %v1170, %v1216
    %v1234 = vmul.f32 %v1173, %v1216
    %v1235 = vmul.f32 %v1176, %v1216
    %v1236 = vmul.f32 %v1179, %v1216
    %v1237 = vmul.f32 %v1182, %v1216
    %v1238 = vmul.f32 %v1185, %v1216
    %v1239 = vmul.f32 %v1188, %v1216
    %v1240 = vmul.f32 %v1191, %v1216
    %v1241 = vmul.f32 %v1194, %v1216
    %v1242 = vmul.f32 %v1197, %v1216
    %v1243 = vmul.f32 %v1200, %v1216
    %v1244 = vmul.f32 %v1203, %v1216
    %v1245 = vmul.f32 %v1206, %v1216
    %v1246 = vmul.f32 %v1209, %v1216
    %v1247 = vmul.f32 %v1212, %v1216
    %v1248 = vmul.f32 %v1215, %v1216
    %v1249 = vsub.f32 %v1056, %v1217
    %v1250 = vsub.f32 %v1057, %v1217
    %v1251 = vsub.f32 %v1058, %v1218
    %v1252 = vsub.f32 %v1059, %v1218
    %v1253 = vsub.f32 %v1060, %v1219
    %v1254 = vsub.f32 %v1061, %v1219
    %v1255 = vsub.f32 %v1062, %v1220
    %v1256 = vsub.f32 %v1063, %v1220
    %v1257 = vsub.f32 %v1064, %v1221
    %v1258 = vsub.f32 %v1065, %v1221
    %v1259 = vsub.f32 %v1066, %v1222
    %v1260 = vsub.f32 %v1067, %v1222
    %v1261 = vsub.f32 %v1068, %v1223
    %v1262 = vsub.f32 %v1069, %v1223
    %v1263 = vsub.f32 %v1070, %v1224
    %v1264 = vsub.f32 %v1071, %v1224
    %v1265 = vsub.f32 %v1072, %v1225
    %v1266 = vsub.f32 %v1073, %v1225
    %v1267 = vsub.f32 %v1074, %v1226
    %v1268 = vsub.f32 %v1075, %v1226
    %v1269 = vsub.f32 %v1076, %v1227
    %v1270 = vsub.f32 %v1077, %v1227
    %v1271 = vsub.f32 %v1078, %v1228
    %v1272 = vsub.f32 %v1079, %v1228
    %v1273 = vsub.f32 %v1080, %v1229
    %v1274 = vsub.f32 %v1081, %v1229
    %v1275 = vsub.f32 %v1082, %v1230
    %v1276 = vsub.f32 %v1083, %v1230
    %v1277 = vsub.f32 %v1084, %v1231
    %v1278 = vsub.f32 %v1085, %v1231
    %v1279 = vsub.f32 %v1086, %v1232
    %v1280 = vsub.f32 %v1087, %v1232
    %v1281 = vsub.f32 %v1088, %v1233
    %v1282 = vsub.f32 %v1089, %v1233
    %v1283 = vsub.f32 %v1090, %v1234
    %v1284 = vsub.f32 %v1091, %v1234
    %v1285 = vsub.f32 %v1092, %v1235
    %v1286 = vsub.f32 %v1093, %v1235
    %v1287 = vsub.f32 %v1094, %v1236
    %v1288 = vsub.f32 %v1095, %v1236
    %v1289 = vsub.f32 %v1096, %v1237
    %v1290 = vsub.f32 %v1097, %v1237
    %v1291 = vsub.f32 %v1098, %v1238
    %v1292 = vsub.f32 %v1099, %v1238
    %v1293 = vsub.f32 %v1100, %v1239
    %v1294 = vsub.f32 %v1101, %v1239
    %v1295 = vsub.f32 %v1102, %v1240
    %v1296 = vsub.f32 %v1103, %v1240
    %v1297 = vsub.f32 %v1104, %v1241
    %v1298 = vsub.f32 %v1105, %v1241
    %v1299 = vsub.f32 %v1106, %v1242
    %v1300 = vsub.f32 %v1107, %v1242
    %v1301 = vsub.f32 %v1108, %v1243
    %v1302 = vsub.f32 %v1109, %v1243
    %v1303 = vsub.f32 %v1110, %v1244
    %v1304 = vsub.f32 %v1111, %v1244
    %v1305 = vsub.f32 %v1112, %v1245
    %v1306 = vsub.f32 %v1113, %v1245
    %v1307 = vsub.f32 %v1114, %v1246
    %v1308 = vsub.f32 %v1115, %v1246
    %v1309 = vsub.f32 %v1116, %v1247
    %v1310 = vsub.f32 %v1117, %v1247
    %v1311 = vsub.f32 %v1118, %v1248
    %v1312 = vsub.f32 %v1119, %v1248
    %v1313 = vmul.f32 %v1249, %v1249
    %v1314 = vmul.f32 %v1250, %v1250
    %v1315 = vmul.f32 %v1251, %v1251
    %v1316 = vmul.f32 %v1252, %v1252
    %v1317 = vmul.f32 %v1253, %v1253
    %v1318 = vmul.f32 %v1254, %v1254
    %v1319 = vmul.f32 %v1255, %v1255
    %v1320 = vmul.f32 %v1256, %v1256
    %v1321 = vmul.f32 %v1257, %v1257
    %v1322 = vmul.f32 %v1258, %v1258
    %v1323 = vmul.f32 %v1259, %v1259
    %v1324 = vmul.f32 %v1260, %v1260
    %v1325 = vmul.f32 %v1261, %v1261
    %v1326 = vmul.f32 %v1262, %v1262
    %v1327 = vmul.f32 %v1263, %v1263
    %v1328 = vmul.f32 %v1264, %v1264
    %v1329 = vmul.f32 %v1265, %v1265
    %v1330 = vmul.f32 %v1266, %v1266
    %v1331 = vmul.f32 %v1267, %v1267
    %v1332 = vmul.f32 %v1268, %v1268
    %v1333 = vmul.f32 %v1269, %v1269
    %v1334 = vmul.f32 %v1270, %v1270
    %v1335 = vmul.f32 %v1271, %v1271
    %v1336 = vmul.f32 %v1272, %v1272
    %v1337 = vmul.f32 %v1273, %v1273
    %v1338 = vmul.f32 %v1274, %v1274
    %v1339 = vmul.f32 %v1275, %v1275
    %v1340 = vmul.f32 %v1276, %v1276
    %v1341 = vmul.f32 %v1277, %v1277
    %v1342 = vmul.f32 %v1278, %v1278
    %v1343 = vmul.f32 %v1279, %v1279
    %v1344 = vmul.f32 %v1280, %v1280
    %v1345 = vmul.f32 %v1281, %v1281
    %v1346 = vmul.f32 %v1282, %v1282
    %v1347 = vmul.f32 %v1283, %v1283
    %v1348 = vmul.f32 %v1284, %v1284
    %v1349 = vmul.f32 %v1285, %v1285
    %v1350 = vmul.f32 %v1286, %v1286
    %v1351 = vmul.f32 %v1287, %v1287
    %v1352 = vmul.f32 %v1288, %v1288
    %v1353 = vmul.f32 %v1289, %v1289
    %v1354 = vmul.f32 %v1290, %v1290
    %v1355 = vmul.f32 %v1291, %v1291
    %v1356 = vmul.f32 %v1292, %v1292
    %v1357 = vmul.f32 %v1293, %v1293
    %v1358 = vmul.f32 %v1294, %v1294
    %v1359 = vmul.f32 %v1295, %v1295
    %v1360 = vmul.f32 %v1296, %v1296
    %v1361 = vmul.f32 %v1297, %v1297
    %v1362 = vmul.f32 %v1298, %v1298
    %v1363 = vmul.f32 %v1299, %v1299
    %v1364 = vmul.f32 %v1300, %v1300
    %v1365 = vmul.f32 %v1301, %v1301
    %v1366 = vmul.f32 %v1302, %v1302
    %v1367 = vmul.f32 %v1303, %v1303
    %v1368 = vmul.f32 %v1304, %v1304
    %v1369 = vmul.f32 %v1305, %v1305
    %v1370 = vmul.f32 %v1306, %v1306
    %v1371 = vmul.f32 %v1307, %v1307
    %v1372 = vmul.f32 %v1308, %v1308
    %v1373 = vmul.f32 %v1309, %v1309
    %v1374 = vmul.f32 %v1310, %v1310
    %v1375 = vmul.f32 %v1311, %v1311
    %v1376 = vmul.f32 %v1312, %v1312
    %v1377 = vadd.f32 %v1313, %v1314
    %1378 = vadd.xlane.f32.xlu0 %v1377
    %v1379 = vpop.xlane.xlu0 %1378
    %v1380 = vadd.f32 %v1315, %v1316
    %1381 = vadd.xlane.f32.xlu0 %v1380
    %v1382 = vpop.xlane.xlu0 %1381
    %v1383 = vadd.f32 %v1317, %v1318
    %1384 = vadd.xlane.f32.xlu0 %v1383
    %v1385 = vpop.xlane.xlu0 %1384
    %v1386 = vadd.f32 %v1319, %v1320
    %1387 = vadd.xlane.f32.xlu0 %v1386
    %v1388 = vpop.xlane.xlu0 %1387
    %v1389 = vadd.f32 %v1321, %v1322
    %1390 = vadd.xlane.f32.xlu0 %v1389
    %v1391 = vpop.xlane.xlu0 %1390
    %v1392 = vadd.f32 %v1323, %v1324
    %1393 = vadd.xlane.f32.xlu0 %v1392
    %v1394 = vpop.xlane.xlu0 %1393
    %v1395 = vadd.f32 %v1325, %v1326
    %1396 = vadd.xlane.f32.xlu0 %v1395
    %v1397 = vpop.xlane.xlu0 %1396
    %v1398 = vadd.f32 %v1327, %v1328
    %1399 = vadd.xlane.f32.xlu0 %v1398
    %v1400 = vpop.xlane.xlu0 %1399
    %v1401 = vadd.f32 %v1329, %v1330
    %1402 = vadd.xlane.f32.xlu0 %v1401
    %v1403 = vpop.xlane.xlu0 %1402
    %v1404 = vadd.f32 %v1331, %v1332
    %1405 = vadd.xlane.f32.xlu0 %v1404
    %v1406 = vpop.xlane.xlu0 %1405
    %v1407 = vadd.f32 %v1333, %v1334
    %1408 = vadd.xlane.f32.xlu0 %v1407
    %v1409 = vpop.xlane.xlu0 %1408
    %v1410 = vadd.f32 %v1335, %v1336
    %1411 = vadd.xlane.f32.xlu0 %v1410
    %v1412 = vpop.xlane.xlu0 %1411
    %v1413 = vadd.f32 %v1337, %v1338
    %1414 = vadd.xlane.f32.xlu0 %v1413
    %v1415 = vpop.xlane.xlu0 %1414
    %v1416 = vadd.f32 %v1339, %v1340
    %1417 = vadd.xlane.f32.xlu0 %v1416
    %v1418 = vpop.xlane.xlu0 %1417
    %v1419 = vadd.f32 %v1341, %v1342
    %1420 = vadd.xlane.f32.xlu0 %v1419
    %v1421 = vpop.xlane.xlu0 %1420
    %v1422 = vadd.f32 %v1343, %v1344
    %1423 = vadd.xlane.f32.xlu0 %v1422
    %v1424 = vpop.xlane.xlu0 %1423
    %v1425 = vadd.f32 %v1345, %v1346
    %1426 = vadd.xlane.f32.xlu0 %v1425
    %v1427 = vpop.xlane.xlu0 %1426
    %v1428 = vadd.f32 %v1347, %v1348
    %1429 = vadd.xlane.f32.xlu0 %v1428
    %v1430 = vpop.xlane.xlu0 %1429
    %v1431 = vadd.f32 %v1349, %v1350
    %1432 = vadd.xlane.f32.xlu0 %v1431
    %v1433 = vpop.xlane.xlu0 %1432
    %v1434 = vadd.f32 %v1351, %v1352
    %1435 = vadd.xlane.f32.xlu0 %v1434
    %v1436 = vpop.xlane.xlu0 %1435
    %v1437 = vadd.f32 %v1353, %v1354
    %1438 = vadd.xlane.f32.xlu0 %v1437
    %v1439 = vpop.xlane.xlu0 %1438
    %v1440 = vadd.f32 %v1355, %v1356
    %1441 = vadd.xlane.f32.xlu0 %v1440
    %v1442 = vpop.xlane.xlu0 %1441
    %v1443 = vadd.f32 %v1357, %v1358
    %1444 = vadd.xlane.f32.xlu0 %v1443
    %v1445 = vpop.xlane.xlu0 %1444
    %v1446 = vadd.f32 %v1359, %v1360
    %1447 = vadd.xlane.f32.xlu0 %v1446
    %v1448 = vpop.xlane.xlu0 %1447
    %v1449 = vadd.f32 %v1361, %v1362
    %1450 = vadd.xlane.f32.xlu0 %v1449
    %v1451 = vpop.xlane.xlu0 %1450
    %v1452 = vadd.f32 %v1363, %v1364
    %1453 = vadd.xlane.f32.xlu0 %v1452
    %v1454 = vpop.xlane.xlu0 %1453
    %v1455 = vadd.f32 %v1365, %v1366
    %1456 = vadd.xlane.f32.xlu0 %v1455
    %v1457 = vpop.xlane.xlu0 %1456
    %v1458 = vadd.f32 %v1367, %v1368
    %1459 = vadd.xlane.f32.xlu0 %v1458
    %v1460 = vpop.xlane.xlu0 %1459
    %v1461 = vadd.f32 %v1369, %v1370
    %1462 = vadd.xlane.f32.xlu0 %v1461
    %v1463 = vpop.xlane.xlu0 %1462
    %v1464 = vadd.f32 %v1371, %v1372
    %1465 = vadd.xlane.f32.xlu0 %v1464
    %v1466 = vpop.xlane.xlu0 %1465
    %v1467 = vadd.f32 %v1373, %v1374
    %1468 = vadd.xlane.f32.xlu0 %v1467
    %v1469 = vpop.xlane.xlu0 %1468
    %v1470 = vadd.f32 %v1375, %v1376
    %1471 = vadd.xlane.f32.xlu0 %v1470
    %v1472 = vpop.xlane.xlu0 %1471
    %v1473 = vmul.f32 %v1379, %v1216
    %v1474 = vmul.f32 %v1382, %v1216
    %v1475 = vmul.f32 %v1385, %v1216
    %v1476 = vmul.f32 %v1388, %v1216
    %v1477 = vmul.f32 %v1391, %v1216
    %v1478 = vmul.f32 %v1394, %v1216
    %v1479 = vmul.f32 %v1397, %v1216
    %v1480 = vmul.f32 %v1400, %v1216
    %v1481 = vmul.f32 %v1403, %v1216
    %v1482 = vmul.f32 %v1406, %v1216
    %v1483 = vmul.f32 %v1409, %v1216
    %v1484 = vmul.f32 %v1412, %v1216
    %v1485 = vmul.f32 %v1415, %v1216
    %v1486 = vmul.f32 %v1418, %v1216
    %v1487 = vmul.f32 %v1421, %v1216
    %v1488 = vmul.f32 %v1424, %v1216
    %v1489 = vmul.f32 %v1427, %v1216
    %v1490 = vmul.f32 %v1430, %v1216
    %v1491 = vmul.f32 %v1433, %v1216
    %v1492 = vmul.f32 %v1436, %v1216
    %v1493 = vmul.f32 %v1439, %v1216
    %v1494 = vmul.f32 %v1442, %v1216
    %v1495 = vmul.f32 %v1445, %v1216
    %v1496 = vmul.f32 %v1448, %v1216
    %v1497 = vmul.f32 %v1451, %v1216
    %v1498 = vmul.f32 %v1454, %v1216
    %v1499 = vmul.f32 %v1457, %v1216
    %v1500 = vmul.f32 %v1460, %v1216
    %v1501 = vmul.f32 %v1463, %v1216
    %v1502 = vmul.f32 %v1466, %v1216
    %v1503 = vmul.f32 %v1469, %v1216
    %v1504 = vmul.f32 %v1472, %v1216
    %v1505 = vadd.f32 %v1473, 1e-05
    %v1506 = vadd.f32 %v1474, 1e-05
    %v1507 = vadd.f32 %v1475, 1e-05
    %v1508 = vadd.f32 %v1476, 1e-05
    %v1509 = vadd.f32 %v1477, 1e-05
    %v1510 = vadd.f32 %v1478, 1e-05
    %v1511 = vadd.f32 %v1479, 1e-05
    %v1512 = vadd.f32 %v1480, 1e-05
    %v1513 = vadd.f32 %v1481, 1e-05
    %v1514 = vadd.f32 %v1482, 1e-05
    %v1515 = vadd.f32 %v1483, 1e-05
    %v1516 = vadd.f32 %v1484, 1e-05
    %v1517 = vadd.f32 %v1485, 1e-05
    %v1518 = vadd.f32 %v1486, 1e-05
    %v1519 = vadd.f32 %v1487, 1e-05
    %v1520 = vadd.f32 %v1488, 1e-05
    %v1521 = vadd.f32 %v1489, 1e-05
    %v1522 = vadd.f32 %v1490, 1e-05
    %v1523 = vadd.f32 %v1491, 1e-05
    %v1524 = vadd.f32 %v1492, 1e-05
    %v1525 = vadd.f32 %v1493, 1e-05
    %v1526 = vadd.f32 %v1494, 1e-05
    %v1527 = vadd.f32 %v1495, 1e-05
    %v1528 = vadd.f32 %v1496, 1e-05
    %v1529 = vadd.f32 %v1497, 1e-05
    %v1530 = vadd.f32 %v1498, 1e-05
    %v1531 = vadd.f32 %v1499, 1e-05
    %v1532 = vadd.f32 %v1500, 1e-05
    %v1533 = vadd.f32 %v1501, 1e-05
    %v1534 = vadd.f32 %v1502, 1e-05
    %v1535 = vadd.f32 %v1503, 1e-05
    %v1536 = vadd.f32 %v1504, 1e-05
    %v1537 = vrsqrt.pop %v1505
    %v1538 = vrsqrt.pop %v1506
    %v1539 = vrsqrt.pop %v1507
    %v1540 = vrsqrt.pop %v1508
    %v1541 = vrsqrt.pop %v1509
    %v1542 = vrsqrt.pop %v1510
    %v1543 = vrsqrt.pop %v1511
    %v1544 = vrsqrt.pop %v1512
    %v1545 = vrsqrt.pop %v1513
    %v1546 = vrsqrt.pop %v1514
    %v1547 = vrsqrt.pop %v1515
    %v1548 = vrsqrt.pop %v1516
    %v1549 = vrsqrt.pop %v1517
    %v1550 = vrsqrt.pop %v1518
    %v1551 = vrsqrt.pop %v1519
    %v1552 = vrsqrt.pop %v1520
    %v1553 = vrsqrt.pop %v1521
    %v1554 = vrsqrt.pop %v1522
    %v1555 = vrsqrt.pop %v1523
    %v1556 = vrsqrt.pop %v1524
    %v1557 = vrsqrt.pop %v1525
    %v1558 = vrsqrt.pop %v1526
    %v1559 = vrsqrt.pop %v1527
    %v1560 = vrsqrt.pop %v1528
    %v1561 = vrsqrt.pop %v1529
    %v1562 = vrsqrt.pop %v1530
    %v1563 = vrsqrt.pop %v1531
    %v1564 = vrsqrt.pop %v1532
    %v1565 = vrsqrt.pop %v1533
    %v1566 = vrsqrt.pop %v1534
    %v1567 = vrsqrt.pop %v1535
    %v1568 = vrsqrt.pop %v1536
    %v1569 = vmul.f32 %v1249, %v1537
    %v1570 = vmul.f32 %v1250, %v1537
    %v1571 = vmul.f32 %v1251, %v1538
    %v1572 = vmul.f32 %v1252, %v1538
    %v1573 = vmul.f32 %v1253, %v1539
    %v1574 = vmul.f32 %v1254, %v1539
    %v1575 = vmul.f32 %v1255, %v1540
    %v1576 = vmul.f32 %v1256, %v1540
    %v1577 = vmul.f32 %v1257, %v1541
    %v1578 = vmul.f32 %v1258, %v1541
    %v1579 = vmul.f32 %v1259, %v1542
    %v1580 = vmul.f32 %v1260, %v1542
    %v1581 = vmul.f32 %v1261, %v1543
    %v1582 = vmul.f32 %v1262, %v1543
    %v1583 = vmul.f32 %v1263, %v1544
    %v1584 = vmul.f32 %v1264, %v1544
    %v1585 = vmul.f32 %v1265, %v1545
    %v1586 = vmul.f32 %v1266, %v1545
    %v1587 = vmul.f32 %v1267, %v1546
    %v1588 = vmul.f32 %v1268, %v1546
    %v1589 = vmul.f32 %v1269, %v1547
    %v1590 = vmul.f32 %v1270, %v1547
    %v1591 = vmul.f32 %v1271, %v1548
    %v1592 = vmul.f32 %v1272, %v1548
    %v1593 = vmul.f32 %v1273, %v1549
    %v1594 = vmul.f32 %v1274, %v1549
    %v1595 = vmul.f32 %v1275, %v1550
    %v1596 = vmul.f32 %v1276, %v1550
    %v1597 = vmul.f32 %v1277, %v1551
    %v1598 = vmul.f32 %v1278, %v1551
    %v1599 = vmul.f32 %v1279, %v1552
    %v1600 = vmul.f32 %v1280, %v1552
    %v1601 = vmul.f32 %v1281, %v1553
    %v1602 = vmul.f32 %v1282, %v1553
    %v1603 = vmul.f32 %v1283, %v1554
    %v1604 = vmul.f32 %v1284, %v1554
    %v1605 = vmul.f32 %v1285, %v1555
    %v1606 = vmul.f32 %v1286, %v1555
    %v1607 = vmul.f32 %v1287, %v1556
    %v1608 = vmul.f32 %v1288, %v1556
    %v1609 = vmul.f32 %v1289, %v1557
    %v1610 = vmul.f32 %v1290, %v1557
    %v1611 = vmul.f32 %v1291, %v1558
    %v1612 = vmul.f32 %v1292, %v1558
    %v1613 = vmul.f32 %v1293, %v1559
    %v1614 = vmul.f32 %v1294, %v1559
    %v1615 = vmul.f32 %v1295, %v1560
    %v1616 = vmul.f32 %v1296, %v1560
    %v1617 = vmul.f32 %v1297, %v1561
    %v1618 = vmul.f32 %v1298, %v1561
    %v1619 = vmul.f32 %v1299, %v1562
    %v1620 = vmul.f32 %v1300, %v1562
    %v1621 = vmul.f32 %v1301, %v1563
    %v1622 = vmul.f32 %v1302, %v1563
    %v1623 = vmul.f32 %v1303, %v1564
    %v1624 = vmul.f32 %v1304, %v1564
    %v1625 = vmul.f32 %v1305, %v1565
    %v1626 = vmul.f32 %v1306, %v1565
    %v1627 = vmul.f32 %v1307, %v1566
    %v1628 = vmul.f32 %v1308, %v1566
    %v1629 = vmul.f32 %v1309, %v1567
    %v1630 = vmul.f32 %v1310, %v1567
    %v1631 = vmul.f32 %v1311, %v1568
    %v1632 = vmul.f32 %v1312, %v1568
    %v1634 = vlaneseq
    %v1635 = vshrl.u32 %v1634, 7
    %v1636 = vsub.s32 0, %v1635
    %v1637 = vrot.slane %v198, %v1636
    %v1638 = vlaneseq
    %v1639 = vshrl.u32 %v1638, 7
    %v1640 = vsub.s32 1, %v1639
    %v1641 = vrot.slane %v198, %v1640
    %v1644 = vmul.f32 %v1569, %v1637
    %v1645 = vmul.f32 %v1570, %v1641
    %v1646 = vmul.f32 %v1571, %v1637
    %v1647 = vmul.f32 %v1572, %v1641
    %v1648 = vmul.f32 %v1573, %v1637
    %v1649 = vmul.f32 %v1574, %v1641
    %v1650 = vmul.f32 %v1575, %v1637
    %v1651 = vmul.f32 %v1576, %v1641
    %v1652 = vmul.f32 %v1577, %v1637
    %v1653 = vmul.f32 %v1578, %v1641
    %v1654 = vmul.f32 %v1579, %v1637
    %v1655 = vmul.f32 %v1580, %v1641
    %v1656 = vmul.f32 %v1581, %v1637
    %v1657 = vmul.f32 %v1582, %v1641
    %v1658 = vmul.f32 %v1583, %v1637
    %v1659 = vmul.f32 %v1584, %v1641
    %v1660 = vmul.f32 %v1585, %v1637
    %v1661 = vmul.f32 %v1586, %v1641
    %v1662 = vmul.f32 %v1587, %v1637
    %v1663 = vmul.f32 %v1588, %v1641
    %v1664 = vmul.f32 %v1589, %v1637
    %v1665 = vmul.f32 %v1590, %v1641
    %v1666 = vmul.f32 %v1591, %v1637
    %v1667 = vmul.f32 %v1592, %v1641
    %v1668 = vmul.f32 %v1593, %v1637
    %v1669 = vmul.f32 %v1594, %v1641
    %v1670 = vmul.f32 %v1595, %v1637
    %v1671 = vmul.f32 %v1596, %v1641
    %v1672 = vmul.f32 %v1597, %v1637
    %v1673 = vmul.f32 %v1598, %v1641
    %v1674 = vmul.f32 %v1599, %v1637
    %v1675 = vmul.f32 %v1600, %v1641
    %v1676 = vmul.f32 %v1601, %v1637
    %v1677 = vmul.f32 %v1602, %v1641
    %v1678 = vmul.f32 %v1603, %v1637
    %v1679 = vmul.f32 %v1604, %v1641
    %v1680 = vmul.f32 %v1605, %v1637
    %v1681 = vmul.f32 %v1606, %v1641
    %v1682 = vmul.f32 %v1607, %v1637
    %v1683 = vmul.f32 %v1608, %v1641
    %v1684 = vmul.f32 %v1609, %v1637
    %v1685 = vmul.f32 %v1610, %v1641
    %v1686 = vmul.f32 %v1611, %v1637
    %v1687 = vmul.f32 %v1612, %v1641
    %v1688 = vmul.f32 %v1613, %v1637
    %v1689 = vmul.f32 %v1614, %v1641
    %v1690 = vmul.f32 %v1615, %v1637
    %v1691 = vmul.f32 %v1616, %v1641
    %v1692 = vmul.f32 %v1617, %v1637
    %v1693 = vmul.f32 %v1618, %v1641
    %v1694 = vmul.f32 %v1619, %v1637
    %v1695 = vmul.f32 %v1620, %v1641
    %v1696 = vmul.f32 %v1621, %v1637
    %v1697 = vmul.f32 %v1622, %v1641
    %v1698 = vmul.f32 %v1623, %v1637
    %v1699 = vmul.f32 %v1624, %v1641
    %v1700 = vmul.f32 %v1625, %v1637
    %v1701 = vmul.f32 %v1626, %v1641
    %v1702 = vmul.f32 %v1627, %v1637
    %v1703 = vmul.f32 %v1628, %v1641
    %v1704 = vmul.f32 %v1629, %v1637
    %v1705 = vmul.f32 %v1630, %v1641
    %v1706 = vmul.f32 %v1631, %v1637
    %v1707 = vmul.f32 %v1632, %v1641
    %v1709 = vlaneseq
    %v1710 = vshrl.u32 %v1709, 7
    %v1711 = vsub.s32 0, %v1710
    %v1712 = vrot.slane %v199, %v1711
    %v1713 = vlaneseq
    %v1714 = vshrl.u32 %v1713, 7
    %v1715 = vsub.s32 1, %v1714
    %v1716 = vrot.slane %v199, %v1715
    %v1719 = vadd.f32 %v1644, %v1712
    %v1720 = vadd.f32 %v1645, %v1716
    %v1721 = vadd.f32 %v1646, %v1712
    %v1722 = vadd.f32 %v1647, %v1716
    %v1723 = vadd.f32 %v1648, %v1712
    %v1724 = vadd.f32 %v1649, %v1716
    %v1725 = vadd.f32 %v1650, %v1712
    %v1726 = vadd.f32 %v1651, %v1716
    %v1727 = vadd.f32 %v1652, %v1712
    %v1728 = vadd.f32 %v1653, %v1716
    %v1729 = vadd.f32 %v1654, %v1712
    %v1730 = vadd.f32 %v1655, %v1716
    %v1731 = vadd.f32 %v1656, %v1712
    %v1732 = vadd.f32 %v1657, %v1716
    %v1733 = vadd.f32 %v1658, %v1712
    %v1734 = vadd.f32 %v1659, %v1716
    %v1735 = vadd.f32 %v1660, %v1712
    %v1736 = vadd.f32 %v1661, %v1716
    %v1737 = vadd.f32 %v1662, %v1712
    %v1738 = vadd.f32 %v1663, %v1716
    %v1739 = vadd.f32 %v1664, %v1712
    %v1740 = vadd.f32 %v1665, %v1716
    %v1741 = vadd.f32 %v1666, %v1712
    %v1742 = vadd.f32 %v1667, %v1716
    %v1743 = vadd.f32 %v1668, %v1712
    %v1744 = vadd.f32 %v1669, %v1716
    %v1745 = vadd.f32 %v1670, %v1712
    %v1746 = vadd.f32 %v1671, %v1716
    %v1747 = vadd.f32 %v1672, %v1712
    %v1748 = vadd.f32 %v1673, %v1716
    %v1749 = vadd.f32 %v1674, %v1712
    %v1750 = vadd.f32 %v1675, %v1716
    %v1751 = vadd.f32 %v1676, %v1712
    %v1752 = vadd.f32 %v1677, %v1716
    %v1753 = vadd.f32 %v1678, %v1712
    %v1754 = vadd.f32 %v1679, %v1716
    %v1755 = vadd.f32 %v1680, %v1712
    %v1756 = vadd.f32 %v1681, %v1716
    %v1757 = vadd.f32 %v1682, %v1712
    %v1758 = vadd.f32 %v1683, %v1716
    %v1759 = vadd.f32 %v1684, %v1712
    %v1760 = vadd.f32 %v1685, %v1716
    %v1761 = vadd.f32 %v1686, %v1712
    %v1762 = vadd.f32 %v1687, %v1716
    %v1763 = vadd.f32 %v1688, %v1712
    %v1764 = vadd.f32 %v1689, %v1716
    %v1765 = vadd.f32 %v1690, %v1712
    %v1766 = vadd.f32 %v1691, %v1716
    %v1767 = vadd.f32 %v1692, %v1712
    %v1768 = vadd.f32 %v1693, %v1716
    %v1769 = vadd.f32 %v1694, %v1712
    %v1770 = vadd.f32 %v1695, %v1716
    %v1771 = vadd.f32 %v1696, %v1712
    %v1772 = vadd.f32 %v1697, %v1716
    %v1773 = vadd.f32 %v1698, %v1712
    %v1774 = vadd.f32 %v1699, %v1716
    %v1775 = vadd.f32 %v1700, %v1712
    %v1776 = vadd.f32 %v1701, %v1716
    %v1777 = vadd.f32 %v1702, %v1712
    %v1778 = vadd.f32 %v1703, %v1716
    %v1779 = vadd.f32 %v1704, %v1712
    %v1780 = vadd.f32 %v1705, %v1716
    %v1781 = vadd.f32 %v1706, %v1712
    %v1782 = vadd.f32 %v1707, %v1716
    %s1783 = scalar_lea.vmem [#allocation5], 256
    %v1784 = vld [vmem:[%s1783] sm:$0xff]
    %v1785 = vld [vmem:[%s1783 + $0x8] sm:$0xff]
    %v1786 = vld [vmem:[%s1783 + $0x10] sm:$0xff]
    %v1787 = vld [vmem:[%s1783 + $0x18] sm:$0xff]
    %v1788 = vld [vmem:[%s1783 + $0x20] sm:$0xff]
    %v1789 = vld [vmem:[%s1783 + $0x28] sm:$0xff]
    %v1790 = vld [vmem:[%s1783 + $0x30] sm:$0xff]
    %v1791 = vld [vmem:[%s1783 + $0x38] sm:$0xff]
    %v1792 = vld [vmem:[%s1783 + $0x40] sm:$0xff]
    %v1793 = vld [vmem:[%s1783 + $0x48] sm:$0xff]
    %v1794 = vld [vmem:[%s1783 + $0x50] sm:$0xff]
    %v1795 = vld [vmem:[%s1783 + $0x58] sm:$0xff]
    %v1796 = vld [vmem:[%s1783 + $0x60] sm:$0xff]
    %v1797 = vld [vmem:[%s1783 + $0x68] sm:$0xff]
    %v1798 = vld [vmem:[%s1783 + $0x70] sm:$0xff]
    %v1799 = vld [vmem:[%s1783 + $0x78] sm:$0xff]
    %v1800 = vld [vmem:[%s1783 + $0x80] sm:$0xff]
    %v1801 = vld [vmem:[%s1783 + $0x88] sm:$0xff]
    %v1802 = vld [vmem:[%s1783 + $0x90] sm:$0xff]
    %v1803 = vld [vmem:[%s1783 + $0x98] sm:$0xff]
    %v1804 = vld [vmem:[%s1783 + $0xa0] sm:$0xff]
    %v1805 = vld [vmem:[%s1783 + $0xa8] sm:$0xff]
    %v1806 = vld [vmem:[%s1783 + $0xb0] sm:$0xff]
    %v1807 = vld [vmem:[%s1783 + $0xb8] sm:$0xff]
    %v1808 = vld [vmem:[%s1783 + $0xc0] sm:$0xff]
    %v1809 = vld [vmem:[%s1783 + $0xc8] sm:$0xff]
    %v1810 = vld [vmem:[%s1783 + $0xd0] sm:$0xff]
    %v1811 = vld [vmem:[%s1783 + $0xd8] sm:$0xff]
    %v1812 = vld [vmem:[%s1783 + $0xe0] sm:$0xff]
    %v1813 = vld [vmem:[%s1783 + $0xe8] sm:$0xff]
    %v1814 = vld [vmem:[%s1783 + $0xf0] sm:$0xff]
    %v1815 = vld [vmem:[%s1783 + $0xf8] sm:$0xff]
    %s1816 = scalar_lea.vmem [#allocation7], 256
    %v1817 = vld [vmem:[%s1816] sm:$0xff]
    %v1818 = vld [vmem:[%s1816 + $0x8] sm:$0xff]
    %v1819 = vld [vmem:[%s1816 + $0x10] sm:$0xff]
    %v1820 = vld [vmem:[%s1816 + $0x18] sm:$0xff]
    %v1821 = vld [vmem:[%s1816 + $0x20] sm:$0xff]
    %v1822 = vld [vmem:[%s1816 + $0x28] sm:$0xff]
    %v1823 = vld [vmem:[%s1816 + $0x30] sm:$0xff]
    %v1824 = vld [vmem:[%s1816 + $0x38] sm:$0xff]
    %v1825 = vld [vmem:[%s1816 + $0x40] sm:$0xff]
    %v1826 = vld [vmem:[%s1816 + $0x48] sm:$0xff]
    %v1827 = vld [vmem:[%s1816 + $0x50] sm:$0xff]
    %v1828 = vld [vmem:[%s1816 + $0x58] sm:$0xff]
    %v1829 = vld [vmem:[%s1816 + $0x60] sm:$0xff]
    %v1830 = vld [vmem:[%s1816 + $0x68] sm:$0xff]
    %v1831 = vld [vmem:[%s1816 + $0x70] sm:$0xff]
    %v1832 = vld [vmem:[%s1816 + $0x78] sm:$0xff]
    %v1833 = vld [vmem:[%s1816 + $0x80] sm:$0xff]
    %v1834 = vld [vmem:[%s1816 + $0x88] sm:$0xff]
    %v1835 = vld [vmem:[%s1816 + $0x90] sm:$0xff]
    %v1836 = vld [vmem:[%s1816 + $0x98] sm:$0xff]
    %v1837 = vld [vmem:[%s1816 + $0xa0] sm:$0xff]
    %v1838 = vld [vmem:[%s1816 + $0xa8] sm:$0xff]
    %v1839 = vld [vmem:[%s1816 + $0xb0] sm:$0xff]
    %v1840 = vld [vmem:[%s1816 + $0xb8] sm:$0xff]
    %v1841 = vld [vmem:[%s1816 + $0xc0] sm:$0xff]
    %v1842 = vld [vmem:[%s1816 + $0xc8] sm:$0xff]
    %v1843 = vld [vmem:[%s1816 + $0xd0] sm:$0xff]
    %v1844 = vld [vmem:[%s1816 + $0xd8] sm:$0xff]
    %v1845 = vld [vmem:[%s1816 + $0xe0] sm:$0xff]
    %v1846 = vld [vmem:[%s1816 + $0xe8] sm:$0xff]
    %v1847 = vld [vmem:[%s1816 + $0xf0] sm:$0xff]
    %v1848 = vld [vmem:[%s1816 + $0xf8] sm:$0xff]
    %s1849 = scalar_lea.vmem %s2, 2
    %v1850 = vld [vmem:[%s1849] sm:$0x3]
    %s1851 = scalar_lea.vmem %s4, 2
    %v1852 = vld [vmem:[%s1851] sm:$0x3]
    %s1853 = scalar_lea.vmem %s5, 2
    %v1854 = vld [vmem:[%s1853] sm:$0x3]
    %s1855 = scalar_lea.vmem %s6, 2
    %v1856 = vld [vmem:[%s1855] sm:$0x3]
    %v1857 = vpack.c.bf16 %v1721, %v1719
    %v1858 = vpack.c.bf16 %v1722, %v1720
    %v1859 = vpack.c.bf16 %v1725, %v1723
    %v1860 = vpack.c.bf16 %v1726, %v1724
    %v1861 = vpack.c.bf16 %v1729, %v1727
    %v1862 = vpack.c.bf16 %v1730, %v1728
    %v1863 = vpack.c.bf16 %v1733, %v1731
    %v1864 = vpack.c.bf16 %v1734, %v1732
    %v1865 = vpack.c.bf16 %v1737, %v1735
    %v1866 = vpack.c.bf16 %v1738, %v1736
    %v1867 = vpack.c.bf16 %v1741, %v1739
    %v1868 = vpack.c.bf16 %v1742, %v1740
    %v1869 = vpack.c.bf16 %v1745, %v1743
    %v1870 = vpack.c.bf16 %v1746, %v1744
    %v1871 = vpack.c.bf16 %v1749, %v1747
    %v1872 = vpack.c.bf16 %v1750, %v1748
    %v1873 = vpack.c.bf16 %v1753, %v1751
    %v1874 = vpack.c.bf16 %v1754, %v1752
    %v1875 = vpack.c.bf16 %v1757, %v1755
    %v1876 = vpack.c.bf16 %v1758, %v1756
    %v1877 = vpack.c.bf16 %v1761, %v1759
    %v1878 = vpack.c.bf16 %v1762, %v1760
    %v1879 = vpack.c.bf16 %v1765, %v1763
    %v1880 = vpack.c.bf16 %v1766, %v1764
    %v1881 = vpack.c.bf16 %v1769, %v1767
    %v1882 = vpack.c.bf16 %v1770, %v1768
    %v1883 = vpack.c.bf16 %v1773, %v1771
    %v1884 = vpack.c.bf16 %v1774, %v1772
    %v1885 = vpack.c.bf16 %v1777, %v1775
    %v1886 = vpack.c.bf16 %v1778, %v1776
    %v1887 = vpack.c.bf16 %v1781, %v1779
    %v1888 = vpack.c.bf16 %v1782, %v1780
    %v1890 = vlaneseq
    %v1891 = vshrl.u32 %v1890, 7
    %v1892 = vsub.s32 0, %v1891
    %v1893 = vrot.slane %v1850, %v1892
    %v1894 = vlaneseq
    %v1895 = vshrl.u32 %v1894, 7
    %v1896 = vsub.s32 1, %v1895
    %v1897 = vrot.slane %v1850, %v1896
    %v1932 = vunpack.c.l.b16 %v1784
    %v1933 = vunpack.c.h.b16 %v1784
    %v1934 = vunpack.c.l.b16 %v1785
    %v1935 = vunpack.c.h.b16 %v1785
    %v1936 = vunpack.c.l.b16 %v1786
    %v1937 = vunpack.c.h.b16 %v1786
    %v1938 = vunpack.c.l.b16 %v1787
    %v1939 = vunpack.c.h.b16 %v1787
    %v1940 = vunpack.c.l.b16 %v1788
    %v1941 = vunpack.c.h.b16 %v1788
    %v1942 = vunpack.c.l.b16 %v1789
    %v1943 = vunpack.c.h.b16 %v1789
    %v1944 = vunpack.c.l.b16 %v1790
    %v1945 = vunpack.c.h.b16 %v1790
    %v1946 = vunpack.c.l.b16 %v1791
    %v1947 = vunpack.c.h.b16 %v1791
    %v1948 = vunpack.c.l.b16 %v1792
    %v1949 = vunpack.c.h.b16 %v1792
    %v1950 = vunpack.c.l.b16 %v1793
    %v1951 = vunpack.c.h.b16 %v1793
    %v1952 = vunpack.c.l.b16 %v1794
    %v1953 = vunpack.c.h.b16 %v1794
    %v1954 = vunpack.c.l.b16 %v1795
    %v1955 = vunpack.c.h.b16 %v1795
    %v1956 = vunpack.c.l.b16 %v1796
    %v1957 = vunpack.c.h.b16 %v1796
    %v1958 = vunpack.c.l.b16 %v1797
    %v1959 = vunpack.c.h.b16 %v1797
    %v1960 = vunpack.c.l.b16 %v1798
    %v1961 = vunpack.c.h.b16 %v1798
    %v1962 = vunpack.c.l.b16 %v1799
    %v1963 = vunpack.c.h.b16 %v1799
    %v1964 = vunpack.c.l.b16 %v1800
    %v1965 = vunpack.c.h.b16 %v1800
    %v1966 = vunpack.c.l.b16 %v1801
    %v1967 = vunpack.c.h.b16 %v1801
    %v1968 = vunpack.c.l.b16 %v1802
    %v1969 = vunpack.c.h.b16 %v1802
    %v1970 = vunpack.c.l.b16 %v1803
    %v1971 = vunpack.c.h.b16 %v1803
    %v1972 = vunpack.c.l.b16 %v1804
    %v1973 = vunpack.c.h.b16 %v1804
    %v1974 = vunpack.c.l.b16 %v1805
    %v1975 = vunpack.c.h.b16 %v1805
    %v1976 = vunpack.c.l.b16 %v1806
    %v1977 = vunpack.c.h.b16 %v1806
    %v1978 = vunpack.c.l.b16 %v1807
    %v1979 = vunpack.c.h.b16 %v1807
    %v1980 = vunpack.c.l.b16 %v1808
    %v1981 = vunpack.c.h.b16 %v1808
    %v1982 = vunpack.c.l.b16 %v1809
    %v1983 = vunpack.c.h.b16 %v1809
    %v1984 = vunpack.c.l.b16 %v1810
    %v1985 = vunpack.c.h.b16 %v1810
    %v1986 = vunpack.c.l.b16 %v1811
    %v1987 = vunpack.c.h.b16 %v1811
    %v1988 = vunpack.c.l.b16 %v1812
    %v1989 = vunpack.c.h.b16 %v1812
    %v1990 = vunpack.c.l.b16 %v1813
    %v1991 = vunpack.c.h.b16 %v1813
    %v1992 = vunpack.c.l.b16 %v1814
    %v1993 = vunpack.c.h.b16 %v1814
    %v1994 = vunpack.c.l.b16 %v1815
    %v1995 = vunpack.c.h.b16 %v1815
    %v1996 = vpack.c.b16 %v1934, %v1932
    %v1997 = vpack.c.b16 %v1935, %v1933
    %v1998 = vpack.c.b16 %v1938, %v1936
    %v1999 = vpack.c.b16 %v1939, %v1937
    %v2000 = vpack.c.b16 %v1942, %v1940
    %v2001 = vpack.c.b16 %v1943, %v1941
    %v2002 = vpack.c.b16 %v1946, %v1944
    %v2003 = vpack.c.b16 %v1947, %v1945
    %v2004 = vpack.c.b16 %v1950, %v1948
    %v2005 = vpack.c.b16 %v1951, %v1949
    %v2006 = vpack.c.b16 %v1954, %v1952
    %v2007 = vpack.c.b16 %v1955, %v1953
    %v2008 = vpack.c.b16 %v1958, %v1956
    %v2009 = vpack.c.b16 %v1959, %v1957
    %v2010 = vpack.c.b16 %v1962, %v1960
    %v2011 = vpack.c.b16 %v1963, %v1961
    %v2012 = vpack.c.b16 %v1966, %v1964
    %v2013 = vpack.c.b16 %v1967, %v1965
    %v2014 = vpack.c.b16 %v1970, %v1968
    %v2015 = vpack.c.b16 %v1971, %v1969
    %v2016 = vpack.c.b16 %v1974, %v1972
    %v2017 = vpack.c.b16 %v1975, %v1973
    %v2018 = vpack.c.b16 %v1978, %v1976
    %v2019 = vpack.c.b16 %v1979, %v1977
    %v2020 = vpack.c.b16 %v1982, %v1980
    %v2021 = vpack.c.b16 %v1983, %v1981
    %v2022 = vpack.c.b16 %v1986, %v1984
    %v2023 = vpack.c.b16 %v1987, %v1985
    %v2024 = vpack.c.b16 %v1990, %v1988
    %v2025 = vpack.c.b16 %v1991, %v1989
    %v2026 = vpack.c.b16 %v1994, %v1992
    %v2027 = vpack.c.b16 %v1995, %v1993
    %2060 = vmatprep.subr.bf16.mxu0 %v1997
    %2061 = vmatpush1.bf16.msra.mxu0 %v1996
    %2062 = vmatprep.subr.bf16.mxu0 %v1999
    %2063 = vmatpush1.bf16.msra.mxu0 %v1998
    %2064 = vmatprep.subr.bf16.mxu0 %v2001
    %2065 = vmatpush1.bf16.msra.mxu0 %v2000
    %2066 = vmatprep.subr.bf16.mxu0 %v2003
    %2067 = vmatpush1.bf16.msra.mxu0 %v2002
    %2068 = vmatprep.subr.bf16.mxu0 %v2005
    %2069 = vmatpush1.bf16.msra.mxu0 %v2004
    %2070 = vmatprep.subr.bf16.mxu0 %v2007
    %2071 = vmatpush1.bf16.msra.mxu0 %v2006
    %2072 = vmatprep.subr.bf16.mxu0 %v2009
    %2073 = vmatpush1.bf16.msra.mxu0 %v2008
    %2074 = vmatprep.subr.bf16.mxu0 %v2011
    %2075 = vmatpush1.bf16.msra.mxu0 %v2010
    %2076 = vmatprep.subr.bf16.mxu0 %v2013
    %2077 = vmatpush1.bf16.msra.mxu0 %v2012
    %2078 = vmatprep.subr.bf16.mxu0 %v2015
    %2079 = vmatpush1.bf16.msra.mxu0 %v2014
    %2080 = vmatprep.subr.bf16.mxu0 %v2017
    %2081 = vmatpush1.bf16.msra.mxu0 %v2016
    %2082 = vmatprep.subr.bf16.mxu0 %v2019
    %2083 = vmatpush1.bf16.msra.mxu0 %v2018
    %2084 = vmatprep.subr.bf16.mxu0 %v2021
    %2085 = vmatpush1.bf16.msra.mxu0 %v2020
    %2086 = vmatprep.subr.bf16.mxu0 %v2023
    %2087 = vmatpush1.bf16.msra.mxu0 %v2022
    %2088 = vmatprep.subr.bf16.mxu0 %v2025
    %2089 = vmatpush1.bf16.msra.mxu0 %v2024
    %2090 = vmatprep.subr.bf16.mxu0 %v2027
    %2091 = vmatpush1.bf16.msra.mxu0 %v2026
    %2092 = vmatprep.mubr.bf16.mxu0 %v1858
    %2093 = vmatmul.mubr.bf16.gmra.mrb[0].mxu0 %v1857
    %v2094 = vpop.f32.mrb[0].mxu0
    %v2095 = vadd.f32 %v1893, %v2094
    %v2096 = vpop.f32.mrb[0].mxu0
    %v2097 = vadd.f32 %v1897, %v2096
    %v2098 = vpop.f32.mrb[0].mxu0
    %v2099 = vadd.f32 %v1893, %v2098
    %v2100 = vpop.f32.mrb[0].mxu0
    %v2101 = vadd.f32 %v1897, %v2100
    %2102 = vmatprep.mubr.bf16.mxu0 %v1860
    %2103 = vmatmul.mubr.bf16.gmra.mrb[0].mxu0 %v1859
    %v2104 = vpop.f32.mrb[0].mxu0
    %v2105 = vadd.f32 %v1893, %v2104
    %v2106 = vpop.f32.mrb[0].mxu0
    %v2107 = vadd.f32 %v1897, %v2106
    %v2108 = vpop.f32.mrb[0].mxu0
    %v2109 = vadd.f32 %v1893, %v2108
    %v2110 = vpop.f32.mrb[0].mxu0
    %v2111 = vadd.f32 %v1897, %v2110
    %2112 = vmatprep.mubr.bf16.mxu0 %v1862
    %2113 = vmatmul.mubr.bf16.gmra.mrb[0].mxu0 %v1861
    %v2114 = vpop.f32.mrb[0].mxu0
    %v2115 = vadd.f32 %v1893, %v2114
    %v2116 = vpop.f32.mrb[0].mxu0
    %v2117 = vadd.f32 %v1897, %v2116
    %v2118 = vpop.f32.mrb[0].mxu0
    %v2119 = vadd.f32 %v1893, %v2118
    %v2120 = vpop.f32.mrb[0].mxu0
    %v2121 = vadd.f32 %v1897, %v2120
    %2122 = vmatprep.mubr.bf16.mxu0 %v1864
    %2123 = vmatmul.mubr.bf16.gmra.mrb[0].mxu0 %v1863
    %v2124 = vpop.f32.mrb[0].mxu0
    %v2125 = vadd.f32 %v1893, %v2124
    %v2126 = vpop.f32.mrb[0].mxu0
    %v2127 = vadd.f32 %v1897, %v2126
    %v2128 = vpop.f32.mrb[0].mxu0
    %v2129 = vadd.f32 %v1893, %v2128
    %v2130 = vpop.f32.mrb[0].mxu0
    %v2131 = vadd.f32 %v1897, %v2130
    %2132 = vmatprep.mubr.bf16.mxu0 %v1866
    %2133 = vmatmul.mubr.bf16.gmra.mrb[0].mxu0 %v1865
    %v2134 = vpop.f32.mrb[0].mxu0
    %v2135 = vadd.f32 %v1893, %v2134
    %v2136 = vpop.f32.mrb[0].mxu0
    %v2137 = vadd.f32 %v1897, %v2136
    %v2138 = vpop.f32.mrb[0].mxu0
    %v2139 = vadd.f32 %v1893, %v2138
    %v2140 = vpop.f32.mrb[0].mxu0
    %v2141 = vadd.f32 %v1897, %v2140
    %2142 = vmatprep.mubr.bf16.mxu0 %v1868
    %2143 = vmatmul.mubr.bf16.gmra.mrb[0].mxu0 %v1867
    %v2144 = vpop.f32.mrb[0].mxu0
    %v2145 = vadd.f32 %v1893, %v2144
    %v2146 = vpop.f32.mrb[0].mxu0
    %v2147 = vadd.f32 %v1897, %v2146
    %v2148 = vpop.f32.mrb[0].mxu0
    %v2149 = vadd.f32 %v1893, %v2148
    %v2150 = vpop.f32.mrb[0].mxu0
    %v2151 = vadd.f32 %v1897, %v2150
    %2152 = vmatprep.mubr.bf16.mxu0 %v1870
    %2153 = vmatmul.mubr.bf16.gmra.mrb[0].mxu0 %v1869
    %v2154 = vpop.f32.mrb[0].mxu0
    %v2155 = vadd.f32 %v1893, %v2154
    %v2156 = vpop.f32.mrb[0].mxu0
    %v2157 = vadd.f32 %v1897, %v2156
    %v2158 = vpop.f32.mrb[0].mxu0
    %v2159 = vadd.f32 %v1893, %v2158
    %v2160 = vpop.f32.mrb[0].mxu0
    %v2161 = vadd.f32 %v1897, %v2160
    %2162 = vmatprep.mubr.bf16.mxu0 %v1872
    %2163 = vmatmul.mubr.bf16.gmra.mrb[0].mxu0 %v1871
    %v2164 = vpop.f32.mrb[0].mxu0
    %v2165 = vadd.f32 %v1893, %v2164
    %v2166 = vpop.f32.mrb[0].mxu0
    %v2167 = vadd.f32 %v1897, %v2166
    %v2168 = vpop.f32.mrb[0].mxu0
    %v2169 = vadd.f32 %v1893, %v2168
    %v2170 = vpop.f32.mrb[0].mxu0
    %v2171 = vadd.f32 %v1897, %v2170
    %2172 = vmatprep.mubr.bf16.mxu0 %v1874
    %2173 = vmatmul.mubr.bf16.gmra.mrb[0].mxu0 %v1873
    %v2174 = vpop.f32.mrb[0].mxu0
    %v2175 = vadd.f32 %v1893, %v2174
    %v2176 = vpop.f32.mrb[0].mxu0
    %v2177 = vadd.f32 %v1897, %v2176
    %v2178 = vpop.f32.mrb[0].mxu0
    %v2179 = vadd.f32 %v1893, %v2178
    %v2180 = vpop.f32.mrb[0].mxu0
    %v2181 = vadd.f32 %v1897, %v2180
    %2182 = vmatprep.mubr.bf16.mxu0 %v1876
    %2183 = vmatmul.mubr.bf16.gmra.mrb[0].mxu0 %v1875
    %v2184 = vpop.f32.mrb[0].mxu0
    %v2185 = vadd.f32 %v1893, %v2184
    %v2186 = vpop.f32.mrb[0].mxu0
    %v2187 = vadd.f32 %v1897, %v2186
    %v2188 = vpop.f32.mrb[0].mxu0
    %v2189 = vadd.f32 %v1893, %v2188
    %v2190 = vpop.f32.mrb[0].mxu0
    %v2191 = vadd.f32 %v1897, %v2190
    %2192 = vmatprep.mubr.bf16.mxu0 %v1878
    %2193 = vmatmul.mubr.bf16.gmra.mrb[0].mxu0 %v1877
    %v2194 = vpop.f32.mrb[0].mxu0
    %v2195 = vadd.f32 %v1893, %v2194
    %v2196 = vpop.f32.mrb[0].mxu0
    %v2197 = vadd.f32 %v1897, %v2196
    %v2198 = vpop.f32.mrb[0].mxu0
    %v2199 = vadd.f32 %v1893, %v2198
    %v2200 = vpop.f32.mrb[0].mxu0
    %v2201 = vadd.f32 %v1897, %v2200
    %2202 = vmatprep.mubr.bf16.mxu0 %v1880
    %2203 = vmatmul.mubr.bf16.gmra.mrb[0].mxu0 %v1879
    %v2204 = vpop.f32.mrb[0].mxu0
    %v2205 = vadd.f32 %v1893, %v2204
    %v2206 = vpop.f32.mrb[0].mxu0
    %v2207 = vadd.f32 %v1897, %v2206
    %v2208 = vpop.f32.mrb[0].mxu0
    %v2209 = vadd.f32 %v1893, %v2208
    %v2210 = vpop.f32.mrb[0].mxu0
    %v2211 = vadd.f32 %v1897, %v2210
    %2212 = vmatprep.mubr.bf16.mxu0 %v1882
    %2213 = vmatmul.mubr.bf16.gmra.mrb[0].mxu0 %v1881
    %v2214 = vpop.f32.mrb[0].mxu0
    %v2215 = vadd.f32 %v1893, %v2214
    %v2216 = vpop.f32.mrb[0].mxu0
    %v2217 = vadd.f32 %v1897, %v2216
    %v2218 = vpop.f32.mrb[0].mxu0
    %v2219 = vadd.f32 %v1893, %v2218
    %v2220 = vpop.f32.mrb[0].mxu0
    %v2221 = vadd.f32 %v1897, %v2220
    %2222 = vmatprep.mubr.bf16.mxu0 %v1884
    %2223 = vmatmul.mubr.bf16.gmra.mrb[0].mxu0 %v1883
    %v2224 = vpop.f32.mrb[0].mxu0
    %v2225 = vadd.f32 %v1893, %v2224
    %v2226 = vpop.f32.mrb[0].mxu0
    %v2227 = vadd.f32 %v1897, %v2226
    %v2228 = vpop.f32.mrb[0].mxu0
    %v2229 = vadd.f32 %v1893, %v2228
    %v2230 = vpop.f32.mrb[0].mxu0
    %v2231 = vadd.f32 %v1897, %v2230
    %2232 = vmatprep.mubr.bf16.mxu0 %v1886
    %2233 = vmatmul.mubr.bf16.gmra.mrb[0].mxu0 %v1885
    %v2234 = vpop.f32.mrb[0].mxu0
    %v2235 = vadd.f32 %v1893, %v2234
    %v2236 = vpop.f32.mrb[0].mxu0
    %v2237 = vadd.f32 %v1897, %v2236
    %v2238 = vpop.f32.mrb[0].mxu0
    %v2239 = vadd.f32 %v1893, %v2238
    %v2240 = vpop.f32.mrb[0].mxu0
    %v2241 = vadd.f32 %v1897, %v2240
    %2242 = vmatprep.mubr.bf16.mxu0 %v1888
    %2243 = vmatmul.mubr.bf16.gmra.mrb[0].mxu0 %v1887
    %v2244 = vpop.f32.mrb[0].mxu0
    %v2245 = vadd.f32 %v1893, %v2244
    %v2246 = vpop.f32.mrb[0].mxu0
    %v2247 = vadd.f32 %v1897, %v2246
    %v2248 = vpop.f32.mrb[0].mxu0
    %v2249 = vadd.f32 %v1893, %v2248
    %v2250 = vpop.f32.mrb[0].mxu0
    %v2251 = vadd.f32 %v1897, %v2250
    %2252 = vdwg.mxu0
    %v2253 = vmax.f32 %v2095, 0.0
    %v2254 = vmax.f32 %v2097, 0.0
    %v2255 = vmax.f32 %v2099, 0.0
    %v2256 = vmax.f32 %v2101, 0.0
    %v2257 = vmax.f32 %v2105, 0.0
    %v2258 = vmax.f32 %v2107, 0.0
    %v2259 = vmax.f32 %v2109, 0.0
    %v2260 = vmax.f32 %v2111, 0.0
    %v2261 = vmax.f32 %v2115, 0.0
    %v2262 = vmax.f32 %v2117, 0.0
    %v2263 = vmax.f32 %v2119, 0.0
    %v2264 = vmax.f32 %v2121, 0.0
    %v2265 = vmax.f32 %v2125, 0.0
    %v2266 = vmax.f32 %v2127, 0.0
    %v2267 = vmax.f32 %v2129, 0.0
    %v2268 = vmax.f32 %v2131, 0.0
    %v2269 = vmax.f32 %v2135, 0.0
    %v2270 = vmax.f32 %v2137, 0.0
    %v2271 = vmax.f32 %v2139, 0.0
    %v2272 = vmax.f32 %v2141, 0.0
    %v2273 = vmax.f32 %v2145, 0.0
    %v2274 = vmax.f32 %v2147, 0.0
    %v2275 = vmax.f32 %v2149, 0.0
    %v2276 = vmax.f32 %v2151, 0.0
    %v2277 = vmax.f32 %v2155, 0.0
    %v2278 = vmax.f32 %v2157, 0.0
    %v2279 = vmax.f32 %v2159, 0.0
    %v2280 = vmax.f32 %v2161, 0.0
    %v2281 = vmax.f32 %v2165, 0.0
    %v2282 = vmax.f32 %v2167, 0.0
    %v2283 = vmax.f32 %v2169, 0.0
    %v2284 = vmax.f32 %v2171, 0.0
    %v2285 = vmax.f32 %v2175, 0.0
    %v2286 = vmax.f32 %v2177, 0.0
    %v2287 = vmax.f32 %v2179, 0.0
    %v2288 = vmax.f32 %v2181, 0.0
    %v2289 = vmax.f32 %v2185, 0.0
    %v2290 = vmax.f32 %v2187, 0.0
    %v2291 = vmax.f32 %v2189, 0.0
    %v2292 = vmax.f32 %v2191, 0.0
    %v2293 = vmax.f32 %v2195, 0.0
    %v2294 = vmax.f32 %v2197, 0.0
    %v2295 = vmax.f32 %v2199, 0.0
    %v2296 = vmax.f32 %v2201, 0.0
    %v2297 = vmax.f32 %v2205, 0.0
    %v2298 = vmax.f32 %v2207, 0.0
    %v2299 = vmax.f32 %v2209, 0.0
    %v2300 = vmax.f32 %v2211, 0.0
    %v2301 = vmax.f32 %v2215, 0.0
    %v2302 = vmax.f32 %v2217, 0.0
    %v2303 = vmax.f32 %v2219, 0.0
    %v2304 = vmax.f32 %v2221, 0.0
    %v2305 = vmax.f32 %v2225, 0.0
    %v2306 = vmax.f32 %v2227, 0.0
    %v2307 = vmax.f32 %v2229, 0.0
    %v2308 = vmax.f32 %v2231, 0.0
    %v2309 = vmax.f32 %v2235, 0.0
    %v2310 = vmax.f32 %v2237, 0.0
    %v2311 = vmax.f32 %v2239, 0.0
    %v2312 = vmax.f32 %v2241, 0.0
    %v2313 = vmax.f32 %v2245, 0.0
    %v2314 = vmax.f32 %v2247, 0.0
    %v2315 = vmax.f32 %v2249, 0.0
    %v2316 = vmax.f32 %v2251, 0.0
    %v2317 = vpack.c.bf16 %v2255, %v2253
    %v2318 = vpack.c.bf16 %v2256, %v2254
    %v2319 = vpack.c.bf16 %v2259, %v2257
    %v2320 = vpack.c.bf16 %v2260, %v2258
    %v2321 = vpack.c.bf16 %v2263, %v2261
    %v2322 = vpack.c.bf16 %v2264, %v2262
    %v2323 = vpack.c.bf16 %v2267, %v2265
    %v2324 = vpack.c.bf16 %v2268, %v2266
    %v2325 = vpack.c.bf16 %v2271, %v2269
    %v2326 = vpack.c.bf16 %v2272, %v2270
    %v2327 = vpack.c.bf16 %v2275, %v2273
    %v2328 = vpack.c.bf16 %v2276, %v2274
    %v2329 = vpack.c.bf16 %v2279, %v2277
    %v2330 = vpack.c.bf16 %v2280, %v2278
    %v2331 = vpack.c.bf16 %v2283, %v2281
    %v2332 = vpack.c.bf16 %v2284, %v2282
    %v2333 = vpack.c.bf16 %v2287, %v2285
    %v2334 = vpack.c.bf16 %v2288, %v2286
    %v2335 = vpack.c.bf16 %v2291, %v2289
    %v2336 = vpack.c.bf16 %v2292, %v2290
    %v2337 = vpack.c.bf16 %v2295, %v2293
    %v2338 = vpack.c.bf16 %v2296, %v2294
    %v2339 = vpack.c.bf16 %v2299, %v2297
    %v2340 = vpack.c.bf16 %v2300, %v2298
    %v2341 = vpack.c.bf16 %v2303, %v2301
    %v2342 = vpack.c.bf16 %v2304, %v2302
    %v2343 = vpack.c.bf16 %v2307, %v2305
    %v2344 = vpack.c.bf16 %v2308, %v2306
    %v2345 = vpack.c.bf16 %v2311, %v2309
    %v2346 = vpack.c.bf16 %v2312, %v2310
    %v2347 = vpack.c.bf16 %v2315, %v2313
    %v2348 = vpack.c.bf16 %v2316, %v2314
    %v2350 = vlaneseq
    %v2351 = vshrl.u32 %v2350, 7
    %v2352 = vsub.s32 0, %v2351
    %v2353 = vrot.slane %v1852, %v2352
    %v2354 = vlaneseq
    %v2355 = vshrl.u32 %v2354, 7
    %v2356 = vsub.s32 1, %v2355
    %v2357 = vrot.slane %v1852, %v2356
    %v2392 = vunpack.c.l.b16 %v1817
    %v2393 = vunpack.c.h.b16 %v1817
    %v2394 = vunpack.c.l.b16 %v1818
    %v2395 = vunpack.c.h.b16 %v1818
    %v2396 = vunpack.c.l.b16 %v1819
    %v2397 = vunpack.c.h.b16 %v1819
    %v2398 = vunpack.c.l.b16 %v1820
    %v2399 = vunpack.c.h.b16 %v1820
    %v2400 = vunpack.c.l.b16 %v1821
    %v2401 = vunpack.c.h.b16 %v1821
    %v2402 = vunpack.c.l.b16 %v1822
    %v2403 = vunpack.c.h.b16 %v1822
    %v2404 = vunpack.c.l.b16 %v1823
    %v2405 = vunpack.c.h.b16 %v1823
    %v2406 = vunpack.c.l.b16 %v1824
    %v2407 = vunpack.c.h.b16 %v1824
    %v2408 = vunpack.c.l.b16 %v1825
    %v2409 = vunpack.c.h.b16 %v1825
    %v2410 = vunpack.c.l.b16 %v1826
    %v2411 = vunpack.c.h.b16 %v1826
    %v2412 = vunpack.c.l.b16 %v1827
    %v2413 = vunpack.c.h.b16 %v1827
    %v2414 = vunpack.c.l.b16 %v1828
    %v2415 = vunpack.c.h.b16 %v1828
    %v2416 = vunpack.c.l.b16 %v1829
    %v2417 = vunpack.c.h.b16 %v1829
    %v2418 = vunpack.c.l.b16 %v1830
    %v2419 = vunpack.c.h.b16 %v1830
    %v2420 = vunpack.c.l.b16 %v1831
    %v2421 = vunpack.c.h.b16 %v1831
    %v2422 = vunpack.c.l.b16 %v1832
    %v2423 = vunpack.c.h.b16 %v1832
    %v2424 = vunpack.c.l.b16 %v1833
    %v2425 = vunpack.c.h.b16 %v1833
    %v2426 = vunpack.c.l.b16 %v1834
    %v2427 = vunpack.c.h.b16 %v1834
    %v2428 = vunpack.c.l.b16 %v1835
    %v2429 = vunpack.c.h.b16 %v1835
    %v2430 = vunpack.c.l.b16 %v1836
    %v2431 = vunpack.c.h.b16 %v1836
    %v2432 = vunpack.c.l.b16 %v1837
    %v2433 = vunpack.c.h.b16 %v1837
    %v2434 = vunpack.c.l.b16 %v1838
    %v2435 = vunpack.c.h.b16 %v1838
    %v2436 = vunpack.c.l.b16 %v1839
    %v2437 = vunpack.c.h.b16 %v1839
    %v2438 = vunpack.c.l.b16 %v1840
    %v2439 = vunpack.c.h.b16 %v1840
    %v2440 = vunpack.c.l.b16 %v1841
    %v2441 = vunpack.c.h.b16 %v1841
    %v2442 = vunpack.c.l.b16 %v1842
    %v2443 = vunpack.c.h.b16 %v1842
    %v2444 = vunpack.c.l.b16 %v1843
    %v2445 = vunpack.c.h.b16 %v1843
    %v2446 = vunpack.c.l.b16 %v1844
    %v2447 = vunpack.c.h.b16 %v1844
    %v2448 = vunpack.c.l.b16 %v1845
    %v2449 = vunpack.c.h.b16 %v1845
    %v2450 = vunpack.c.l.b16 %v1846
    %v2451 = vunpack.c.h.b16 %v1846
    %v2452 = vunpack.c.l.b16 %v1847
    %v2453 = vunpack.c.h.b16 %v1847
    %v2454 = vunpack.c.l.b16 %v1848
    %v2455 = vunpack.c.h.b16 %v1848
    %v2456 = vpack.c.b16 %v2394, %v2392
    %v2457 = vpack.c.b16 %v2395, %v2393
    %v2458 = vpack.c.b16 %v2398, %v2396
    %v2459 = vpack.c.b16 %v2399, %v2397
    %v2460 = vpack.c.b16 %v2402, %v2400
    %v2461 = vpack.c.b16 %v2403, %v2401
    %v2462 = vpack.c.b16 %v2406, %v2404
    %v2463 = vpack.c.b16 %v2407, %v2405
    %v2464 = vpack.c.b16 %v2410, %v2408
    %v2465 = vpack.c.b16 %v2411, %v2409
    %v2466 = vpack.c.b16 %v2414, %v2412
    %v2467 = vpack.c.b16 %v2415, %v2413
    %v2468 = vpack.c.b16 %v2418, %v2416
    %v2469 = vpack.c.b16 %v2419, %v2417
    %v2470 = vpack.c.b16 %v2422, %v2420
    %v2471 = vpack.c.b16 %v2423, %v2421
    %v2472 = vpack.c.b16 %v2426, %v2424
    %v2473 = vpack.c.b16 %v2427, %v2425
    %v2474 = vpack.c.b16 %v2430, %v2428
    %v2475 = vpack.c.b16 %v2431, %v2429
    %v2476 = vpack.c.b16 %v2434, %v2432
    %v2477 = vpack.c.b16 %v2435, %v2433
    %v2478 = vpack.c.b16 %v2438, %v2436
    %v2479 = vpack.c.b16 %v2439, %v2437
    %v2480 = vpack.c.b16 %v2442, %v2440
    %v2481 = vpack.c.b16 %v2443, %v2441
    %v2482 = vpack.c.b16 %v2446, %v2444
    %v2483 = vpack.c.b16 %v2447, %v2445
    %v2484 = vpack.c.b16 %v2450, %v2448
    %v2485 = vpack.c.b16 %v2451, %v2449
    %v2486 = vpack.c.b16 %v2454, %v2452
    %v2487 = vpack.c.b16 %v2455, %v2453
    %2520 = vmatprep.subr.bf16.mxu0 %v2457
    %2521 = vmatpush1.bf16.msra.mxu0 %v2456
    %2522 = vmatprep.subr.bf16.mxu0 %v2459
    %2523 = vmatpush1.bf16.msra.mxu0 %v2458
    %2524 = vmatprep.subr.bf16.mxu0 %v2461
    %2525 = vmatpush1.bf16.msra.mxu0 %v2460
    %2526 = vmatprep.subr.bf16.mxu0 %v2463
    %2527 = vmatpush1.bf16.msra.mxu0 %v2462
    %2528 = vmatprep.subr.bf16.mxu0 %v2465
    %2529 = vmatpush1.bf16.msra.mxu0 %v2464
    %2530 = vmatprep.subr.bf16.mxu0 %v2467
    %2531 = vmatpush1.bf16.msra.mxu0 %v2466
    %2532 = vmatprep.subr.bf16.mxu0 %v2469
    %2533 = vmatpush1.bf16.msra.mxu0 %v2468
    %2534 = vmatprep.subr.bf16.mxu0 %v2471
    %2535 = vmatpush1.bf16.msra.mxu0 %v2470
    %2536 = vmatprep.subr.bf16.mxu0 %v2473
    %2537 = vmatpush1.bf16.msra.mxu0 %v2472
    %2538 = vmatprep.subr.bf16.mxu0 %v2475
    %2539 = vmatpush1.bf16.msra.mxu0 %v2474
    %2540 = vmatprep.subr.bf16.mxu0 %v2477
    %2541 = vmatpush1.bf16.msra.mxu0 %v2476
    %2542 = vmatprep.subr.bf16.mxu0 %v2479
    %2543 = vmatpush1.bf16.msra.mxu0 %v2478
    %2544 = vmatprep.subr.bf16.mxu0 %v2481
    %2545 = vmatpush1.bf16.msra.mxu0 %v2480
    %2546 = vmatprep.subr.bf16.mxu0 %v2483
    %2547 = vmatpush1.bf16.msra.mxu0 %v2482
    %2548 = vmatprep.subr.bf16.mxu0 %v2485
    %2549 = vmatpush1.bf16.msra.mxu0 %v2484
    %2550 = vmatprep.subr.bf16.mxu0 %v2487
    %2551 = vmatpush1.bf16.msra.mxu0 %v2486
    %2552 = vmatprep.mubr.bf16.mxu0 %v2318
    %2553 = vmatmul.mubr.bf16.gmra.mrb[0].mxu0 %v2317
    %v2554 = vpop.f32.mrb[0].mxu0
    %v2555 = vadd.f32 %v2353, %v2554
    %v2556 = vpop.f32.mrb[0].mxu0
    %v2557 = vadd.f32 %v2357, %v2556
    %v2558 = vpop.f32.mrb[0].mxu0
    %v2559 = vadd.f32 %v2353, %v2558
    %v2560 = vpop.f32.mrb[0].mxu0
    %v2561 = vadd.f32 %v2357, %v2560
    %2562 = vmatprep.mubr.bf16.mxu0 %v2320
    %2563 = vmatmul.mubr.bf16.gmra.mrb[0].mxu0 %v2319
    %v2564 = vpop.f32.mrb[0].mxu0
    %v2565 = vadd.f32 %v2353, %v2564
    %v2566 = vpop.f32.mrb[0].mxu0
    %v2567 = vadd.f32 %v2357, %v2566
    %v2568 = vpop.f32.mrb[0].mxu0
    %v2569 = vadd.f32 %v2353, %v2568
    %v2570 = vpop.f32.mrb[0].mxu0
    %v2571 = vadd.f32 %v2357, %v2570
    %2572 = vmatprep.mubr.bf16.mxu0 %v2322
    %2573 = vmatmul.mubr.bf16.gmra.mrb[0].mxu0 %v2321
    %v2574 = vpop.f32.mrb[0].mxu0
    %v2575 = vadd.f32 %v2353, %v2574
    %v2576 = vpop.f32.mrb[0].mxu0
    %v2577 = vadd.f32 %v2357, %v2576
    %v2578 = vpop.f32.mrb[0].mxu0
    %v2579 = vadd.f32 %v2353, %v2578
    %v2580 = vpop.f32.mrb[0].mxu0
    %v2581 = vadd.f32 %v2357, %v2580
    %2582 = vmatprep.mubr.bf16.mxu0 %v2324
    %2583 = vmatmul.mubr.bf16.gmra.mrb[0].mxu0 %v2323
    %v2584 = vpop.f32.mrb[0].mxu0
    %v2585 = vadd.f32 %v2353, %v2584
    %v2586 = vpop.f32.mrb[0].mxu0
    %v2587 = vadd.f32 %v2357, %v2586
    %v2588 = vpop.f32.mrb[0].mxu0
    %v2589 = vadd.f32 %v2353, %v2588
    %v2590 = vpop.f32.mrb[0].mxu0
    %v2591 = vadd.f32 %v2357, %v2590
    %2592 = vmatprep.mubr.bf16.mxu0 %v2326
    %2593 = vmatmul.mubr.bf16.gmra.mrb[0].mxu0 %v2325
    %v2594 = vpop.f32.mrb[0].mxu0
    %v2595 = vadd.f32 %v2353, %v2594
    %v2596 = vpop.f32.mrb[0].mxu0
    %v2597 = vadd.f32 %v2357, %v2596
    %v2598 = vpop.f32.mrb[0].mxu0
    %v2599 = vadd.f32 %v2353, %v2598
    %v2600 = vpop.f32.mrb[0].mxu0
    %v2601 = vadd.f32 %v2357, %v2600
    %2602 = vmatprep.mubr.bf16.mxu0 %v2328
    %2603 = vmatmul.mubr.bf16.gmra.mrb[0].mxu0 %v2327
    %v2604 = vpop.f32.mrb[0].mxu0
    %v2605 = vadd.f32 %v2353, %v2604
    %v2606 = vpop.f32.mrb[0].mxu0
    %v2607 = vadd.f32 %v2357, %v2606
    %v2608 = vpop.f32.mrb[0].mxu0
    %v2609 = vadd.f32 %v2353, %v2608
    %v2610 = vpop.f32.mrb[0].mxu0
    %v2611 = vadd.f32 %v2357, %v2610
    %2612 = vmatprep.mubr.bf16.mxu0 %v2330
    %2613 = vmatmul.mubr.bf16.gmra.mrb[0].mxu0 %v2329
    %v2614 = vpop.f32.mrb[0].mxu0
    %v2615 = vadd.f32 %v2353, %v2614
    %v2616 = vpop.f32.mrb[0].mxu0
    %v2617 = vadd.f32 %v2357, %v2616
    %v2618 = vpop.f32.mrb[0].mxu0
    %v2619 = vadd.f32 %v2353, %v2618
    %v2620 = vpop.f32.mrb[0].mxu0
    %v2621 = vadd.f32 %v2357, %v2620
    %2622 = vmatprep.mubr.bf16.mxu0 %v2332
    %2623 = vmatmul.mubr.bf16.gmra.mrb[0].mxu0 %v2331
    %v2624 = vpop.f32.mrb[0].mxu0
    %v2625 = vadd.f32 %v2353, %v2624
    %v2626 = vpop.f32.mrb[0].mxu0
    %v2627 = vadd.f32 %v2357, %v2626
    %v2628 = vpop.f32.mrb[0].mxu0
    %v2629 = vadd.f32 %v2353, %v2628
    %v2630 = vpop.f32.mrb[0].mxu0
    %v2631 = vadd.f32 %v2357, %v2630
    %2632 = vmatprep.mubr.bf16.mxu0 %v2334
    %2633 = vmatmul.mubr.bf16.gmra.mrb[0].mxu0 %v2333
    %v2634 = vpop.f32.mrb[0].mxu0
    %v2635 = vadd.f32 %v2353, %v2634
    %v2636 = vpop.f32.mrb[0].mxu0
    %v2637 = vadd.f32 %v2357, %v2636
    %v2638 = vpop.f32.mrb[0].mxu0
    %v2639 = vadd.f32 %v2353, %v2638
    %v2640 = vpop.f32.mrb[0].mxu0
    %v2641 = vadd.f32 %v2357, %v2640
    %2642 = vmatprep.mubr.bf16.mxu0 %v2336
    %2643 = vmatmul.mubr.bf16.gmra.mrb[0].mxu0 %v2335
    %v2644 = vpop.f32.mrb[0].mxu0
    %v2645 = vadd.f32 %v2353, %v2644
    %v2646 = vpop.f32.mrb[0].mxu0
    %v2647 = vadd.f32 %v2357, %v2646
    %v2648 = vpop.f32.mrb[0].mxu0
    %v2649 = vadd.f32 %v2353, %v2648
    %v2650 = vpop.f32.mrb[0].mxu0
    %v2651 = vadd.f32 %v2357, %v2650
    %2652 = vmatprep.mubr.bf16.mxu0 %v2338
    %2653 = vmatmul.mubr.bf16.gmra.mrb[0].mxu0 %v2337
    %v2654 = vpop.f32.mrb[0].mxu0
    %v2655 = vadd.f32 %v2353, %v2654
    %v2656 = vpop.f32.mrb[0].mxu0
    %v2657 = vadd.f32 %v2357, %v2656
    %v2658 = vpop.f32.mrb[0].mxu0
    %v2659 = vadd.f32 %v2353, %v2658
    %v2660 = vpop.f32.mrb[0].mxu0
    %v2661 = vadd.f32 %v2357, %v2660
    %2662 = vmatprep.mubr.bf16.mxu0 %v2340
    %2663 = vmatmul.mubr.bf16.gmra.mrb[0].mxu0 %v2339
    %v2664 = vpop.f32.mrb[0].mxu0
    %v2665 = vadd.f32 %v2353, %v2664
    %v2666 = vpop.f32.mrb[0].mxu0
    %v2667 = vadd.f32 %v2357, %v2666
    %v2668 = vpop.f32.mrb[0].mxu0
    %v2669 = vadd.f32 %v2353, %v2668
    %v2670 = vpop.f32.mrb[0].mxu0
    %v2671 = vadd.f32 %v2357, %v2670
    %2672 = vmatprep.mubr.bf16.mxu0 %v2342
    %2673 = vmatmul.mubr.bf16.gmra.mrb[0].mxu0 %v2341
    %v2674 = vpop.f32.mrb[0].mxu0
    %v2675 = vadd.f32 %v2353, %v2674
    %v2676 = vpop.f32.mrb[0].mxu0
    %v2677 = vadd.f32 %v2357, %v2676
    %v2678 = vpop.f32.mrb[0].mxu0
    %v2679 = vadd.f32 %v2353, %v2678
    %v2680 = vpop.f32.mrb[0].mxu0
    %v2681 = vadd.f32 %v2357, %v2680
    %2682 = vmatprep.mubr.bf16.mxu0 %v2344
    %2683 = vmatmul.mubr.bf16.gmra.mrb[0].mxu0 %v2343
    %v2684 = vpop.f32.mrb[0].mxu0
    %v2685 = vadd.f32 %v2353, %v2684
    %v2686 = vpop.f32.mrb[0].mxu0
    %v2687 = vadd.f32 %v2357, %v2686
    %v2688 = vpop.f32.mrb[0].mxu0
    %v2689 = vadd.f32 %v2353, %v2688
    %v2690 = vpop.f32.mrb[0].mxu0
    %v2691 = vadd.f32 %v2357, %v2690
    %2692 = vmatprep.mubr.bf16.mxu0 %v2346
    %2693 = vmatmul.mubr.bf16.gmra.mrb[0].mxu0 %v2345
    %v2694 = vpop.f32.mrb[0].mxu0
    %v2695 = vadd.f32 %v2353, %v2694
    %v2696 = vpop.f32.mrb[0].mxu0
    %v2697 = vadd.f32 %v2357, %v2696
    %v2698 = vpop.f32.mrb[0].mxu0
    %v2699 = vadd.f32 %v2353, %v2698
    %v2700 = vpop.f32.mrb[0].mxu0
    %v2701 = vadd.f32 %v2357, %v2700
    %2702 = vmatprep.mubr.bf16.mxu0 %v2348
    %2703 = vmatmul.mubr.bf16.gmra.mrb[0].mxu0 %v2347
    %v2704 = vpop.f32.mrb[0].mxu0
    %v2705 = vadd.f32 %v2353, %v2704
    %v2706 = vpop.f32.mrb[0].mxu0
    %v2707 = vadd.f32 %v2357, %v2706
    %v2708 = vpop.f32.mrb[0].mxu0
    %v2709 = vadd.f32 %v2353, %v2708
    %v2710 = vpop.f32.mrb[0].mxu0
    %v2711 = vadd.f32 %v2357, %v2710
    %2712 = vdwg.mxu0
    %v2713 = vadd.f32 %v1719, %v2555
    %v2714 = vadd.f32 %v1720, %v2557
    %v2715 = vadd.f32 %v1721, %v2559
    %v2716 = vadd.f32 %v1722, %v2561
    %v2717 = vadd.f32 %v1723, %v2565
    %v2718 = vadd.f32 %v1724, %v2567
    %v2719 = vadd.f32 %v1725, %v2569
    %v2720 = vadd.f32 %v1726, %v2571
    %v2721 = vadd.f32 %v1727, %v2575
    %v2722 = vadd.f32 %v1728, %v2577
    %v2723 = vadd.f32 %v1729, %v2579
    %v2724 = vadd.f32 %v1730, %v2581
    %v2725 = vadd.f32 %v1731, %v2585
    %v2726 = vadd.f32 %v1732, %v2587
    %v2727 = vadd.f32 %v1733, %v2589
    %v2728 = vadd.f32 %v1734, %v2591
    %v2729 = vadd.f32 %v1735, %v2595
    %v2730 = vadd.f32 %v1736, %v2597
    %v2731 = vadd.f32 %v1737, %v2599
    %v2732 = vadd.f32 %v1738, %v2601
    %v2733 = vadd.f32 %v1739, %v2605
    %v2734 = vadd.f32 %v1740, %v2607
    %v2735 = vadd.f32 %v1741, %v2609
    %v2736 = vadd.f32 %v1742, %v2611
    %v2737 = vadd.f32 %v1743, %v2615
    %v2738 = vadd.f32 %v1744, %v2617
    %v2739 = vadd.f32 %v1745, %v2619
    %v2740 = vadd.f32 %v1746, %v2621
    %v2741 = vadd.f32 %v1747, %v2625
    %v2742 = vadd.f32 %v1748, %v2627
    %v2743 = vadd.f32 %v1749, %v2629
    %v2744 = vadd.f32 %v1750, %v2631
    %v2745 = vadd.f32 %v1751, %v2635
    %v2746 = vadd.f32 %v1752, %v2637
    %v2747 = vadd.f32 %v1753, %v2639
    %v2748 = vadd.f32 %v1754, %v2641
    %v2749 = vadd.f32 %v1755, %v2645
    %v2750 = vadd.f32 %v1756, %v2647
    %v2751 = vadd.f32 %v1757, %v2649
    %v2752 = vadd.f32 %v1758, %v2651
    %v2753 = vadd.f32 %v1759, %v2655
    %v2754 = vadd.f32 %v1760, %v2657
    %v2755 = vadd.f32 %v1761, %v2659
    %v2756 = vadd.f32 %v1762, %v2661
    %v2757 = vadd.f32 %v1763, %v2665
    %v2758 = vadd.f32 %v1764, %v2667
    %v2759 = vadd.f32 %v1765, %v2669
    %v2760 = vadd.f32 %v1766, %v2671
    %v2761 = vadd.f32 %v1767, %v2675
    %v2762 = vadd.f32 %v1768, %v2677
    %v2763 = vadd.f32 %v1769, %v2679
    %v2764 = vadd.f32 %v1770, %v2681
    %v2765 = vadd.f32 %v1771, %v2685
    %v2766 = vadd.f32 %v1772, %v2687
    %v2767 = vadd.f32 %v1773, %v2689
    %v2768 = vadd.f32 %v1774, %v2691
    %v2769 = vadd.f32 %v1775, %v2695
    %v2770 = vadd.f32 %v1776, %v2697
    %v2771 = vadd.f32 %v1777, %v2699
    %v2772 = vadd.f32 %v1778, %v2701
    %v2773 = vadd.f32 %v1779, %v2705
    %v2774 = vadd.f32 %v1780, %v2707
    %v2775 = vadd.f32 %v1781, %v2709
    %v2776 = vadd.f32 %v1782, %v2711
    %v2777 = vadd.f32 %v2713, %v2714
    %2778 = vadd.xlane.f32.xlu0 %v2777
    %v2779 = vpop.xlane.xlu0 %2778
    %v2780 = vadd.f32 %v2715, %v2716
    %2781 = vadd.xlane.f32.xlu0 %v2780
    %v2782 = vpop.xlane.xlu0 %2781
    %v2783 = vadd.f32 %v2717, %v2718
    %2784 = vadd.xlane.f32.xlu0 %v2783
    %v2785 = vpop.xlane.xlu0 %2784
    %v2786 = vadd.f32 %v2719, %v2720
    %2787 = vadd.xlane.f32.xlu0 %v2786
    %v2788 = vpop.xlane.xlu0 %2787
    %v2789 = vadd.f32 %v2721, %v2722
    %2790 = vadd.xlane.f32.xlu0 %v2789
    %v2791 = vpop.xlane.xlu0 %2790
    %v2792 = vadd.f32 %v2723, %v2724
    %2793 = vadd.xlane.f32.xlu0 %v2792
    %v2794 = vpop.xlane.xlu0 %2793
    %v2795 = vadd.f32 %v2725, %v2726
    %2796 = vadd.xlane.f32.xlu0 %v2795
    %v2797 = vpop.xlane.xlu0 %2796
    %v2798 = vadd.f32 %v2727, %v2728
    %2799 = vadd.xlane.f32.xlu0 %v2798
    %v2800 = vpop.xlane.xlu0 %2799
    %v2801 = vadd.f32 %v2729, %v2730
    %2802 = vadd.xlane.f32.xlu0 %v2801
    %v2803 = vpop.xlane.xlu0 %2802
    %v2804 = vadd.f32 %v2731, %v2732
    %2805 = vadd.xlane.f32.xlu0 %v2804
    %v2806 = vpop.xlane.xlu0 %2805
    %v2807 = vadd.f32 %v2733, %v2734
    %2808 = vadd.xlane.f32.xlu0 %v2807
    %v2809 = vpop.xlane.xlu0 %2808
    %v2810 = vadd.f32 %v2735, %v2736
    %2811 = vadd.xlane.f32.xlu0 %v2810
    %v2812 = vpop.xlane.xlu0 %2811
    %v2813 = vadd.f32 %v2737, %v2738
    %2814 = vadd.xlane.f32.xlu0 %v2813
    %v2815 = vpop.xlane.xlu0 %2814
    %v2816 = vadd.f32 %v2739, %v2740
    %2817 = vadd.xlane.f32.xlu0 %v2816
    %v2818 = vpop.xlane.xlu0 %2817
    %v2819 = vadd.f32 %v2741, %v2742
    %2820 = vadd.xlane.f32.xlu0 %v2819
    %v2821 = vpop.xlane.xlu0 %2820
    %v2822 = vadd.f32 %v2743, %v2744
    %2823 = vadd.xlane.f32.xlu0 %v2822
    %v2824 = vpop.xlane.xlu0 %2823
    %v2825 = vadd.f32 %v2745, %v2746
    %2826 = vadd.xlane.f32.xlu0 %v2825
    %v2827 = vpop.xlane.xlu0 %2826
    %v2828 = vadd.f32 %v2747, %v2748
    %2829 = vadd.xlane.f32.xlu0 %v2828
    %v2830 = vpop.xlane.xlu0 %2829
    %v2831 = vadd.f32 %v2749, %v2750
    %2832 = vadd.xlane.f32.xlu0 %v2831
    %v2833 = vpop.xlane.xlu0 %2832
    %v2834 = vadd.f32 %v2751, %v2752
    %2835 = vadd.xlane.f32.xlu0 %v2834
    %v2836 = vpop.xlane.xlu0 %2835
    %v2837 = vadd.f32 %v2753, %v2754
    %2838 = vadd.xlane.f32.xlu0 %v2837
    %v2839 = vpop.xlane.xlu0 %2838
    %v2840 = vadd.f32 %v2755, %v2756
    %2841 = vadd.xlane.f32.xlu0 %v2840
    %v2842 = vpop.xlane.xlu0 %2841
    %v2843 = vadd.f32 %v2757, %v2758
    %2844 = vadd.xlane.f32.xlu0 %v2843
    %v2845 = vpop.xlane.xlu0 %2844
    %v2846 = vadd.f32 %v2759, %v2760
    %2847 = vadd.xlane.f32.xlu0 %v2846
    %v2848 = vpop.xlane.xlu0 %2847
    %v2849 = vadd.f32 %v2761, %v2762
    %2850 = vadd.xlane.f32.xlu0 %v2849
    %v2851 = vpop.xlane.xlu0 %2850
    %v2852 = vadd.f32 %v2763, %v2764
    %2853 = vadd.xlane.f32.xlu0 %v2852
    %v2854 = vpop.xlane.xlu0 %2853
    %v2855 = vadd.f32 %v2765, %v2766
    %2856 = vadd.xlane.f32.xlu0 %v2855
    %v2857 = vpop.xlane.xlu0 %2856
    %v2858 = vadd.f32 %v2767, %v2768
    %2859 = vadd.xlane.f32.xlu0 %v2858
    %v2860 = vpop.xlane.xlu0 %2859
    %v2861 = vadd.f32 %v2769, %v2770
    %2862 = vadd.xlane.f32.xlu0 %v2861
    %v2863 = vpop.xlane.xlu0 %2862
    %v2864 = vadd.f32 %v2771, %v2772
    %2865 = vadd.xlane.f32.xlu0 %v2864
    %v2866 = vpop.xlane.xlu0 %2865
    %v2867 = vadd.f32 %v2773, %v2774
    %2868 = vadd.xlane.f32.xlu0 %v2867
    %v2869 = vpop.xlane.xlu0 %2868
    %v2870 = vadd.f32 %v2775, %v2776
    %2871 = vadd.xlane.f32.xlu0 %v2870
    %v2872 = vpop.xlane.xlu0 %2871
    %v2873 = vmul.f32 %v2779, %v1216
    %v2874 = vmul.f32 %v2782, %v1216
    %v2875 = vmul.f32 %v2785, %v1216
    %v2876 = vmul.f32 %v2788, %v1216
    %v2877 = vmul.f32 %v2791, %v1216
    %v2878 = vmul.f32 %v2794, %v1216
    %v2879 = vmul.f32 %v2797, %v1216
    %v2880 = vmul.f32 %v2800, %v1216
    %v2881 = vmul.f32 %v2803, %v1216
    %v2882 = vmul.f32 %v2806, %v1216
    %v2883 = vmul.f32 %v2809, %v1216
    %v2884 = vmul.f32 %v2812, %v1216
    %v2885 = vmul.f32 %v2815, %v1216
    %v2886 = vmul.f32 %v2818, %v1216
    %v2887 = vmul.f32 %v2821, %v1216
    %v2888 = vmul.f32 %v2824, %v1216
    %v2889 = vmul.f32 %v2827, %v1216
    %v2890 = vmul.f32 %v2830, %v1216
    %v2891 = vmul.f32 %v2833, %v1216
    %v2892 = vmul.f32 %v2836, %v1216
    %v2893 = vmul.f32 %v2839, %v1216
    %v2894 = vmul.f32 %v2842, %v1216
    %v2895 = vmul.f32 %v2845, %v1216
    %v2896 = vmul.f32 %v2848, %v1216
    %v2897 = vmul.f32 %v2851, %v1216
    %v2898 = vmul.f32 %v2854, %v1216
    %v2899 = vmul.f32 %v2857, %v1216
    %v2900 = vmul.f32 %v2860, %v1216
    %v2901 = vmul.f32 %v2863, %v1216
    %v2902 = vmul.f32 %v2866, %v1216
    %v2903 = vmul.f32 %v2869, %v1216
    %v2904 = vmul.f32 %v2872, %v1216
    %v2905 = vsub.f32 %v2713, %v2873
    %v2906 = vsub.f32 %v2714, %v2873
    %v2907 = vsub.f32 %v2715, %v2874
    %v2908 = vsub.f32 %v2716, %v2874
    %v2909 = vsub.f32 %v2717, %v2875
    %v2910 = vsub.f32 %v2718, %v2875
    %v2911 = vsub.f32 %v2719, %v2876
    %v2912 = vsub.f32 %v2720, %v2876
    %v2913 = vsub.f32 %v2721, %v2877
    %v2914 = vsub.f32 %v2722, %v2877
    %v2915 = vsub.f32 %v2723, %v2878
    %v2916 = vsub.f32 %v2724, %v2878
    %v2917 = vsub.f32 %v2725, %v2879
    %v2918 = vsub.f32 %v2726, %v2879
    %v2919 = vsub.f32 %v2727, %v2880
    %v2920 = vsub.f32 %v2728, %v2880
    %v2921 = vsub.f32 %v2729, %v2881
    %v2922 = vsub.f32 %v2730, %v2881
    %v2923 = vsub.f32 %v2731, %v2882
    %v2924 = vsub.f32 %v2732, %v2882
    %v2925 = vsub.f32 %v2733, %v2883
    %v2926 = vsub.f32 %v2734, %v2883
    %v2927 = vsub.f32 %v2735, %v2884
    %v2928 = vsub.f32 %v2736, %v2884
    %v2929 = vsub.f32 %v2737, %v2885
    %v2930 = vsub.f32 %v2738, %v2885
    %v2931 = vsub.f32 %v2739, %v2886
    %v2932 = vsub.f32 %v2740, %v2886
    %v2933 = vsub.f32 %v2741, %v2887
    %v2934 = vsub.f32 %v2742, %v2887
    %v2935 = vsub.f32 %v2743, %v2888
    %v2936 = vsub.f32 %v2744, %v2888
    %v2937 = vsub.f32 %v2745, %v2889
    %v2938 = vsub.f32 %v2746, %v2889
    %v2939 = vsub.f32 %v2747, %v2890
    %v2940 = vsub.f32 %v2748, %v2890
    %v2941 = vsub.f32 %v2749, %v2891
    %v2942 = vsub.f32 %v2750, %v2891
    %v2943 = vsub.f32 %v2751, %v2892
    %v2944 = vsub.f32 %v2752, %v2892
    %v2945 = vsub.f32 %v2753, %v2893
    %v2946 = vsub.f32 %v2754, %v2893
    %v2947 = vsub.f32 %v2755, %v2894
    %v2948 = vsub.f32 %v2756, %v2894
    %v2949 = vsub.f32 %v2757, %v2895
    %v2950 = vsub.f32 %v2758, %v2895
    %v2951 = vsub.f32 %v2759, %v2896
    %v2952 = vsub.f32 %v2760, %v2896
    %v2953 = vsub.f32 %v2761, %v2897
    %v2954 = vsub.f32 %v2762, %v2897
    %v2955 = vsub.f32 %v2763, %v2898
    %v2956 = vsub.f32 %v2764, %v2898
    %v2957 = vsub.f32 %v2765, %v2899
    %v2958 = vsub.f32 %v2766, %v2899
    %v2959 = vsub.f32 %v2767, %v2900
    %v2960 = vsub.f32 %v2768, %v2900
    %v2961 = vsub.f32 %v2769, %v2901
    %v2962 = vsub.f32 %v2770, %v2901
    %v2963 = vsub.f32 %v2771, %v2902
    %v2964 = vsub.f32 %v2772, %v2902
    %v2965 = vsub.f32 %v2773, %v2903
    %v2966 = vsub.f32 %v2774, %v2903
    %v2967 = vsub.f32 %v2775, %v2904
    %v2968 = vsub.f32 %v2776, %v2904
    %v2969 = vmul.f32 %v2905, %v2905
    %v2970 = vmul.f32 %v2906, %v2906
    %v2971 = vmul.f32 %v2907, %v2907
    %v2972 = vmul.f32 %v2908, %v2908
    %v2973 = vmul.f32 %v2909, %v2909
    %v2974 = vmul.f32 %v2910, %v2910
    %v2975 = vmul.f32 %v2911, %v2911
    %v2976 = vmul.f32 %v2912, %v2912
    %v2977 = vmul.f32 %v2913, %v2913
    %v2978 = vmul.f32 %v2914, %v2914
    %v2979 = vmul.f32 %v2915, %v2915
    %v2980 = vmul.f32 %v2916, %v2916
    %v2981 = vmul.f32 %v2917, %v2917
    %v2982 = vmul.f32 %v2918, %v2918
    %v2983 = vmul.f32 %v2919, %v2919
    %v2984 = vmul.f32 %v2920, %v2920
    %v2985 = vmul.f32 %v2921, %v2921
    %v2986 = vmul.f32 %v2922, %v2922
    %v2987 = vmul.f32 %v2923, %v2923
    %v2988 = vmul.f32 %v2924, %v2924
    %v2989 = vmul.f32 %v2925, %v2925
    %v2990 = vmul.f32 %v2926, %v2926
    %v2991 = vmul.f32 %v2927, %v2927
    %v2992 = vmul.f32 %v2928, %v2928
    %v2993 = vmul.f32 %v2929, %v2929
    %v2994 = vmul.f32 %v2930, %v2930
    %v2995 = vmul.f32 %v2931, %v2931
    %v2996 = vmul.f32 %v2932, %v2932
    %v2997 = vmul.f32 %v2933, %v2933
    %v2998 = vmul.f32 %v2934, %v2934
    %v2999 = vmul.f32 %v2935, %v2935
    %v3000 = vmul.f32 %v2936, %v2936
    %v3001 = vmul.f32 %v2937, %v2937
    %v3002 = vmul.f32 %v2938, %v2938
    %v3003 = vmul.f32 %v2939, %v2939
    %v3004 = vmul.f32 %v2940, %v2940
    %v3005 = vmul.f32 %v2941, %v2941
    %v3006 = vmul.f32 %v2942, %v2942
    %v3007 = vmul.f32 %v2943, %v2943
    %v3008 = vmul.f32 %v2944, %v2944
    %v3009 = vmul.f32 %v2945, %v2945
    %v3010 = vmul.f32 %v2946, %v2946
    %v3011 = vmul.f32 %v2947, %v2947
    %v3012 = vmul.f32 %v2948, %v2948
    %v3013 = vmul.f32 %v2949, %v2949
    %v3014 = vmul.f32 %v2950, %v2950
    %v3015 = vmul.f32 %v2951, %v2951
    %v3016 = vmul.f32 %v2952, %v2952
    %v3017 = vmul.f32 %v2953, %v2953
    %v3018 = vmul.f32 %v2954, %v2954
    %v3019 = vmul.f32 %v2955, %v2955
    %v3020 = vmul.f32 %v2956, %v2956
    %v3021 = vmul.f32 %v2957, %v2957
    %v3022 = vmul.f32 %v2958, %v2958
    %v3023 = vmul.f32 %v2959, %v2959
    %v3024 = vmul.f32 %v2960, %v2960
    %v3025 = vmul.f32 %v2961, %v2961
    %v3026 = vmul.f32 %v2962, %v2962
    %v3027 = vmul.f32 %v2963, %v2963
    %v3028 = vmul.f32 %v2964, %v2964
    %v3029 = vmul.f32 %v2965, %v2965
    %v3030 = vmul.f32 %v2966, %v2966
    %v3031 = vmul.f32 %v2967, %v2967
    %v3032 = vmul.f32 %v2968, %v2968
    %v3033 = vadd.f32 %v2969, %v2970
    %3034 = vadd.xlane.f32.xlu0 %v3033
    %v3035 = vpop.xlane.xlu0 %3034
    %v3036 = vadd.f32 %v2971, %v2972
    %3037 = vadd.xlane.f32.xlu0 %v3036
    %v3038 = vpop.xlane.xlu0 %3037
    %v3039 = vadd.f32 %v2973, %v2974
    %3040 = vadd.xlane.f32.xlu0 %v3039
    %v3041 = vpop.xlane.xlu0 %3040
    %v3042 = vadd.f32 %v2975, %v2976
    %3043 = vadd.xlane.f32.xlu0 %v3042
    %v3044 = vpop.xlane.xlu0 %3043
    %v3045 = vadd.f32 %v2977, %v2978
    %3046 = vadd.xlane.f32.xlu0 %v3045
    %v3047 = vpop.xlane.xlu0 %3046
    %v3048 = vadd.f32 %v2979, %v2980
    %3049 = vadd.xlane.f32.xlu0 %v3048
    %v3050 = vpop.xlane.xlu0 %3049
    %v3051 = vadd.f32 %v2981, %v2982
    %3052 = vadd.xlane.f32.xlu0 %v3051
    %v3053 = vpop.xlane.xlu0 %3052
    %v3054 = vadd.f32 %v2983, %v2984
    %3055 = vadd.xlane.f32.xlu0 %v3054
    %v3056 = vpop.xlane.xlu0 %3055
    %v3057 = vadd.f32 %v2985, %v2986
    %3058 = vadd.xlane.f32.xlu0 %v3057
    %v3059 = vpop.xlane.xlu0 %3058
    %v3060 = vadd.f32 %v2987, %v2988
    %3061 = vadd.xlane.f32.xlu0 %v3060
    %v3062 = vpop.xlane.xlu0 %3061
    %v3063 = vadd.f32 %v2989, %v2990
    %3064 = vadd.xlane.f32.xlu0 %v3063
    %v3065 = vpop.xlane.xlu0 %3064
    %v3066 = vadd.f32 %v2991, %v2992
    %3067 = vadd.xlane.f32.xlu0 %v3066
    %v3068 = vpop.xlane.xlu0 %3067
    %v3069 = vadd.f32 %v2993, %v2994
    %3070 = vadd.xlane.f32.xlu0 %v3069
    %v3071 = vpop.xlane.xlu0 %3070
    %v3072 = vadd.f32 %v2995, %v2996
    %3073 = vadd.xlane.f32.xlu0 %v3072
    %v3074 = vpop.xlane.xlu0 %3073
    %v3075 = vadd.f32 %v2997, %v2998
    %3076 = vadd.xlane.f32.xlu0 %v3075
    %v3077 = vpop.xlane.xlu0 %3076
    %v3078 = vadd.f32 %v2999, %v3000
    %3079 = vadd.xlane.f32.xlu0 %v3078
    %v3080 = vpop.xlane.xlu0 %3079
    %v3081 = vadd.f32 %v3001, %v3002
    %3082 = vadd.xlane.f32.xlu0 %v3081
    %v3083 = vpop.xlane.xlu0 %3082
    %v3084 = vadd.f32 %v3003, %v3004
    %3085 = vadd.xlane.f32.xlu0 %v3084
    %v3086 = vpop.xlane.xlu0 %3085
    %v3087 = vadd.f32 %v3005, %v3006
    %3088 = vadd.xlane.f32.xlu0 %v3087
    %v3089 = vpop.xlane.xlu0 %3088
    %v3090 = vadd.f32 %v3007, %v3008
    %3091 = vadd.xlane.f32.xlu0 %v3090
    %v3092 = vpop.xlane.xlu0 %3091
    %v3093 = vadd.f32 %v3009, %v3010
    %3094 = vadd.xlane.f32.xlu0 %v3093
    %v3095 = vpop.xlane.xlu0 %3094
    %v3096 = vadd.f32 %v3011, %v3012
    %3097 = vadd.xlane.f32.xlu0 %v3096
    %v3098 = vpop.xlane.xlu0 %3097
    %v3099 = vadd.f32 %v3013, %v3014
    %3100 = vadd.xlane.f32.xlu0 %v3099
    %v3101 = vpop.xlane.xlu0 %3100
    %v3102 = vadd.f32 %v3015, %v3016
    %3103 = vadd.xlane.f32.xlu0 %v3102
    %v3104 = vpop.xlane.xlu0 %3103
    %v3105 = vadd.f32 %v3017, %v3018
    %3106 = vadd.xlane.f32.xlu0 %v3105
    %v3107 = vpop.xlane.xlu0 %3106
    %v3108 = vadd.f32 %v3019, %v3020
    %3109 = vadd.xlane.f32.xlu0 %v3108
    %v3110 = vpop.xlane.xlu0 %3109
    %v3111 = vadd.f32 %v3021, %v3022
    %3112 = vadd.xlane.f32.xlu0 %v3111
    %v3113 = vpop.xlane.xlu0 %3112
    %v3114 = vadd.f32 %v3023, %v3024
    %3115 = vadd.xlane.f32.xlu0 %v3114
    %v3116 = vpop.xlane.xlu0 %3115
    %v3117 = vadd.f32 %v3025, %v3026
    %3118 = vadd.xlane.f32.xlu0 %v3117
    %v3119 = vpop.xlane.xlu0 %3118
    %v3120 = vadd.f32 %v3027, %v3028
    %3121 = vadd.xlane.f32.xlu0 %v3120
    %v3122 = vpop.xlane.xlu0 %3121
    %v3123 = vadd.f32 %v3029, %v3030
    %3124 = vadd.xlane.f32.xlu0 %v3123
    %v3125 = vpop.xlane.xlu0 %3124
    %v3126 = vadd.f32 %v3031, %v3032
    %3127 = vadd.xlane.f32.xlu0 %v3126
    %v3128 = vpop.xlane.xlu0 %3127
    %v3129 = vmul.f32 %v3035, %v1216
    %v3130 = vmul.f32 %v3038, %v1216
    %v3131 = vmul.f32 %v3041, %v1216
    %v3132 = vmul.f32 %v3044, %v1216
    %v3133 = vmul.f32 %v3047, %v1216
    %v3134 = vmul.f32 %v3050, %v1216
    %v3135 = vmul.f32 %v3053, %v1216
    %v3136 = vmul.f32 %v3056, %v1216
    %v3137 = vmul.f32 %v3059, %v1216
    %v3138 = vmul.f32 %v3062, %v1216
    %v3139 = vmul.f32 %v3065, %v1216
    %v3140 = vmul.f32 %v3068, %v1216
    %v3141 = vmul.f32 %v3071, %v1216
    %v3142 = vmul.f32 %v3074, %v1216
    %v3143 = vmul.f32 %v3077, %v1216
    %v3144 = vmul.f32 %v3080, %v1216
    %v3145 = vmul.f32 %v3083, %v1216
    %v3146 = vmul.f32 %v3086, %v1216
    %v3147 = vmul.f32 %v3089, %v1216
    %v3148 = vmul.f32 %v3092, %v1216
    %v3149 = vmul.f32 %v3095, %v1216
    %v3150 = vmul.f32 %v3098, %v1216
    %v3151 = vmul.f32 %v3101, %v1216
    %v3152 = vmul.f32 %v3104, %v1216
    %v3153 = vmul.f32 %v3107, %v1216
    %v3154 = vmul.f32 %v3110, %v1216
    %v3155 = vmul.f32 %v3113, %v1216
    %v3156 = vmul.f32 %v3116, %v1216
    %v3157 = vmul.f32 %v3119, %v1216
    %v3158 = vmul.f32 %v3122, %v1216
    %v3159 = vmul.f32 %v3125, %v1216
    %v3160 = vmul.f32 %v3128, %v1216
    %v3161 = vadd.f32 %v3129, 1e-05
    %v3162 = vadd.f32 %v3130, 1e-05
    %v3163 = vadd.f32 %v3131, 1e-05
    %v3164 = vadd.f32 %v3132, 1e-05
    %v3165 = vadd.f32 %v3133, 1e-05
    %v3166 = vadd.f32 %v3134, 1e-05
    %v3167 = vadd.f32 %v3135, 1e-05
    %v3168 = vadd.f32 %v3136, 1e-05
    %v3169 = vadd.f32 %v3137, 1e-05
    %v3170 = vadd.f32 %v3138, 1e-05
    %v3171 = vadd.f32 %v3139, 1e-05
    %v3172 = vadd.f32 %v3140, 1e-05
    %v3173 = vadd.f32 %v3141, 1e-05
    %v3174 = vadd.f32 %v3142, 1e-05
    %v3175 = vadd.f32 %v3143, 1e-05
    %v3176 = vadd.f32 %v3144, 1e-05
    %v3177 = vadd.f32 %v3145, 1e-05
    %v3178 = vadd.f32 %v3146, 1e-05
    %v3179 = vadd.f32 %v3147, 1e-05
    %v3180 = vadd.f32 %v3148, 1e-05
    %v3181 = vadd.f32 %v3149, 1e-05
    %v3182 = vadd.f32 %v3150, 1e-05
    %v3183 = vadd.f32 %v3151, 1e-05
    %v3184 = vadd.f32 %v3152, 1e-05
    %v3185 = vadd.f32 %v3153, 1e-05
    %v3186 = vadd.f32 %v3154, 1e-05
    %v3187 = vadd.f32 %v3155, 1e-05
    %v3188 = vadd.f32 %v3156, 1e-05
    %v3189 = vadd.f32 %v3157, 1e-05
    %v3190 = vadd.f32 %v3158, 1e-05
    %v3191 = vadd.f32 %v3159, 1e-05
    %v3192 = vadd.f32 %v3160, 1e-05
    %v3193 = vrsqrt.pop %v3161
    %v3194 = vrsqrt.pop %v3162
    %v3195 = vrsqrt.pop %v3163
    %v3196 = vrsqrt.pop %v3164
    %v3197 = vrsqrt.pop %v3165
    %v3198 = vrsqrt.pop %v3166
    %v3199 = vrsqrt.pop %v3167
    %v3200 = vrsqrt.pop %v3168
    %v3201 = vrsqrt.pop %v3169
    %v3202 = vrsqrt.pop %v3170
    %v3203 = vrsqrt.pop %v3171
    %v3204 = vrsqrt.pop %v3172
    %v3205 = vrsqrt.pop %v3173
    %v3206 = vrsqrt.pop %v3174
    %v3207 = vrsqrt.pop %v3175
    %v3208 = vrsqrt.pop %v3176
    %v3209 = vrsqrt.pop %v3177
    %v3210 = vrsqrt.pop %v3178
    %v3211 = vrsqrt.pop %v3179
    %v3212 = vrsqrt.pop %v3180
    %v3213 = vrsqrt.pop %v3181
    %v3214 = vrsqrt.pop %v3182
    %v3215 = vrsqrt.pop %v3183
    %v3216 = vrsqrt.pop %v3184
    %v3217 = vrsqrt.pop %v3185
    %v3218 = vrsqrt.pop %v3186
    %v3219 = vrsqrt.pop %v3187
    %v3220 = vrsqrt.pop %v3188
    %v3221 = vrsqrt.pop %v3189
    %v3222 = vrsqrt.pop %v3190
    %v3223 = vrsqrt.pop %v3191
    %v3224 = vrsqrt.pop %v3192
    %v3225 = vmul.f32 %v2905, %v3193
    %v3226 = vmul.f32 %v2906, %v3193
    %v3227 = vmul.f32 %v2907, %v3194
    %v3228 = vmul.f32 %v2908, %v3194
    %v3229 = vmul.f32 %v2909, %v3195
    %v3230 = vmul.f32 %v2910, %v3195
    %v3231 = vmul.f32 %v2911, %v3196
    %v3232 = vmul.f32 %v2912, %v3196
    %v3233 = vmul.f32 %v2913, %v3197
    %v3234 = vmul.f32 %v2914, %v3197
    %v3235 = vmul.f32 %v2915, %v3198
    %v3236 = vmul.f32 %v2916, %v3198
    %v3237 = vmul.f32 %v2917, %v3199
    %v3238 = vmul.f32 %v2918, %v3199
    %v3239 = vmul.f32 %v2919, %v3200
    %v3240 = vmul.f32 %v2920, %v3200
    %v3241 = vmul.f32 %v2921, %v3201
    %v3242 = vmul.f32 %v2922, %v3201
    %v3243 = vmul.f32 %v2923, %v3202
    %v3244 = vmul.f32 %v2924, %v3202
    %v3245 = vmul.f32 %v2925, %v3203
    %v3246 = vmul.f32 %v2926, %v3203
    %v3247 = vmul.f32 %v2927, %v3204
    %v3248 = vmul.f32 %v2928, %v3204
    %v3249 = vmul.f32 %v2929, %v3205
    %v3250 = vmul.f32 %v2930, %v3205
    %v3251 = vmul.f32 %v2931, %v3206
    %v3252 = vmul.f32 %v2932, %v3206
    %v3253 = vmul.f32 %v2933, %v3207
    %v3254 = vmul.f32 %v2934, %v3207
    %v3255 = vmul.f32 %v2935, %v3208
    %v3256 = vmul.f32 %v2936, %v3208
    %v3257 = vmul.f32 %v2937, %v3209
    %v3258 = vmul.f32 %v2938, %v3209
    %v3259 = vmul.f32 %v2939, %v3210
    %v3260 = vmul.f32 %v2940, %v3210
    %v3261 = vmul.f32 %v2941, %v3211
    %v3262 = vmul.f32 %v2942, %v3211
    %v3263 = vmul.f32 %v2943, %v3212
    %v3264 = vmul.f32 %v2944, %v3212
    %v3265 = vmul.f32 %v2945, %v3213
    %v3266 = vmul.f32 %v2946, %v3213
    %v3267 = vmul.f32 %v2947, %v3214
    %v3268 = vmul.f32 %v2948, %v3214
    %v3269 = vmul.f32 %v2949, %v3215
    %v3270 = vmul.f32 %v2950, %v3215
    %v3271 = vmul.f32 %v2951, %v3216
    %v3272 = vmul.f32 %v2952, %v3216
    %v3273 = vmul.f32 %v2953, %v3217
    %v3274 = vmul.f32 %v2954, %v3217
    %v3275 = vmul.f32 %v2955, %v3218
    %v3276 = vmul.f32 %v2956, %v3218
    %v3277 = vmul.f32 %v2957, %v3219
    %v3278 = vmul.f32 %v2958, %v3219
    %v3279 = vmul.f32 %v2959, %v3220
    %v3280 = vmul.f32 %v2960, %v3220
    %v3281 = vmul.f32 %v2961, %v3221
    %v3282 = vmul.f32 %v2962, %v3221
    %v3283 = vmul.f32 %v2963, %v3222
    %v3284 = vmul.f32 %v2964, %v3222
    %v3285 = vmul.f32 %v2965, %v3223
    %v3286 = vmul.f32 %v2966, %v3223
    %v3287 = vmul.f32 %v2967, %v3224
    %v3288 = vmul.f32 %v2968, %v3224
    %v3290 = vlaneseq
    %v3291 = vshrl.u32 %v3290, 7
    %v3292 = vsub.s32 0, %v3291
    %v3293 = vrot.slane %v1854, %v3292
    %v3294 = vlaneseq
    %v3295 = vshrl.u32 %v3294, 7
    %v3296 = vsub.s32 1, %v3295
    %v3297 = vrot.slane %v1854, %v3296
    %v3300 = vmul.f32 %v3225, %v3293
    %v3301 = vmul.f32 %v3226, %v3297
    %v3302 = vmul.f32 %v3227, %v3293
    %v3303 = vmul.f32 %v3228, %v3297
    %v3304 = vmul.f32 %v3229, %v3293
    %v3305 = vmul.f32 %v3230, %v3297
    %v3306 = vmul.f32 %v3231, %v3293
    %v3307 = vmul.f32 %v3232, %v3297
    %v3308 = vmul.f32 %v3233, %v3293
    %v3309 = vmul.f32 %v3234, %v3297
    %v3310 = vmul.f32 %v3235, %v3293
    %v3311 = vmul.f32 %v3236, %v3297
    %v3312 = vmul.f32 %v3237, %v3293
    %v3313 = vmul.f32 %v3238, %v3297
    %v3314 = vmul.f32 %v3239, %v3293
    %v3315 = vmul.f32 %v3240, %v3297
    %v3316 = vmul.f32 %v3241, %v3293
    %v3317 = vmul.f32 %v3242, %v3297
    %v3318 = vmul.f32 %v3243, %v3293
    %v3319 = vmul.f32 %v3244, %v3297
    %v3320 = vmul.f32 %v3245, %v3293
    %v3321 = vmul.f32 %v3246, %v3297
    %v3322 = vmul.f32 %v3247, %v3293
    %v3323 = vmul.f32 %v3248, %v3297
    %v3324 = vmul.f32 %v3249, %v3293
    %v3325 = vmul.f32 %v3250, %v3297
    %v3326 = vmul.f32 %v3251, %v3293
    %v3327 = vmul.f32 %v3252, %v3297
    %v3328 = vmul.f32 %v3253, %v3293
    %v3329 = vmul.f32 %v3254, %v3297
    %v3330 = vmul.f32 %v3255, %v3293
    %v3331 = vmul.f32 %v3256, %v3297
    %v3332 = vmul.f32 %v3257, %v3293
    %v3333 = vmul.f32 %v3258, %v3297
    %v3334 = vmul.f32 %v3259, %v3293
    %v3335 = vmul.f32 %v3260, %v3297
    %v3336 = vmul.f32 %v3261, %v3293
    %v3337 = vmul.f32 %v3262, %v3297
    %v3338 = vmul.f32 %v3263, %v3293
    %v3339 = vmul.f32 %v3264, %v3297
    %v3340 = vmul.f32 %v3265, %v3293
    %v3341 = vmul.f32 %v3266, %v3297
    %v3342 = vmul.f32 %v3267, %v3293
    %v3343 = vmul.f32 %v3268, %v3297
    %v3344 = vmul.f32 %v3269, %v3293
    %v3345 = vmul.f32 %v3270, %v3297
    %v3346 = vmul.f32 %v3271, %v3293
    %v3347 = vmul.f32 %v3272, %v3297
    %v3348 = vmul.f32 %v3273, %v3293
    %v3349 = vmul.f32 %v3274, %v3297
    %v3350 = vmul.f32 %v3275, %v3293
    %v3351 = vmul.f32 %v3276, %v3297
    %v3352 = vmul.f32 %v3277, %v3293
    %v3353 = vmul.f32 %v3278, %v3297
    %v3354 = vmul.f32 %v3279, %v3293
    %v3355 = vmul.f32 %v3280, %v3297
    %v3356 = vmul.f32 %v3281, %v3293
    %v3357 = vmul.f32 %v3282, %v3297
    %v3358 = vmul.f32 %v3283, %v3293
    %v3359 = vmul.f32 %v3284, %v3297
    %v3360 = vmul.f32 %v3285, %v3293
    %v3361 = vmul.f32 %v3286, %v3297
    %v3362 = vmul.f32 %v3287, %v3293
    %v3363 = vmul.f32 %v3288, %v3297
    %v3365 = vlaneseq
    %v3366 = vshrl.u32 %v3365, 7
    %v3367 = vsub.s32 0, %v3366
    %v3368 = vrot.slane %v1856, %v3367
    %v3369 = vlaneseq
    %v3370 = vshrl.u32 %v3369, 7
    %v3371 = vsub.s32 1, %v3370
    %v3372 = vrot.slane %v1856, %v3371
    %v3375 = vadd.f32 %v3300, %v3368
    %v3376 = vadd.f32 %v3301, %v3372
    %v3377 = vadd.f32 %v3302, %v3368
    %v3378 = vadd.f32 %v3303, %v3372
    %v3379 = vadd.f32 %v3304, %v3368
    %v3380 = vadd.f32 %v3305, %v3372
    %v3381 = vadd.f32 %v3306, %v3368
    %v3382 = vadd.f32 %v3307, %v3372
    %v3383 = vadd.f32 %v3308, %v3368
    %v3384 = vadd.f32 %v3309, %v3372
    %v3385 = vadd.f32 %v3310, %v3368
    %v3386 = vadd.f32 %v3311, %v3372
    %v3387 = vadd.f32 %v3312, %v3368
    %v3388 = vadd.f32 %v3313, %v3372
    %v3389 = vadd.f32 %v3314, %v3368
    %v3390 = vadd.f32 %v3315, %v3372
    %v3391 = vadd.f32 %v3316, %v3368
    %v3392 = vadd.f32 %v3317, %v3372
    %v3393 = vadd.f32 %v3318, %v3368
    %v3394 = vadd.f32 %v3319, %v3372
    %v3395 = vadd.f32 %v3320, %v3368
    %v3396 = vadd.f32 %v3321, %v3372
    %v3397 = vadd.f32 %v3322, %v3368
    %v3398 = vadd.f32 %v3323, %v3372
    %v3399 = vadd.f32 %v3324, %v3368
    %v3400 = vadd.f32 %v3325, %v3372
    %v3401 = vadd.f32 %v3326, %v3368
    %v3402 = vadd.f32 %v3327, %v3372
    %v3403 = vadd.f32 %v3328, %v3368
    %v3404 = vadd.f32 %v3329, %v3372
    %v3405 = vadd.f32 %v3330, %v3368
    %v3406 = vadd.f32 %v3331, %v3372
    %v3407 = vadd.f32 %v3332, %v3368
    %v3408 = vadd.f32 %v3333, %v3372
    %v3409 = vadd.f32 %v3334, %v3368
    %v3410 = vadd.f32 %v3335, %v3372
    %v3411 = vadd.f32 %v3336, %v3368
    %v3412 = vadd.f32 %v3337, %v3372
    %v3413 = vadd.f32 %v3338, %v3368
    %v3414 = vadd.f32 %v3339, %v3372
    %v3415 = vadd.f32 %v3340, %v3368
    %v3416 = vadd.f32 %v3341, %v3372
    %v3417 = vadd.f32 %v3342, %v3368
    %v3418 = vadd.f32 %v3343, %v3372
    %v3419 = vadd.f32 %v3344, %v3368
    %v3420 = vadd.f32 %v3345, %v3372
    %v3421 = vadd.f32 %v3346, %v3368
    %v3422 = vadd.f32 %v3347, %v3372
    %v3423 = vadd.f32 %v3348, %v3368
    %v3424 = vadd.f32 %v3349, %v3372
    %v3425 = vadd.f32 %v3350, %v3368
    %v3426 = vadd.f32 %v3351, %v3372
    %v3427 = vadd.f32 %v3352, %v3368
    %v3428 = vadd.f32 %v3353, %v3372
    %v3429 = vadd.f32 %v3354, %v3368
    %v3430 = vadd.f32 %v3355, %v3372
    %v3431 = vadd.f32 %v3356, %v3368
    %v3432 = vadd.f32 %v3357, %v3372
    %v3433 = vadd.f32 %v3358, %v3368
    %v3434 = vadd.f32 %v3359, %v3372
    %v3435 = vadd.f32 %v3360, %v3368
    %v3436 = vadd.f32 %v3361, %v3372
    %v3437 = vadd.f32 %v3362, %v3368
    %v3438 = vadd.f32 %v3363, %v3372
    %3439 = vst [vmem:[#allocation8] sm:$0xff] %v3375
    %3440 = vst [vmem:[#allocation8 + $0x8] sm:$0xff] %v3376
    %3441 = vst [vmem:[#allocation8 + $0x10] sm:$0xff] %v3377
    %3442 = vst [vmem:[#allocation8 + $0x18] sm:$0xff] %v3378
    %3443 = vst [vmem:[#allocation8 + $0x20] sm:$0xff] %v3379
    %3444 = vst [vmem:[#allocation8 + $0x28] sm:$0xff] %v3380
    %3445 = vst [vmem:[#allocation8 + $0x30] sm:$0xff] %v3381
    %3446 = vst [vmem:[#allocation8 + $0x38] sm:$0xff] %v3382
    %3447 = vst [vmem:[#allocation8 + $0x40] sm:$0xff] %v3383
    %3448 = vst [vmem:[#allocation8 + $0x48] sm:$0xff] %v3384
    %3449 = vst [vmem:[#allocation8 + $0x50] sm:$0xff] %v3385
    %3450 = vst [vmem:[#allocation8 + $0x58] sm:$0xff] %v3386
    %3451 = vst [vmem:[#allocation8 + $0x60] sm:$0xff] %v3387
    %3452 = vst [vmem:[#allocation8 + $0x68] sm:$0xff] %v3388
    %3453 = vst [vmem:[#allocation8 + $0x70] sm:$0xff] %v3389
    %3454 = vst [vmem:[#allocation8 + $0x78] sm:$0xff] %v3390
    %3455 = vst [vmem:[#allocation8 + $0x80] sm:$0xff] %v3391
    %3456 = vst [vmem:[#allocation8 + $0x88] sm:$0xff] %v3392
    %3457 = vst [vmem:[#allocation8 + $0x90] sm:$0xff] %v3393
    %3458 = vst [vmem:[#allocation8 + $0x98] sm:$0xff] %v3394
    %3459 = vst [vmem:[#allocation8 + $0xa0] sm:$0xff] %v3395
    %3460 = vst [vmem:[#allocation8 + $0xa8] sm:$0xff] %v3396
    %3461 = vst [vmem:[#allocation8 + $0xb0] sm:$0xff] %v3397
    %3462 = vst [vmem:[#allocation8 + $0xb8] sm:$0xff] %v3398
    %3463 = vst [vmem:[#allocation8 + $0xc0] sm:$0xff] %v3399
    %3464 = vst [vmem:[#allocation8 + $0xc8] sm:$0xff] %v3400
    %3465 = vst [vmem:[#allocation8 + $0xd0] sm:$0xff] %v3401
    %3466 = vst [vmem:[#allocation8 + $0xd8] sm:$0xff] %v3402
    %3467 = vst [vmem:[#allocation8 + $0xe0] sm:$0xff] %v3403
    %3468 = vst [vmem:[#allocation8 + $0xe8] sm:$0xff] %v3404
    %3469 = vst [vmem:[#allocation8 + $0xf0] sm:$0xff] %v3405
    %3470 = vst [vmem:[#allocation8 + $0xf8] sm:$0xff] %v3406
    %3471 = vst [vmem:[#allocation8 + $0x100] sm:$0xff] %v3407
    %3472 = vst [vmem:[#allocation8 + $0x108] sm:$0xff] %v3408
    %3473 = vst [vmem:[#allocation8 + $0x110] sm:$0xff] %v3409
    %3474 = vst [vmem:[#allocation8 + $0x118] sm:$0xff] %v3410
    %3475 = vst [vmem:[#allocation8 + $0x120] sm:$0xff] %v3411
    %3476 = vst [vmem:[#allocation8 + $0x128] sm:$0xff] %v3412
    %3477 = vst [vmem:[#allocation8 + $0x130] sm:$0xff] %v3413
    %3478 = vst [vmem:[#allocation8 + $0x138] sm:$0xff] %v3414
    %3479 = vst [vmem:[#allocation8 + $0x140] sm:$0xff] %v3415
    %3480 = vst [vmem:[#allocation8 + $0x148] sm:$0xff] %v3416
    %3481 = vst [vmem:[#allocation8 + $0x150] sm:$0xff] %v3417
    %3482 = vst [vmem:[#allocation8 + $0x158] sm:$0xff] %v3418
    %3483 = vst [vmem:[#allocation8 + $0x160] sm:$0xff] %v3419
    %3484 = vst [vmem:[#allocation8 + $0x168] sm:$0xff] %v3420
    %3485 = vst [vmem:[#allocation8 + $0x170] sm:$0xff] %v3421
    %3486 = vst [vmem:[#allocation8 + $0x178] sm:$0xff] %v3422
    %3487 = vst [vmem:[#allocation8 + $0x180] sm:$0xff] %v3423
    %3488 = vst [vmem:[#allocation8 + $0x188] sm:$0xff] %v3424
    %3489 = vst [vmem:[#allocation8 + $0x190] sm:$0xff] %v3425
    %3490 = vst [vmem:[#allocation8 + $0x198] sm:$0xff] %v3426
    %3491 = vst [vmem:[#allocation8 + $0x1a0] sm:$0xff] %v3427
    %3492 = vst [vmem:[#allocation8 + $0x1a8] sm:$0xff] %v3428
    %3493 = vst [vmem:[#allocation8 + $0x1b0] sm:$0xff] %v3429
    %3494 = vst [vmem:[#allocation8 + $0x1b8] sm:$0xff] %v3430
    %3495 = vst [vmem:[#allocation8 + $0x1c0] sm:$0xff] %v3431
    %3496 = vst [vmem:[#allocation8 + $0x1c8] sm:$0xff] %v3432
    %3497 = vst [vmem:[#allocation8 + $0x1d0] sm:$0xff] %v3433
    %3498 = vst [vmem:[#allocation8 + $0x1d8] sm:$0xff] %v3434
    %3499 = vst [vmem:[#allocation8 + $0x1e0] sm:$0xff] %v3435
    %3500 = vst [vmem:[#allocation8 + $0x1e8] sm:$0xff] %v3436
    %3501 = vst [vmem:[#allocation8 + $0x1f0] sm:$0xff] %v3437
    %3502 = vst [vmem:[#allocation8 + $0x1f8] sm:$0xff] %v3438
    // Predicated region
    $region42: #{encoder_forward.1} parent=1 // pred_check
      _
    $region43: #{encoder_forward.1} parent=1 // pred_check_branch
      %3504 = sbr.rel (0) target = $region45
    $region44: #{encoder_forward.1} parent=1 // pred_region
      %s3506 = ssub.s32 8192, 8192
      %3507 = vsyncadd [#allocation4], %s3506
      %s3508 = sshll.u32 [#allocation8], 4
      %s3509 = int_to_ptr.vmem [resolvable:$true] %s3508
      %3514 = dma.vmem_to_hbm [thread:$0]  %s3509, 8192, %s7, [#allocation4], 256, 256, 16
    $region45: #{encoder_forward.1} parent=1 // pred_fallthru
      _
    // Predicated region
    $region46: #{encoder_forward.1} parent=1 // pred_check
      _
    $region47: #{encoder_forward.1} parent=1 // pred_check_branch
      %3516 = sbr.rel (0) target = $region49
    $region48: #{encoder_forward.1} parent=1 // pred_region
      %3517 = dma.done [#allocation4], 8192
    $region49: #{encoder_forward.1} parent=1 // pred_fallthru
      _
    %3518 = vsyncpa [#allocation3], 1
    %3519 = vsyncpa [#allocation6], 1
    %3520 = vsyncpa [#allocation4], 1

</llo_original>
